<compile_context>
chip_gen: v7x
topology: tpu7x:2x2x1
jax: 0.10.0
libtpu: 0.0.40
codegen_flags: <defaults>
</compile_context>

<pallas_src>
import jax
import jax.numpy as jnp
from jax.experimental import pallas as pl
from jax.experimental.pallas import tpu as pltpu

EPS = 1e-5


def _bn_relu_conv_bn_kernel(x_ref, w_ref, g1_ref, b1_ref, g2_ref, b2_ref, o_ref):
    # x_ref: [N, Cin, M]   w_ref: [Cout, Cin]
    # g1/b1: [Cin, 1]      g2/b2: [Cout, 1]      o_ref: [N, Cout, M]
    n, cin, m = x_ref.shape
    cout = w_ref.shape[0]
    inv_cnt = 1.0 / float(n * m)

    xs = [x_ref[i] for i in range(n)]                      # each [Cin, M], f32

    # ---- BN1: single-pass batch stats folded into scale/shift ([Cin, 1]) ----
    s1 = jnp.zeros((cin, 1), jnp.float32)
    q1 = jnp.zeros((cin, 1), jnp.float32)
    for xi in xs:
        s1 = s1 + jnp.sum(xi, axis=1, keepdims=True)
        q1 = q1 + jnp.sum(xi * xi, axis=1, keepdims=True)
    mean1 = s1 * inv_cnt
    var1 = q1 * inv_cnt - mean1 * mean1                    # biased variance
    scale1 = g1_ref[...] * jax.lax.rsqrt(var1 + EPS)
    shift1 = b1_ref[...] - mean1 * scale1

    # ---- BN1 apply + ReLU + 1x1 conv (MXU matmul per batch element) ----
    w = w_ref[...]
    ys = []
    for xi in xs:
        xr = jnp.maximum(xi * scale1 + shift1, 0.0)        # [Cin, M]
        ys.append(jnp.dot(w, xr, preferred_element_type=jnp.float32))  # [Cout, M]

    # ---- BN2: single-pass batch stats folded into scale/shift ([Cout, 1]) ----
    s2 = jnp.zeros((cout, 1), jnp.float32)
    q2 = jnp.zeros((cout, 1), jnp.float32)
    for yi in ys:
        s2 = s2 + jnp.sum(yi, axis=1, keepdims=True)
        q2 = q2 + jnp.sum(yi * yi, axis=1, keepdims=True)
    mean2 = s2 * inv_cnt
    var2 = q2 * inv_cnt - mean2 * mean2
    scale2 = g2_ref[...] * jax.lax.rsqrt(var2 + EPS)
    shift2 = b2_ref[...] - mean2 * scale2

    for i in range(n):
        o_ref[i] = (ys[i] * scale2 + shift2).astype(o_ref.dtype)


def bn_relu_conv_bn(x_nchw, conv_w, gamma1, beta1, gamma2, beta2):
    """x_nchw: [N, 416, H, W] (NCHW); conv_w: [128, 416, 1, 1] (PyTorch OIHW)."""
    n, cin, h, w = x_nchw.shape
    cout = conv_w.shape[0]
    m = h * w

    # NCHW -> [N, Cin, H*W] is a pure reshape on row-major data (no HBM copy).
    x3 = x_nchw.reshape(n, cin, m).astype(jnp.float32)
    w_mat = conv_w.reshape(cout, cin).astype(jnp.float32)          # [Cout, Cin]
    g1 = gamma1.reshape(cin, 1).astype(jnp.float32)
    b1 = beta1.reshape(cin, 1).astype(jnp.float32)
    g2 = gamma2.reshape(cout, 1).astype(jnp.float32)
    b2 = beta2.reshape(cout, 1).astype(jnp.float32)

    flops = 2 * n * m * cin * cout + 8 * n * m * (cin + cout)
    bytes_accessed = 4 * (n * cin * m + cout * cin + 2 * cin + 2 * cout + n * cout * m)

    out3 = pl.pallas_call(
        _bn_relu_conv_bn_kernel,
        out_shape=jax.ShapeDtypeStruct((n, cout, m), jnp.float32),
        in_specs=[pl.BlockSpec(memory_space=pltpu.MemorySpace.VMEM)] * 6,
        out_specs=pl.BlockSpec(memory_space=pltpu.MemorySpace.VMEM),
        cost_estimate=pl.CostEstimate(
            flops=int(flops), transcendentals=0, bytes_accessed=int(bytes_accessed)),
    )(x3, w_mat, g1, b1, g2, b2)

    # [N, Cout, H*W] -> NCHW, again a free reshape.
    return out3.reshape(n, cout, h, w)


def _reference(x_nchw, conv_w, gamma1, beta1, gamma2, beta2):
    """Pure-JAX reference mirroring PyTorch training-mode forward."""
    def bn(x, g, b):
        mean = jnp.mean(x, axis=(0, 2, 3), keepdims=True)
        var = jnp.mean((x - mean) ** 2, axis=(0, 2, 3), keepdims=True)
        return (x - mean) * jax.lax.rsqrt(var + EPS) * g.reshape(1, -1, 1, 1) \
               + b.reshape(1, -1, 1, 1)

    x = bn(x_nchw, gamma1, beta1)
    x = jnp.maximum(x, 0.0)
    y = jnp.einsum("nchw,oc->nohw", x,
                   conv_w.reshape(conv_w.shape[0], conv_w.shape[1]))
    return bn(y, gamma2, beta2)


if __name__ == "__main__":
    # Shapes from the spec module: [1, 416, 28, 28] -> [1, 128, 28, 28].
    N, CIN, H, W = 1, 416, 28, 28
    COUT = 128

    key = jax.random.PRNGKey(0)
    kx, kw, kg1, kb1, kg2, kb2 = jax.random.split(key, 6)

    x = jax.random.normal(kx, (N, CIN, H, W), dtype=jnp.float32)
    conv_w = jax.random.normal(kw, (COUT, CIN, 1, 1), dtype=jnp.float32) * 0.05
    gamma1 = 1.0 + 0.1 * jax.random.normal(kg1, (CIN,), dtype=jnp.float32)
    beta1 = 0.1 * jax.random.normal(kb1, (CIN,), dtype=jnp.float32)
    gamma2 = 1.0 + 0.1 * jax.random.normal(kg2, (COUT,), dtype=jnp.float32)
    beta2 = 0.1 * jax.random.normal(kb2, (COUT,), dtype=jnp.float32)

    out = bn_relu_conv_bn(x, conv_w, gamma1, beta1, gamma2, beta2)
    out = jax.block_until_ready(out)

    ref = _reference(x, conv_w, gamma1, beta1, gamma2, beta2)
    assert out.shape == (N, COUT, H, W), out.shape
    assert jnp.allclose(out, ref, atol=2e-3, rtol=2e-3), \
        float(jnp.max(jnp.abs(out - ref)))

    print("KERNEL_OK")
</pallas_src>

<mosaic_0001>
module attributes {stable_mosaic.version = 11 : i64} {
  func.func @_bn_relu_conv_bn_kernel(%arg0: memref<1x416x784xf32, #tpu.memory_space<vmem>>, %arg1: memref<128x416xf32, #tpu.memory_space<vmem>>, %arg2: memref<416x1xf32, #tpu.memory_space<vmem>>, %arg3: memref<416x1xf32, #tpu.memory_space<vmem>>, %arg4: memref<128x1xf32, #tpu.memory_space<vmem>>, %arg5: memref<128x1xf32, #tpu.memory_space<vmem>>, %arg6: memref<1x128x784xf32, #tpu.memory_space<vmem>>) attributes {dimension_semantics = [], scalar_prefetch = 0 : i64, scratch_operands = 0 : i64, tpu.core_type = #tpu.core_type<tc>} {
    %c0 = arith.constant 0 : index
    %c0_0 = arith.constant 0 : index
    %c0_1 = arith.constant 0 : index
    %0 = vector.load %arg0[%c0, %c0_0, %c0_1] : memref<1x416x784xf32, #tpu.memory_space<vmem>>, vector<1x416x784xf32>
    %1 = vector.shape_cast %0 : vector<1x416x784xf32> to vector<416x784xf32>
    %cst = arith.constant 0.000000e+00 : f32
    %2 = vector.broadcast %cst : f32 to vector<416x1xf32>
    %cst_2 = arith.constant 0.000000e+00 : f32
    %3 = vector.broadcast %cst_2 : f32 to vector<416x1xf32>
    %cst_3 = arith.constant dense<0.000000e+00> : vector<416xf32>
    %4 = vector.multi_reduction <add>, %1, %cst_3 [1] : vector<416x784xf32> to vector<416xf32>
    %5 = vector.shape_cast %4 : vector<416xf32> to vector<416x1xf32>
    %6 = arith.addf %2, %5 : vector<416x1xf32>
    %7 = arith.mulf %1, %1 : vector<416x784xf32>
    %cst_4 = arith.constant dense<0.000000e+00> : vector<416xf32>
    %8 = vector.multi_reduction <add>, %7, %cst_4 [1] : vector<416x784xf32> to vector<416xf32>
    %9 = vector.shape_cast %8 : vector<416xf32> to vector<416x1xf32>
    %10 = arith.addf %3, %9 : vector<416x1xf32>
    %cst_5 = arith.constant 0.00127551018 : f32
    %11 = vector.broadcast %cst_5 : f32 to vector<416x1xf32>
    %12 = arith.mulf %6, %11 : vector<416x1xf32>
    %cst_6 = arith.constant 0.00127551018 : f32
    %13 = vector.broadcast %cst_6 : f32 to vector<416x1xf32>
    %14 = arith.mulf %10, %13 : vector<416x1xf32>
    %15 = arith.mulf %12, %12 : vector<416x1xf32>
    %16 = arith.subf %14, %15 : vector<416x1xf32>
    %c0_7 = arith.constant 0 : index
    %c0_8 = arith.constant 0 : index
    %17 = vector.load %arg2[%c0_7, %c0_8] : memref<416x1xf32, #tpu.memory_space<vmem>>, vector<416x1xf32>
    %cst_9 = arith.constant 9.99999974E-6 : f32
    %18 = vector.broadcast %cst_9 : f32 to vector<416x1xf32>
    %19 = arith.addf %16, %18 : vector<416x1xf32>
    %20 = math.rsqrt %19 : vector<416x1xf32>
    %21 = arith.mulf %17, %20 : vector<416x1xf32>
    %c0_10 = arith.constant 0 : index
    %c0_11 = arith.constant 0 : index
    %22 = vector.load %arg3[%c0_10, %c0_11] : memref<416x1xf32, #tpu.memory_space<vmem>>, vector<416x1xf32>
    %23 = arith.mulf %12, %21 : vector<416x1xf32>
    %24 = arith.subf %22, %23 : vector<416x1xf32>
    %c0_12 = arith.constant 0 : index
    %c0_13 = arith.constant 0 : index
    %25 = vector.load %arg1[%c0_12, %c0_13] : memref<128x416xf32, #tpu.memory_space<vmem>>, vector<128x416xf32>
    %26 = vector.broadcast %21 : vector<416x1xf32> to vector<416x784xf32>
    %27 = arith.mulf %1, %26 : vector<416x784xf32>
    %28 = vector.broadcast %24 : vector<416x1xf32> to vector<416x784xf32>
    %29 = arith.addf %27, %28 : vector<416x784xf32>
    %cst_14 = arith.constant 0.000000e+00 : f32
    %30 = vector.broadcast %cst_14 : f32 to vector<416x784xf32>
    %31 = arith.maximumf %29, %30 : vector<416x784xf32>
    %cst_15 = arith.constant dense<0.000000e+00> : vector<128x784xf32>
    %32 = tpu.matmul %25, %31, %cst_15 {dimension_numbers = #tpu.dot_dimension_numbers<[1], [0], [0], [1], [0, 0, 1, 1], [], []>} : vector<128x416xf32>, vector<416x784xf32>, vector<128x784xf32> -> vector<128x784xf32>
    %cst_16 = arith.constant 0.000000e+00 : f32
    %33 = vector.broadcast %cst_16 : f32 to vector<128x1xf32>
    %cst_17 = arith.constant 0.000000e+00 : f32
    %34 = vector.broadcast %cst_17 : f32 to vector<128x1xf32>
    %cst_18 = arith.constant dense<0.000000e+00> : vector<128xf32>
    %35 = vector.multi_reduction <add>, %32, %cst_18 [1] : vector<128x784xf32> to vector<128xf32>
    %36 = vector.shape_cast %35 : vector<128xf32> to vector<128x1xf32>
    %37 = arith.addf %33, %36 : vector<128x1xf32>
    %38 = arith.mulf %32, %32 : vector<128x784xf32>
    %cst_19 = arith.constant dense<0.000000e+00> : vector<128xf32>
    %39 = vector.multi_reduction <add>, %38, %cst_19 [1] : vector<128x784xf32> to vector<128xf32>
    %40 = vector.shape_cast %39 : vector<128xf32> to vector<128x1xf32>
    %41 = arith.addf %34, %40 : vector<128x1xf32>
    %cst_20 = arith.constant 0.00127551018 : f32
    %42 = vector.broadcast %cst_20 : f32 to vector<128x1xf32>
    %43 = arith.mulf %37, %42 : vector<128x1xf32>
    %cst_21 = arith.constant 0.00127551018 : f32
    %44 = vector.broadcast %cst_21 : f32 to vector<128x1xf32>
    %45 = arith.mulf %41, %44 : vector<128x1xf32>
    %46 = arith.mulf %43, %43 : vector<128x1xf32>
    %47 = arith.subf %45, %46 : vector<128x1xf32>
    %c0_22 = arith.constant 0 : index
    %c0_23 = arith.constant 0 : index
    %48 = vector.load %arg4[%c0_22, %c0_23] : memref<128x1xf32, #tpu.memory_space<vmem>>, vector<128x1xf32>
    %cst_24 = arith.constant 9.99999974E-6 : f32
    %49 = vector.broadcast %cst_24 : f32 to vector<128x1xf32>
    %50 = arith.addf %47, %49 : vector<128x1xf32>
    %51 = math.rsqrt %50 : vector<128x1xf32>
    %52 = arith.mulf %48, %51 : vector<128x1xf32>
    %c0_25 = arith.constant 0 : index
    %c0_26 = arith.constant 0 : index
    %53 = vector.load %arg5[%c0_25, %c0_26] : memref<128x1xf32, #tpu.memory_space<vmem>>, vector<128x1xf32>
    %54 = arith.mulf %43, %52 : vector<128x1xf32>
    %55 = arith.subf %53, %54 : vector<128x1xf32>
    %56 = vector.broadcast %52 : vector<128x1xf32> to vector<128x784xf32>
    %57 = arith.mulf %32, %56 : vector<128x784xf32>
    %58 = vector.broadcast %55 : vector<128x1xf32> to vector<128x784xf32>
    %59 = arith.addf %57, %58 : vector<128x784xf32>
    %c0_27 = arith.constant 0 : index
    %c0_28 = arith.constant 0 : index
    %c0_29 = arith.constant 0 : index
    %60 = vector.load %arg6[%c0_27, %c0_28, %c0_29] : memref<1x128x784xf32, #tpu.memory_space<vmem>>, vector<1x128x784xf32>
    %61 = vector.shape_cast %60 : vector<1x128x784xf32> to vector<128x784xf32>
    %62 = vector.shape_cast %59 : vector<128x784xf32> to vector<1x128x784xf32>
    tpu.vector_store %arg6[%c0_27, %c0_28, %c0_29], %62 {strides = array<i32>} : memref<1x128x784xf32, #tpu.memory_space<vmem>>, vector<1x128x784xf32>,
    return
  }
}

</mosaic_0001>

<llo_original>
// kernel: tpu_custom_call.1
$region0: #{tpu_custom_call.1}
  #allocation0 [shape = 'u32[]', space=smem, size = 0x4, offset = 0x4, fixed_abs, tag = 'smem constant byte address 0x4 - core index']
  #allocation1 [shape = 'u32[144,128]{1,0:T(1,128)}', space=vmem, size = 0x12000, scoped, tag = 'internal scratch']
  %s0 = inlined_call_operand.hbm [shape: f32[1,416,784], index: 0, kind: input, shape index: {}]
  %s1 = inlined_call_operand.vmem [shape: f32[128,416], index: 1, kind: input, shape index: {}]
  %s2 = inlined_call_operand.vmem [shape: f32[416,1], index: 2, kind: input, shape index: {}]
  %s3 = inlined_call_operand.vmem [shape: f32[416,1], index: 3, kind: input, shape index: {}]
  %s4 = inlined_call_operand.vmem [shape: f32[128,1], index: 4, kind: input, shape index: {}]
  %s5 = inlined_call_operand.vmem [shape: f32[128,1], index: 5, kind: input, shape index: {}]
  %s6 = inlined_call_operand.vmem [shape: f32[1,128,784], index: 6, kind: output, shape index: {}]
  %s7 = sld [smem:[#allocation0]]
  $region38: #{tpu_custom_call.1} parent=0
    _
  %s9 = ssub.s32 1, %s7
  %s10 = scalar_select 0, %s9, %s7
  $region1: #{tpu_custom_call.1} parent=0
    #allocation2 [shape = 'u8[1490944]{0}', space=vmem, size = 0x16c000, scoped, tag = 'input window, operand 0, single buffered']
    #allocation3 [shape = 's32[1]{0}', space=sflag, size = 0x4, scoped, tag = 'scoped memory for tpu_custom_call.1']
    %11 = vsyncpa [#allocation3], 0
    // Predicated region
    $region2: #{tpu_custom_call.1} parent=1 // pred_check
      _
    $region3: #{tpu_custom_call.1} parent=1 // pred_check_branch
      %13 = sbr.rel (0) target = $region5
    $region4: #{tpu_custom_call.1} parent=1 // pred_region
      %s15 = ssub.s32 46592, 46592
      %16 = vsyncadd [#allocation3], %s15
      %s17 = sshll.u32 [#allocation2], 4
      %s18 = int_to_ptr.vmem [resolvable:$true] %s17
      %23 = dma.hbm_to_vmem [thread:$0]  %s0, 46592, %s18, [#allocation3], 896, 896, 56
    $region5: #{tpu_custom_call.1} parent=1 // pred_fallthru
      _
    // Predicated region
    $region6: #{tpu_custom_call.1} parent=1 // pred_check
      _
    $region7: #{tpu_custom_call.1} parent=1 // pred_check_branch
      %25 = sbr.rel (0) target = $region9
    $region8: #{tpu_custom_call.1} parent=1 // pred_region
      _
    $region9: #{tpu_custom_call.1} parent=1 // pred_fallthru
      _
    // Predicated region
    $region10: #{tpu_custom_call.1} parent=1 // pred_check
      _
    $region11: #{tpu_custom_call.1} parent=1 // pred_check_branch
      %27 = sbr.rel (0) target = $region13
    $region12: #{tpu_custom_call.1} parent=1 // pred_region
      _
    $region13: #{tpu_custom_call.1} parent=1 // pred_fallthru
      _
    // Predicated region
    $region14: #{tpu_custom_call.1} parent=1 // pred_check
      _
    $region15: #{tpu_custom_call.1} parent=1 // pred_check_branch
      %29 = sbr.rel (0) target = $region17
    $region16: #{tpu_custom_call.1} parent=1 // pred_region
      _
    $region17: #{tpu_custom_call.1} parent=1 // pred_fallthru
      _
    // Predicated region
    $region18: #{tpu_custom_call.1} parent=1 // pred_check
      _
    $region19: #{tpu_custom_call.1} parent=1 // pred_check_branch
      %31 = sbr.rel (0) target = $region21
    $region20: #{tpu_custom_call.1} parent=1 // pred_region
      _
    $region21: #{tpu_custom_call.1} parent=1 // pred_fallthru
      _
    // Predicated region
    $region22: #{tpu_custom_call.1} parent=1 // pred_check
      _
    $region23: #{tpu_custom_call.1} parent=1 // pred_check_branch
      %33 = sbr.rel (0) target = $region25
    $region24: #{tpu_custom_call.1} parent=1 // pred_region
      _
    $region25: #{tpu_custom_call.1} parent=1 // pred_fallthru
      _
    // Predicated region
    $region26: #{tpu_custom_call.1} parent=1 // pred_check
      _
    $region27: #{tpu_custom_call.1} parent=1 // pred_check_branch
      %35 = sbr.rel (0) target = $region29
    $region28: #{tpu_custom_call.1} parent=1 // pred_region
      %36 = dma.done [#allocation3], 46592
    $region29: #{tpu_custom_call.1} parent=1 // pred_fallthru
      _
    %v37 = vld [vmem:[#allocation2] sm:$0xff]
    %v38 = vld [vmem:[#allocation2 + $0x8] sm:$0xff]
    %v39 = vld [vmem:[#allocation2 + $0x10] sm:$0xff]
    %v40 = vld [vmem:[#allocation2 + $0x18] sm:$0xff]
    %v41 = vld [vmem:[#allocation2 + $0x20] sm:$0xff]
    %v42 = vld [vmem:[#allocation2 + $0x28] sm:$0xff]
    %v43 = vld [vmem:[#allocation2 + $0x30] sm:$0xff]
    %v44 = vld [vmem:[#allocation2 + $0x38] sm:$0xff]
    %v45 = vld [vmem:[#allocation2 + $0x40] sm:$0xff]
    %v46 = vld [vmem:[#allocation2 + $0x48] sm:$0xff]
    %v47 = vld [vmem:[#allocation2 + $0x50] sm:$0xff]
    %v48 = vld [vmem:[#allocation2 + $0x58] sm:$0xff]
    %v49 = vld [vmem:[#allocation2 + $0x60] sm:$0xff]
    %v50 = vld [vmem:[#allocation2 + $0x68] sm:$0xff]
    %v51 = vld [vmem:[#allocation2 + $0x70] sm:$0xff]
    %v52 = vld [vmem:[#allocation2 + $0x78] sm:$0xff]
    %v53 = vld [vmem:[#allocation2 + $0x80] sm:$0xff]
    %v54 = vld [vmem:[#allocation2 + $0x88] sm:$0xff]
    %v55 = vld [vmem:[#allocation2 + $0x90] sm:$0xff]
    %v56 = vld [vmem:[#allocation2 + $0x98] sm:$0xff]
    %v57 = vld [vmem:[#allocation2 + $0xa0] sm:$0xff]
    %v58 = vld [vmem:[#allocation2 + $0xa8] sm:$0xff]
    %v59 = vld [vmem:[#allocation2 + $0xb0] sm:$0xff]
    %v60 = vld [vmem:[#allocation2 + $0xb8] sm:$0xff]
    %v61 = vld [vmem:[#allocation2 + $0xc0] sm:$0xff]
    %v62 = vld [vmem:[#allocation2 + $0xc8] sm:$0xff]
    %v63 = vld [vmem:[#allocation2 + $0xd0] sm:$0xff]
    %v64 = vld [vmem:[#allocation2 + $0xd8] sm:$0xff]
    %v65 = vld [vmem:[#allocation2 + $0xe0] sm:$0xff]
    %v66 = vld [vmem:[#allocation2 + $0xe8] sm:$0xff]
    %v67 = vld [vmem:[#allocation2 + $0xf0] sm:$0xff]
    %v68 = vld [vmem:[#allocation2 + $0xf8] sm:$0xff]
    %v69 = vld [vmem:[#allocation2 + $0x100] sm:$0xff]
    %v70 = vld [vmem:[#allocation2 + $0x108] sm:$0xff]
    %v71 = vld [vmem:[#allocation2 + $0x110] sm:$0xff]
    %v72 = vld [vmem:[#allocation2 + $0x118] sm:$0xff]
    %v73 = vld [vmem:[#allocation2 + $0x120] sm:$0xff]
    %v74 = vld [vmem:[#allocation2 + $0x128] sm:$0xff]
    %v75 = vld [vmem:[#allocation2 + $0x130] sm:$0xff]
    %v76 = vld [vmem:[#allocation2 + $0x138] sm:$0xff]
    %v77 = vld [vmem:[#allocation2 + $0x140] sm:$0xff]
    %v78 = vld [vmem:[#allocation2 + $0x148] sm:$0xff]
    %v79 = vld [vmem:[#allocation2 + $0x150] sm:$0xff]
    %v80 = vld [vmem:[#allocation2 + $0x158] sm:$0xff]
    %v81 = vld [vmem:[#allocation2 + $0x160] sm:$0xff]
    %v82 = vld [vmem:[#allocation2 + $0x168] sm:$0xff]
    %v83 = vld [vmem:[#allocation2 + $0x170] sm:$0xff]
    %v84 = vld [vmem:[#allocation2 + $0x178] sm:$0xff]
    %v85 = vld [vmem:[#allocation2 + $0x180] sm:$0xff]
    %v86 = vld [vmem:[#allocation2 + $0x188] sm:$0xff]
    %v87 = vld [vmem:[#allocation2 + $0x190] sm:$0xff]
    %v88 = vld [vmem:[#allocation2 + $0x198] sm:$0xff]
    %v89 = vld [vmem:[#allocation2 + $0x1a0] sm:$0xff]
    %v90 = vld [vmem:[#allocation2 + $0x1a8] sm:$0xff]
    %v91 = vld [vmem:[#allocation2 + $0x1b0] sm:$0xff]
    %v92 = vld [vmem:[#allocation2 + $0x1b8] sm:$0xff]
    %v93 = vld [vmem:[#allocation2 + $0x1c0] sm:$0xff]
    %v94 = vld [vmem:[#allocation2 + $0x1c8] sm:$0xff]
    %v95 = vld [vmem:[#allocation2 + $0x1d0] sm:$0xff]
    %v96 = vld [vmem:[#allocation2 + $0x1d8] sm:$0xff]
    %v97 = vld [vmem:[#allocation2 + $0x1e0] sm:$0xff]
    %v98 = vld [vmem:[#allocation2 + $0x1e8] sm:$0xff]
    %v99 = vld [vmem:[#allocation2 + $0x1f0] sm:$0xff]
    %v100 = vld [vmem:[#allocation2 + $0x1f8] sm:$0xff]
    %v101 = vld [vmem:[#allocation2 + $0x200] sm:$0xff]
    %v102 = vld [vmem:[#allocation2 + $0x208] sm:$0xff]
    %v103 = vld [vmem:[#allocation2 + $0x210] sm:$0xff]
    %v104 = vld [vmem:[#allocation2 + $0x218] sm:$0xff]
    %v105 = vld [vmem:[#allocation2 + $0x220] sm:$0xff]
    %v106 = vld [vmem:[#allocation2 + $0x228] sm:$0xff]
    %v107 = vld [vmem:[#allocation2 + $0x230] sm:$0xff]
    %v108 = vld [vmem:[#allocation2 + $0x238] sm:$0xff]
    %v109 = vld [vmem:[#allocation2 + $0x240] sm:$0xff]
    %v110 = vld [vmem:[#allocation2 + $0x248] sm:$0xff]
    %v111 = vld [vmem:[#allocation2 + $0x250] sm:$0xff]
    %v112 = vld [vmem:[#allocation2 + $0x258] sm:$0xff]
    %v113 = vld [vmem:[#allocation2 + $0x260] sm:$0xff]
    %v114 = vld [vmem:[#allocation2 + $0x268] sm:$0xff]
    %v115 = vld [vmem:[#allocation2 + $0x270] sm:$0xff]
    %v116 = vld [vmem:[#allocation2 + $0x278] sm:$0xff]
    %v117 = vld [vmem:[#allocation2 + $0x280] sm:$0xff]
    %v118 = vld [vmem:[#allocation2 + $0x288] sm:$0xff]
    %v119 = vld [vmem:[#allocation2 + $0x290] sm:$0xff]
    %v120 = vld [vmem:[#allocation2 + $0x298] sm:$0xff]
    %v121 = vld [vmem:[#allocation2 + $0x2a0] sm:$0xff]
    %v122 = vld [vmem:[#allocation2 + $0x2a8] sm:$0xff]
    %v123 = vld [vmem:[#allocation2 + $0x2b0] sm:$0xff]
    %v124 = vld [vmem:[#allocation2 + $0x2b8] sm:$0xff]
    %v125 = vld [vmem:[#allocation2 + $0x2c0] sm:$0xff]
    %v126 = vld [vmem:[#allocation2 + $0x2c8] sm:$0xff]
    %v127 = vld [vmem:[#allocation2 + $0x2d0] sm:$0xff]
    %v128 = vld [vmem:[#allocation2 + $0x2d8] sm:$0xff]
    %v129 = vld [vmem:[#allocation2 + $0x2e0] sm:$0xff]
    %v130 = vld [vmem:[#allocation2 + $0x2e8] sm:$0xff]
    %v131 = vld [vmem:[#allocation2 + $0x2f0] sm:$0xff]
    %v132 = vld [vmem:[#allocation2 + $0x2f8] sm:$0xff]
    %v133 = vld [vmem:[#allocation2 + $0x300] sm:$0xff]
    %v134 = vld [vmem:[#allocation2 + $0x308] sm:$0xff]
    %v135 = vld [vmem:[#allocation2 + $0x310] sm:$0xff]
    %v136 = vld [vmem:[#allocation2 + $0x318] sm:$0xff]
    %v137 = vld [vmem:[#allocation2 + $0x320] sm:$0xff]
    %v138 = vld [vmem:[#allocation2 + $0x328] sm:$0xff]
    %v139 = vld [vmem:[#allocation2 + $0x330] sm:$0xff]
    %v140 = vld [vmem:[#allocation2 + $0x338] sm:$0xff]
    %v141 = vld [vmem:[#allocation2 + $0x340] sm:$0xff]
    %v142 = vld [vmem:[#allocation2 + $0x348] sm:$0xff]
    %v143 = vld [vmem:[#allocation2 + $0x350] sm:$0xff]
    %v144 = vld [vmem:[#allocation2 + $0x358] sm:$0xff]
    %v145 = vld [vmem:[#allocation2 + $0x360] sm:$0xff]
    %v146 = vld [vmem:[#allocation2 + $0x368] sm:$0xff]
    %v147 = vld [vmem:[#allocation2 + $0x370] sm:$0xff]
    %v148 = vld [vmem:[#allocation2 + $0x378] sm:$0xff]
    %v149 = vld [vmem:[#allocation2 + $0x380] sm:$0xff]
    %v150 = vld [vmem:[#allocation2 + $0x388] sm:$0xff]
    %v151 = vld [vmem:[#allocation2 + $0x390] sm:$0xff]
    %v152 = vld [vmem:[#allocation2 + $0x398] sm:$0xff]
    %v153 = vld [vmem:[#allocation2 + $0x3a0] sm:$0xff]
    %v154 = vld [vmem:[#allocation2 + $0x3a8] sm:$0xff]
    %v155 = vld [vmem:[#allocation2 + $0x3b0] sm:$0xff]
    %v156 = vld [vmem:[#allocation2 + $0x3b8] sm:$0xff]
    %v157 = vld [vmem:[#allocation2 + $0x3c0] sm:$0xff]
    %v158 = vld [vmem:[#allocation2 + $0x3c8] sm:$0xff]
    %v159 = vld [vmem:[#allocation2 + $0x3d0] sm:$0xff]
    %v160 = vld [vmem:[#allocation2 + $0x3d8] sm:$0xff]
    %v161 = vld [vmem:[#allocation2 + $0x3e0] sm:$0xff]
    %v162 = vld [vmem:[#allocation2 + $0x3e8] sm:$0xff]
    %v163 = vld [vmem:[#allocation2 + $0x3f0] sm:$0xff]
    %v164 = vld [vmem:[#allocation2 + $0x3f8] sm:$0xff]
    %v165 = vld [vmem:[#allocation2 + $0x400] sm:$0xff]
    %v166 = vld [vmem:[#allocation2 + $0x408] sm:$0xff]
    %v167 = vld [vmem:[#allocation2 + $0x410] sm:$0xff]
    %v168 = vld [vmem:[#allocation2 + $0x418] sm:$0xff]
    %v169 = vld [vmem:[#allocation2 + $0x420] sm:$0xff]
    %v170 = vld [vmem:[#allocation2 + $0x428] sm:$0xff]
    %v171 = vld [vmem:[#allocation2 + $0x430] sm:$0xff]
    %v172 = vld [vmem:[#allocation2 + $0x438] sm:$0xff]
    %v173 = vld [vmem:[#allocation2 + $0x440] sm:$0xff]
    %v174 = vld [vmem:[#allocation2 + $0x448] sm:$0xff]
    %v175 = vld [vmem:[#allocation2 + $0x450] sm:$0xff]
    %v176 = vld [vmem:[#allocation2 + $0x458] sm:$0xff]
    %v177 = vld [vmem:[#allocation2 + $0x460] sm:$0xff]
    %v178 = vld [vmem:[#allocation2 + $0x468] sm:$0xff]
    %v179 = vld [vmem:[#allocation2 + $0x470] sm:$0xff]
    %v180 = vld [vmem:[#allocation2 + $0x478] sm:$0xff]
    %v181 = vld [vmem:[#allocation2 + $0x480] sm:$0xff]
    %v182 = vld [vmem:[#allocation2 + $0x488] sm:$0xff]
    %v183 = vld [vmem:[#allocation2 + $0x490] sm:$0xff]
    %v184 = vld [vmem:[#allocation2 + $0x498] sm:$0xff]
    %v185 = vld [vmem:[#allocation2 + $0x4a0] sm:$0xff]
    %v186 = vld [vmem:[#allocation2 + $0x4a8] sm:$0xff]
    %v187 = vld [vmem:[#allocation2 + $0x4b0] sm:$0xff]
    %v188 = vld [vmem:[#allocation2 + $0x4b8] sm:$0xff]
    %v189 = vld [vmem:[#allocation2 + $0x4c0] sm:$0xff]
    %v190 = vld [vmem:[#allocation2 + $0x4c8] sm:$0xff]
    %v191 = vld [vmem:[#allocation2 + $0x4d0] sm:$0xff]
    %v192 = vld [vmem:[#allocation2 + $0x4d8] sm:$0xff]
    %v193 = vld [vmem:[#allocation2 + $0x4e0] sm:$0xff]
    %v194 = vld [vmem:[#allocation2 + $0x4e8] sm:$0xff]
    %v195 = vld [vmem:[#allocation2 + $0x4f0] sm:$0xff]
    %v196 = vld [vmem:[#allocation2 + $0x4f8] sm:$0xff]
    %v197 = vld [vmem:[#allocation2 + $0x500] sm:$0xff]
    %v198 = vld [vmem:[#allocation2 + $0x508] sm:$0xff]
    %v199 = vld [vmem:[#allocation2 + $0x510] sm:$0xff]
    %v200 = vld [vmem:[#allocation2 + $0x518] sm:$0xff]
    %v201 = vld [vmem:[#allocation2 + $0x520] sm:$0xff]
    %v202 = vld [vmem:[#allocation2 + $0x528] sm:$0xff]
    %v203 = vld [vmem:[#allocation2 + $0x530] sm:$0xff]
    %v204 = vld [vmem:[#allocation2 + $0x538] sm:$0xff]
    %v205 = vld [vmem:[#allocation2 + $0x540] sm:$0xff]
    %v206 = vld [vmem:[#allocation2 + $0x548] sm:$0xff]
    %v207 = vld [vmem:[#allocation2 + $0x550] sm:$0xff]
    %v208 = vld [vmem:[#allocation2 + $0x558] sm:$0xff]
    %v209 = vld [vmem:[#allocation2 + $0x560] sm:$0xff]
    %v210 = vld [vmem:[#allocation2 + $0x568] sm:$0xff]
    %v211 = vld [vmem:[#allocation2 + $0x570] sm:$0xff]
    %v212 = vld [vmem:[#allocation2 + $0x578] sm:$0xff]
    %v213 = vld [vmem:[#allocation2 + $0x580] sm:$0xff]
    %v214 = vld [vmem:[#allocation2 + $0x588] sm:$0xff]
    %v215 = vld [vmem:[#allocation2 + $0x590] sm:$0xff]
    %v216 = vld [vmem:[#allocation2 + $0x598] sm:$0xff]
    %v217 = vld [vmem:[#allocation2 + $0x5a0] sm:$0xff]
    %v218 = vld [vmem:[#allocation2 + $0x5a8] sm:$0xff]
    %v219 = vld [vmem:[#allocation2 + $0x5b0] sm:$0xff]
    %v220 = vld [vmem:[#allocation2 + $0x5b8] sm:$0xff]
    %v221 = vld [vmem:[#allocation2 + $0x5c0] sm:$0xff]
    %v222 = vld [vmem:[#allocation2 + $0x5c8] sm:$0xff]
    %v223 = vld [vmem:[#allocation2 + $0x5d0] sm:$0xff]
    %v224 = vld [vmem:[#allocation2 + $0x5d8] sm:$0xff]
    %v225 = vld [vmem:[#allocation2 + $0x5e0] sm:$0xff]
    %v226 = vld [vmem:[#allocation2 + $0x5e8] sm:$0xff]
    %v227 = vld [vmem:[#allocation2 + $0x5f0] sm:$0xff]
    %v228 = vld [vmem:[#allocation2 + $0x5f8] sm:$0xff]
    %v229 = vld [vmem:[#allocation2 + $0x600] sm:$0xff]
    %v230 = vld [vmem:[#allocation2 + $0x608] sm:$0xff]
    %v231 = vld [vmem:[#allocation2 + $0x610] sm:$0xff]
    %v232 = vld [vmem:[#allocation2 + $0x618] sm:$0xff]
    %v233 = vld [vmem:[#allocation2 + $0x620] sm:$0xff]
    %v234 = vld [vmem:[#allocation2 + $0x628] sm:$0xff]
    %v235 = vld [vmem:[#allocation2 + $0x630] sm:$0xff]
    %v236 = vld [vmem:[#allocation2 + $0x638] sm:$0xff]
    %v237 = vld [vmem:[#allocation2 + $0x640] sm:$0xff]
    %v238 = vld [vmem:[#allocation2 + $0x648] sm:$0xff]
    %v239 = vld [vmem:[#allocation2 + $0x650] sm:$0xff]
    %v240 = vld [vmem:[#allocation2 + $0x658] sm:$0xff]
    %v241 = vld [vmem:[#allocation2 + $0x660] sm:$0xff]
    %v242 = vld [vmem:[#allocation2 + $0x668] sm:$0xff]
    %v243 = vld [vmem:[#allocation2 + $0x670] sm:$0xff]
    %v244 = vld [vmem:[#allocation2 + $0x678] sm:$0xff]
    %v245 = vld [vmem:[#allocation2 + $0x680] sm:$0xff]
    %v246 = vld [vmem:[#allocation2 + $0x688] sm:$0xff]
    %v247 = vld [vmem:[#allocation2 + $0x690] sm:$0xff]
    %v248 = vld [vmem:[#allocation2 + $0x698] sm:$0xff]
    %v249 = vld [vmem:[#allocation2 + $0x6a0] sm:$0xff]
    %v250 = vld [vmem:[#allocation2 + $0x6a8] sm:$0xff]
    %v251 = vld [vmem:[#allocation2 + $0x6b0] sm:$0xff]
    %v252 = vld [vmem:[#allocation2 + $0x6b8] sm:$0xff]
    %v253 = vld [vmem:[#allocation2 + $0x6c0] sm:$0xff]
    %v254 = vld [vmem:[#allocation2 + $0x6c8] sm:$0xff]
    %v255 = vld [vmem:[#allocation2 + $0x6d0] sm:$0xff]
    %v256 = vld [vmem:[#allocation2 + $0x6d8] sm:$0xff]
    %v257 = vld [vmem:[#allocation2 + $0x6e0] sm:$0xff]
    %v258 = vld [vmem:[#allocation2 + $0x6e8] sm:$0xff]
    %v259 = vld [vmem:[#allocation2 + $0x6f0] sm:$0xff]
    %v260 = vld [vmem:[#allocation2 + $0x6f8] sm:$0xff]
    %v261 = vld [vmem:[#allocation2 + $0x700] sm:$0xff]
    %v262 = vld [vmem:[#allocation2 + $0x708] sm:$0xff]
    %v263 = vld [vmem:[#allocation2 + $0x710] sm:$0xff]
    %v264 = vld [vmem:[#allocation2 + $0x718] sm:$0xff]
    %v265 = vld [vmem:[#allocation2 + $0x720] sm:$0xff]
    %v266 = vld [vmem:[#allocation2 + $0x728] sm:$0xff]
    %v267 = vld [vmem:[#allocation2 + $0x730] sm:$0xff]
    %v268 = vld [vmem:[#allocation2 + $0x738] sm:$0xff]
    %v269 = vld [vmem:[#allocation2 + $0x740] sm:$0xff]
    %v270 = vld [vmem:[#allocation2 + $0x748] sm:$0xff]
    %v271 = vld [vmem:[#allocation2 + $0x750] sm:$0xff]
    %v272 = vld [vmem:[#allocation2 + $0x758] sm:$0xff]
    %v273 = vld [vmem:[#allocation2 + $0x760] sm:$0xff]
    %v274 = vld [vmem:[#allocation2 + $0x768] sm:$0xff]
    %v275 = vld [vmem:[#allocation2 + $0x770] sm:$0xff]
    %v276 = vld [vmem:[#allocation2 + $0x778] sm:$0xff]
    %v277 = vld [vmem:[#allocation2 + $0x780] sm:$0xff]
    %v278 = vld [vmem:[#allocation2 + $0x788] sm:$0xff]
    %v279 = vld [vmem:[#allocation2 + $0x790] sm:$0xff]
    %v280 = vld [vmem:[#allocation2 + $0x798] sm:$0xff]
    %v281 = vld [vmem:[#allocation2 + $0x7a0] sm:$0xff]
    %v282 = vld [vmem:[#allocation2 + $0x7a8] sm:$0xff]
    %v283 = vld [vmem:[#allocation2 + $0x7b0] sm:$0xff]
    %v284 = vld [vmem:[#allocation2 + $0x7b8] sm:$0xff]
    %v285 = vld [vmem:[#allocation2 + $0x7c0] sm:$0xff]
    %v286 = vld [vmem:[#allocation2 + $0x7c8] sm:$0xff]
    %v287 = vld [vmem:[#allocation2 + $0x7d0] sm:$0xff]
    %v288 = vld [vmem:[#allocation2 + $0x7d8] sm:$0xff]
    %v289 = vld [vmem:[#allocation2 + $0x7e0] sm:$0xff]
    %v290 = vld [vmem:[#allocation2 + $0x7e8] sm:$0xff]
    %v291 = vld [vmem:[#allocation2 + $0x7f0] sm:$0xff]
    %v292 = vld [vmem:[#allocation2 + $0x7f8] sm:$0xff]
    %v293 = vld [vmem:[#allocation2 + $0x800] sm:$0xff]
    %v294 = vld [vmem:[#allocation2 + $0x808] sm:$0xff]
    %v295 = vld [vmem:[#allocation2 + $0x810] sm:$0xff]
    %v296 = vld [vmem:[#allocation2 + $0x818] sm:$0xff]
    %v297 = vld [vmem:[#allocation2 + $0x820] sm:$0xff]
    %v298 = vld [vmem:[#allocation2 + $0x828] sm:$0xff]
    %v299 = vld [vmem:[#allocation2 + $0x830] sm:$0xff]
    %v300 = vld [vmem:[#allocation2 + $0x838] sm:$0xff]
    %v301 = vld [vmem:[#allocation2 + $0x840] sm:$0xff]
    %v302 = vld [vmem:[#allocation2 + $0x848] sm:$0xff]
    %v303 = vld [vmem:[#allocation2 + $0x850] sm:$0xff]
    %v304 = vld [vmem:[#allocation2 + $0x858] sm:$0xff]
    %v305 = vld [vmem:[#allocation2 + $0x860] sm:$0xff]
    %v306 = vld [vmem:[#allocation2 + $0x868] sm:$0xff]
    %v307 = vld [vmem:[#allocation2 + $0x870] sm:$0xff]
    %v308 = vld [vmem:[#allocation2 + $0x878] sm:$0xff]
    %v309 = vld [vmem:[#allocation2 + $0x880] sm:$0xff]
    %v310 = vld [vmem:[#allocation2 + $0x888] sm:$0xff]
    %v311 = vld [vmem:[#allocation2 + $0x890] sm:$0xff]
    %v312 = vld [vmem:[#allocation2 + $0x898] sm:$0xff]
    %v313 = vld [vmem:[#allocation2 + $0x8a0] sm:$0xff]
    %v314 = vld [vmem:[#allocation2 + $0x8a8] sm:$0xff]
    %v315 = vld [vmem:[#allocation2 + $0x8b0] sm:$0xff]
    %v316 = vld [vmem:[#allocation2 + $0x8b8] sm:$0xff]
    %v317 = vld [vmem:[#allocation2 + $0x8c0] sm:$0xff]
    %v318 = vld [vmem:[#allocation2 + $0x8c8] sm:$0xff]
    %v319 = vld [vmem:[#allocation2 + $0x8d0] sm:$0xff]
    %v320 = vld [vmem:[#allocation2 + $0x8d8] sm:$0xff]
    %v321 = vld [vmem:[#allocation2 + $0x8e0] sm:$0xff]
    %v322 = vld [vmem:[#allocation2 + $0x8e8] sm:$0xff]
    %v323 = vld [vmem:[#allocation2 + $0x8f0] sm:$0xff]
    %v324 = vld [vmem:[#allocation2 + $0x8f8] sm:$0xff]
    %v325 = vld [vmem:[#allocation2 + $0x900] sm:$0xff]
    %v326 = vld [vmem:[#allocation2 + $0x908] sm:$0xff]
    %v327 = vld [vmem:[#allocation2 + $0x910] sm:$0xff]
    %v328 = vld [vmem:[#allocation2 + $0x918] sm:$0xff]
    %v329 = vld [vmem:[#allocation2 + $0x920] sm:$0xff]
    %v330 = vld [vmem:[#allocation2 + $0x928] sm:$0xff]
    %v331 = vld [vmem:[#allocation2 + $0x930] sm:$0xff]
    %v332 = vld [vmem:[#allocation2 + $0x938] sm:$0xff]
    %v333 = vld [vmem:[#allocation2 + $0x940] sm:$0xff]
    %v334 = vld [vmem:[#allocation2 + $0x948] sm:$0xff]
    %v335 = vld [vmem:[#allocation2 + $0x950] sm:$0xff]
    %v336 = vld [vmem:[#allocation2 + $0x958] sm:$0xff]
    %v337 = vld [vmem:[#allocation2 + $0x960] sm:$0xff]
    %v338 = vld [vmem:[#allocation2 + $0x968] sm:$0xff]
    %v339 = vld [vmem:[#allocation2 + $0x970] sm:$0xff]
    %v340 = vld [vmem:[#allocation2 + $0x978] sm:$0xff]
    %v341 = vld [vmem:[#allocation2 + $0x980] sm:$0xff]
    %v342 = vld [vmem:[#allocation2 + $0x988] sm:$0xff]
    %v343 = vld [vmem:[#allocation2 + $0x990] sm:$0xff]
    %v344 = vld [vmem:[#allocation2 + $0x998] sm:$0xff]
    %v345 = vld [vmem:[#allocation2 + $0x9a0] sm:$0xff]
    %v346 = vld [vmem:[#allocation2 + $0x9a8] sm:$0xff]
    %v347 = vld [vmem:[#allocation2 + $0x9b0] sm:$0xff]
    %v348 = vld [vmem:[#allocation2 + $0x9b8] sm:$0xff]
    %v349 = vld [vmem:[#allocation2 + $0x9c0] sm:$0xff]
    %v350 = vld [vmem:[#allocation2 + $0x9c8] sm:$0xff]
    %v351 = vld [vmem:[#allocation2 + $0x9d0] sm:$0xff]
    %v352 = vld [vmem:[#allocation2 + $0x9d8] sm:$0xff]
    %v353 = vld [vmem:[#allocation2 + $0x9e0] sm:$0xff]
    %v354 = vld [vmem:[#allocation2 + $0x9e8] sm:$0xff]
    %v355 = vld [vmem:[#allocation2 + $0x9f0] sm:$0xff]
    %v356 = vld [vmem:[#allocation2 + $0x9f8] sm:$0xff]
    %v357 = vld [vmem:[#allocation2 + $0xa00] sm:$0xff]
    %v358 = vld [vmem:[#allocation2 + $0xa08] sm:$0xff]
    %v359 = vld [vmem:[#allocation2 + $0xa10] sm:$0xff]
    %v360 = vld [vmem:[#allocation2 + $0xa18] sm:$0xff]
    %v361 = vld [vmem:[#allocation2 + $0xa20] sm:$0xff]
    %v362 = vld [vmem:[#allocation2 + $0xa28] sm:$0xff]
    %v363 = vld [vmem:[#allocation2 + $0xa30] sm:$0xff]
    %v364 = vld [vmem:[#allocation2 + $0xa38] sm:$0xff]
    %v365 = vld [vmem:[#allocation2 + $0xa40] sm:$0xff]
    %v366 = vld [vmem:[#allocation2 + $0xa48] sm:$0xff]
    %v367 = vld [vmem:[#allocation2 + $0xa50] sm:$0xff]
    %v368 = vld [vmem:[#allocation2 + $0xa58] sm:$0xff]
    %v369 = vld [vmem:[#allocation2 + $0xa60] sm:$0xff]
    %v370 = vld [vmem:[#allocation2 + $0xa68] sm:$0xff]
    %v371 = vld [vmem:[#allocation2 + $0xa70] sm:$0xff]
    %v372 = vld [vmem:[#allocation2 + $0xa78] sm:$0xff]
    %v373 = vld [vmem:[#allocation2 + $0xa80] sm:$0xff]
    %v374 = vld [vmem:[#allocation2 + $0xa88] sm:$0xff]
    %v375 = vld [vmem:[#allocation2 + $0xa90] sm:$0xff]
    %v376 = vld [vmem:[#allocation2 + $0xa98] sm:$0xff]
    %v377 = vld [vmem:[#allocation2 + $0xaa0] sm:$0xff]
    %v378 = vld [vmem:[#allocation2 + $0xaa8] sm:$0xff]
    %v379 = vld [vmem:[#allocation2 + $0xab0] sm:$0xff]
    %v380 = vld [vmem:[#allocation2 + $0xab8] sm:$0xff]
    %v381 = vld [vmem:[#allocation2 + $0xac0] sm:$0xff]
    %v382 = vld [vmem:[#allocation2 + $0xac8] sm:$0xff]
    %v383 = vld [vmem:[#allocation2 + $0xad0] sm:$0xff]
    %v384 = vld [vmem:[#allocation2 + $0xad8] sm:$0xff]
    %v385 = vld [vmem:[#allocation2 + $0xae0] sm:$0xff]
    %v386 = vld [vmem:[#allocation2 + $0xae8] sm:$0xff]
    %v387 = vld [vmem:[#allocation2 + $0xaf0] sm:$0xff]
    %v388 = vld [vmem:[#allocation2 + $0xaf8] sm:$0xff]
    %v389 = vld [vmem:[#allocation2 + $0xb00] sm:$0xff]
    %v390 = vld [vmem:[#allocation2 + $0xb08] sm:$0xff]
    %v391 = vld [vmem:[#allocation2 + $0xb10] sm:$0xff]
    %v392 = vld [vmem:[#allocation2 + $0xb18] sm:$0xff]
    %v393 = vld [vmem:[#allocation2 + $0xb20] sm:$0xff]
    %v394 = vld [vmem:[#allocation2 + $0xb28] sm:$0xff]
    %v395 = vld [vmem:[#allocation2 + $0xb30] sm:$0xff]
    %v396 = vld [vmem:[#allocation2 + $0xb38] sm:$0xff]
    %v397 = vld [vmem:[#allocation2 + $0xb40] sm:$0xff]
    %v398 = vld [vmem:[#allocation2 + $0xb48] sm:$0xff]
    %v399 = vld [vmem:[#allocation2 + $0xb50] sm:$0xff]
    %v400 = vld [vmem:[#allocation2 + $0xb58] sm:$0xff]
    %v401 = vadd.f32 %v37, %v38
    %v402 = vadd.f32 %v401, %v39
    %v403 = vadd.f32 %v402, %v40
    %v404 = vadd.f32 %v403, %v41
    %v405 = vadd.f32 %v404, %v42
    %vm406 = vcmask 130048
    %v407 = vsel %vm406, %v43, 0.0
    %v408 = vadd.f32 %v405, %v407
    %409 = vadd.xlane.f32.xlu0 %v408
    %v410 = vpop.xlane.xlu0 %409
    %v411 = vadd.f32 %v44, %v45
    %v412 = vadd.f32 %v411, %v46
    %v413 = vadd.f32 %v412, %v47
    %v414 = vadd.f32 %v413, %v48
    %v415 = vadd.f32 %v414, %v49
    %v416 = vsel %vm406, %v50, 0.0
    %v417 = vadd.f32 %v415, %v416
    %418 = vadd.xlane.f32.xlu0 %v417
    %v419 = vpop.xlane.xlu0 %418
    %v420 = vadd.f32 %v51, %v52
    %v421 = vadd.f32 %v420, %v53
    %v422 = vadd.f32 %v421, %v54
    %v423 = vadd.f32 %v422, %v55
    %v424 = vadd.f32 %v423, %v56
    %v425 = vsel %vm406, %v57, 0.0
    %v426 = vadd.f32 %v424, %v425
    %427 = vadd.xlane.f32.xlu0 %v426
    %v428 = vpop.xlane.xlu0 %427
    %v429 = vadd.f32 %v58, %v59
    %v430 = vadd.f32 %v429, %v60
    %v431 = vadd.f32 %v430, %v61
    %v432 = vadd.f32 %v431, %v62
    %v433 = vadd.f32 %v432, %v63
    %v434 = vsel %vm406, %v64, 0.0
    %v435 = vadd.f32 %v433, %v434
    %436 = vadd.xlane.f32.xlu0 %v435
    %v437 = vpop.xlane.xlu0 %436
    %v438 = vadd.f32 %v65, %v66
    %v439 = vadd.f32 %v438, %v67
    %v440 = vadd.f32 %v439, %v68
    %v441 = vadd.f32 %v440, %v69
    %v442 = vadd.f32 %v441, %v70
    %v443 = vsel %vm406, %v71, 0.0
    %v444 = vadd.f32 %v442, %v443
    %445 = vadd.xlane.f32.xlu0 %v444
    %v446 = vpop.xlane.xlu0 %445
    %v447 = vadd.f32 %v72, %v73
    %v448 = vadd.f32 %v447, %v74
    %v449 = vadd.f32 %v448, %v75
    %v450 = vadd.f32 %v449, %v76
    %v451 = vadd.f32 %v450, %v77
    %v452 = vsel %vm406, %v78, 0.0
    %v453 = vadd.f32 %v451, %v452
    %454 = vadd.xlane.f32.xlu0 %v453
    %v455 = vpop.xlane.xlu0 %454
    %v456 = vadd.f32 %v79, %v80
    %v457 = vadd.f32 %v456, %v81
    %v458 = vadd.f32 %v457, %v82
    %v459 = vadd.f32 %v458, %v83
    %v460 = vadd.f32 %v459, %v84
    %v461 = vsel %vm406, %v85, 0.0
    %v462 = vadd.f32 %v460, %v461
    %463 = vadd.xlane.f32.xlu0 %v462
    %v464 = vpop.xlane.xlu0 %463
    %v465 = vadd.f32 %v86, %v87
    %v466 = vadd.f32 %v465, %v88
    %v467 = vadd.f32 %v466, %v89
    %v468 = vadd.f32 %v467, %v90
    %v469 = vadd.f32 %v468, %v91
    %v470 = vsel %vm406, %v92, 0.0
    %v471 = vadd.f32 %v469, %v470
    %472 = vadd.xlane.f32.xlu0 %v471
    %v473 = vpop.xlane.xlu0 %472
    %v474 = vadd.f32 %v93, %v94
    %v475 = vadd.f32 %v474, %v95
    %v476 = vadd.f32 %v475, %v96
    %v477 = vadd.f32 %v476, %v97
    %v478 = vadd.f32 %v477, %v98
    %v479 = vsel %vm406, %v99, 0.0
    %v480 = vadd.f32 %v478, %v479
    %481 = vadd.xlane.f32.xlu0 %v480
    %v482 = vpop.xlane.xlu0 %481
    %v483 = vadd.f32 %v100, %v101
    %v484 = vadd.f32 %v483, %v102
    %v485 = vadd.f32 %v484, %v103
    %v486 = vadd.f32 %v485, %v104
    %v487 = vadd.f32 %v486, %v105
    %v488 = vsel %vm406, %v106, 0.0
    %v489 = vadd.f32 %v487, %v488
    %490 = vadd.xlane.f32.xlu0 %v489
    %v491 = vpop.xlane.xlu0 %490
    %v492 = vadd.f32 %v107, %v108
    %v493 = vadd.f32 %v492, %v109
    %v494 = vadd.f32 %v493, %v110
    %v495 = vadd.f32 %v494, %v111
    %v496 = vadd.f32 %v495, %v112
    %v497 = vsel %vm406, %v113, 0.0
    %v498 = vadd.f32 %v496, %v497
    %499 = vadd.xlane.f32.xlu0 %v498
    %v500 = vpop.xlane.xlu0 %499
    %v501 = vadd.f32 %v114, %v115
    %v502 = vadd.f32 %v501, %v116
    %v503 = vadd.f32 %v502, %v117
    %v504 = vadd.f32 %v503, %v118
    %v505 = vadd.f32 %v504, %v119
    %v506 = vsel %vm406, %v120, 0.0
    %v507 = vadd.f32 %v505, %v506
    %508 = vadd.xlane.f32.xlu0 %v507
    %v509 = vpop.xlane.xlu0 %508
    %v510 = vadd.f32 %v121, %v122
    %v511 = vadd.f32 %v510, %v123
    %v512 = vadd.f32 %v511, %v124
    %v513 = vadd.f32 %v512, %v125
    %v514 = vadd.f32 %v513, %v126
    %v515 = vsel %vm406, %v127, 0.0
    %v516 = vadd.f32 %v514, %v515
    %517 = vadd.xlane.f32.xlu0 %v516
    %v518 = vpop.xlane.xlu0 %517
    %v519 = vadd.f32 %v128, %v129
    %v520 = vadd.f32 %v519, %v130
    %v521 = vadd.f32 %v520, %v131
    %v522 = vadd.f32 %v521, %v132
    %v523 = vadd.f32 %v522, %v133
    %v524 = vsel %vm406, %v134, 0.0
    %v525 = vadd.f32 %v523, %v524
    %526 = vadd.xlane.f32.xlu0 %v525
    %v527 = vpop.xlane.xlu0 %526
    %v528 = vadd.f32 %v135, %v136
    %v529 = vadd.f32 %v528, %v137
    %v530 = vadd.f32 %v529, %v138
    %v531 = vadd.f32 %v530, %v139
    %v532 = vadd.f32 %v531, %v140
    %v533 = vsel %vm406, %v141, 0.0
    %v534 = vadd.f32 %v532, %v533
    %535 = vadd.xlane.f32.xlu0 %v534
    %v536 = vpop.xlane.xlu0 %535
    %v537 = vadd.f32 %v142, %v143
    %v538 = vadd.f32 %v537, %v144
    %v539 = vadd.f32 %v538, %v145
    %v540 = vadd.f32 %v539, %v146
    %v541 = vadd.f32 %v540, %v147
    %v542 = vsel %vm406, %v148, 0.0
    %v543 = vadd.f32 %v541, %v542
    %544 = vadd.xlane.f32.xlu0 %v543
    %v545 = vpop.xlane.xlu0 %544
    %v546 = vadd.f32 %v149, %v150
    %v547 = vadd.f32 %v546, %v151
    %v548 = vadd.f32 %v547, %v152
    %v549 = vadd.f32 %v548, %v153
    %v550 = vadd.f32 %v549, %v154
    %v551 = vsel %vm406, %v155, 0.0
    %v552 = vadd.f32 %v550, %v551
    %553 = vadd.xlane.f32.xlu0 %v552
    %v554 = vpop.xlane.xlu0 %553
    %v555 = vadd.f32 %v156, %v157
    %v556 = vadd.f32 %v555, %v158
    %v557 = vadd.f32 %v556, %v159
    %v558 = vadd.f32 %v557, %v160
    %v559 = vadd.f32 %v558, %v161
    %v560 = vsel %vm406, %v162, 0.0
    %v561 = vadd.f32 %v559, %v560
    %562 = vadd.xlane.f32.xlu0 %v561
    %v563 = vpop.xlane.xlu0 %562
    %v564 = vadd.f32 %v163, %v164
    %v565 = vadd.f32 %v564, %v165
    %v566 = vadd.f32 %v565, %v166
    %v567 = vadd.f32 %v566, %v167
    %v568 = vadd.f32 %v567, %v168
    %v569 = vsel %vm406, %v169, 0.0
    %v570 = vadd.f32 %v568, %v569
    %571 = vadd.xlane.f32.xlu0 %v570
    %v572 = vpop.xlane.xlu0 %571
    %v573 = vadd.f32 %v170, %v171
    %v574 = vadd.f32 %v573, %v172
    %v575 = vadd.f32 %v574, %v173
    %v576 = vadd.f32 %v575, %v174
    %v577 = vadd.f32 %v576, %v175
    %v578 = vsel %vm406, %v176, 0.0
    %v579 = vadd.f32 %v577, %v578
    %580 = vadd.xlane.f32.xlu0 %v579
    %v581 = vpop.xlane.xlu0 %580
    %v582 = vadd.f32 %v177, %v178
    %v583 = vadd.f32 %v582, %v179
    %v584 = vadd.f32 %v583, %v180
    %v585 = vadd.f32 %v584, %v181
    %v586 = vadd.f32 %v585, %v182
    %v587 = vsel %vm406, %v183, 0.0
    %v588 = vadd.f32 %v586, %v587
    %589 = vadd.xlane.f32.xlu0 %v588
    %v590 = vpop.xlane.xlu0 %589
    %v591 = vadd.f32 %v184, %v185
    %v592 = vadd.f32 %v591, %v186
    %v593 = vadd.f32 %v592, %v187
    %v594 = vadd.f32 %v593, %v188
    %v595 = vadd.f32 %v594, %v189
    %v596 = vsel %vm406, %v190, 0.0
    %v597 = vadd.f32 %v595, %v596
    %598 = vadd.xlane.f32.xlu0 %v597
    %v599 = vpop.xlane.xlu0 %598
    %v600 = vadd.f32 %v191, %v192
    %v601 = vadd.f32 %v600, %v193
    %v602 = vadd.f32 %v601, %v194
    %v603 = vadd.f32 %v602, %v195
    %v604 = vadd.f32 %v603, %v196
    %v605 = vsel %vm406, %v197, 0.0
    %v606 = vadd.f32 %v604, %v605
    %607 = vadd.xlane.f32.xlu0 %v606
    %v608 = vpop.xlane.xlu0 %607
    %v609 = vadd.f32 %v198, %v199
    %v610 = vadd.f32 %v609, %v200
    %v611 = vadd.f32 %v610, %v201
    %v612 = vadd.f32 %v611, %v202
    %v613 = vadd.f32 %v612, %v203
    %v614 = vsel %vm406, %v204, 0.0
    %v615 = vadd.f32 %v613, %v614
    %616 = vadd.xlane.f32.xlu0 %v615
    %v617 = vpop.xlane.xlu0 %616
    %v618 = vadd.f32 %v205, %v206
    %v619 = vadd.f32 %v618, %v207
    %v620 = vadd.f32 %v619, %v208
    %v621 = vadd.f32 %v620, %v209
    %v622 = vadd.f32 %v621, %v210
    %v623 = vsel %vm406, %v211, 0.0
    %v624 = vadd.f32 %v622, %v623
    %625 = vadd.xlane.f32.xlu0 %v624
    %v626 = vpop.xlane.xlu0 %625
    %v627 = vadd.f32 %v212, %v213
    %v628 = vadd.f32 %v627, %v214
    %v629 = vadd.f32 %v628, %v215
    %v630 = vadd.f32 %v629, %v216
    %v631 = vadd.f32 %v630, %v217
    %v632 = vsel %vm406, %v218, 0.0
    %v633 = vadd.f32 %v631, %v632
    %634 = vadd.xlane.f32.xlu0 %v633
    %v635 = vpop.xlane.xlu0 %634
    %v636 = vadd.f32 %v219, %v220
    %v637 = vadd.f32 %v636, %v221
    %v638 = vadd.f32 %v637, %v222
    %v639 = vadd.f32 %v638, %v223
    %v640 = vadd.f32 %v639, %v224
    %v641 = vsel %vm406, %v225, 0.0
    %v642 = vadd.f32 %v640, %v641
    %643 = vadd.xlane.f32.xlu0 %v642
    %v644 = vpop.xlane.xlu0 %643
    %v645 = vadd.f32 %v226, %v227
    %v646 = vadd.f32 %v645, %v228
    %v647 = vadd.f32 %v646, %v229
    %v648 = vadd.f32 %v647, %v230
    %v649 = vadd.f32 %v648, %v231
    %v650 = vsel %vm406, %v232, 0.0
    %v651 = vadd.f32 %v649, %v650
    %652 = vadd.xlane.f32.xlu0 %v651
    %v653 = vpop.xlane.xlu0 %652
    %v654 = vadd.f32 %v233, %v234
    %v655 = vadd.f32 %v654, %v235
    %v656 = vadd.f32 %v655, %v236
    %v657 = vadd.f32 %v656, %v237
    %v658 = vadd.f32 %v657, %v238
    %v659 = vsel %vm406, %v239, 0.0
    %v660 = vadd.f32 %v658, %v659
    %661 = vadd.xlane.f32.xlu0 %v660
    %v662 = vpop.xlane.xlu0 %661
    %v663 = vadd.f32 %v240, %v241
    %v664 = vadd.f32 %v663, %v242
    %v665 = vadd.f32 %v664, %v243
    %v666 = vadd.f32 %v665, %v244
    %v667 = vadd.f32 %v666, %v245
    %v668 = vsel %vm406, %v246, 0.0
    %v669 = vadd.f32 %v667, %v668
    %670 = vadd.xlane.f32.xlu0 %v669
    %v671 = vpop.xlane.xlu0 %670
    %v672 = vadd.f32 %v247, %v248
    %v673 = vadd.f32 %v672, %v249
    %v674 = vadd.f32 %v673, %v250
    %v675 = vadd.f32 %v674, %v251
    %v676 = vadd.f32 %v675, %v252
    %v677 = vsel %vm406, %v253, 0.0
    %v678 = vadd.f32 %v676, %v677
    %679 = vadd.xlane.f32.xlu0 %v678
    %v680 = vpop.xlane.xlu0 %679
    %v681 = vadd.f32 %v254, %v255
    %v682 = vadd.f32 %v681, %v256
    %v683 = vadd.f32 %v682, %v257
    %v684 = vadd.f32 %v683, %v258
    %v685 = vadd.f32 %v684, %v259
    %v686 = vsel %vm406, %v260, 0.0
    %v687 = vadd.f32 %v685, %v686
    %688 = vadd.xlane.f32.xlu0 %v687
    %v689 = vpop.xlane.xlu0 %688
    %v690 = vadd.f32 %v261, %v262
    %v691 = vadd.f32 %v690, %v263
    %v692 = vadd.f32 %v691, %v264
    %v693 = vadd.f32 %v692, %v265
    %v694 = vadd.f32 %v693, %v266
    %v695 = vsel %vm406, %v267, 0.0
    %v696 = vadd.f32 %v694, %v695
    %697 = vadd.xlane.f32.xlu0 %v696
    %v698 = vpop.xlane.xlu0 %697
    %v699 = vadd.f32 %v268, %v269
    %v700 = vadd.f32 %v699, %v270
    %v701 = vadd.f32 %v700, %v271
    %v702 = vadd.f32 %v701, %v272
    %v703 = vadd.f32 %v702, %v273
    %v704 = vsel %vm406, %v274, 0.0
    %v705 = vadd.f32 %v703, %v704
    %706 = vadd.xlane.f32.xlu0 %v705
    %v707 = vpop.xlane.xlu0 %706
    %v708 = vadd.f32 %v275, %v276
    %v709 = vadd.f32 %v708, %v277
    %v710 = vadd.f32 %v709, %v278
    %v711 = vadd.f32 %v710, %v279
    %v712 = vadd.f32 %v711, %v280
    %v713 = vsel %vm406, %v281, 0.0
    %v714 = vadd.f32 %v712, %v713
    %715 = vadd.xlane.f32.xlu0 %v714
    %v716 = vpop.xlane.xlu0 %715
    %v717 = vadd.f32 %v282, %v283
    %v718 = vadd.f32 %v717, %v284
    %v719 = vadd.f32 %v718, %v285
    %v720 = vadd.f32 %v719, %v286
    %v721 = vadd.f32 %v720, %v287
    %v722 = vsel %vm406, %v288, 0.0
    %v723 = vadd.f32 %v721, %v722
    %724 = vadd.xlane.f32.xlu0 %v723
    %v725 = vpop.xlane.xlu0 %724
    %v726 = vadd.f32 %v289, %v290
    %v727 = vadd.f32 %v726, %v291
    %v728 = vadd.f32 %v727, %v292
    %v729 = vadd.f32 %v728, %v293
    %v730 = vadd.f32 %v729, %v294
    %v731 = vsel %vm406, %v295, 0.0
    %v732 = vadd.f32 %v730, %v731
    %733 = vadd.xlane.f32.xlu0 %v732
    %v734 = vpop.xlane.xlu0 %733
    %v735 = vadd.f32 %v296, %v297
    %v736 = vadd.f32 %v735, %v298
    %v737 = vadd.f32 %v736, %v299
    %v738 = vadd.f32 %v737, %v300
    %v739 = vadd.f32 %v738, %v301
    %v740 = vsel %vm406, %v302, 0.0
    %v741 = vadd.f32 %v739, %v740
    %742 = vadd.xlane.f32.xlu0 %v741
    %v743 = vpop.xlane.xlu0 %742
    %v744 = vadd.f32 %v303, %v304
    %v745 = vadd.f32 %v744, %v305
    %v746 = vadd.f32 %v745, %v306
    %v747 = vadd.f32 %v746, %v307
    %v748 = vadd.f32 %v747, %v308
    %v749 = vsel %vm406, %v309, 0.0
    %v750 = vadd.f32 %v748, %v749
    %751 = vadd.xlane.f32.xlu0 %v750
    %v752 = vpop.xlane.xlu0 %751
    %v753 = vadd.f32 %v310, %v311
    %v754 = vadd.f32 %v753, %v312
    %v755 = vadd.f32 %v754, %v313
    %v756 = vadd.f32 %v755, %v314
    %v757 = vadd.f32 %v756, %v315
    %v758 = vsel %vm406, %v316, 0.0
    %v759 = vadd.f32 %v757, %v758
    %760 = vadd.xlane.f32.xlu0 %v759
    %v761 = vpop.xlane.xlu0 %760
    %v762 = vadd.f32 %v317, %v318
    %v763 = vadd.f32 %v762, %v319
    %v764 = vadd.f32 %v763, %v320
    %v765 = vadd.f32 %v764, %v321
    %v766 = vadd.f32 %v765, %v322
    %v767 = vsel %vm406, %v323, 0.0
    %v768 = vadd.f32 %v766, %v767
    %769 = vadd.xlane.f32.xlu0 %v768
    %v770 = vpop.xlane.xlu0 %769
    %v771 = vadd.f32 %v324, %v325
    %v772 = vadd.f32 %v771, %v326
    %v773 = vadd.f32 %v772, %v327
    %v774 = vadd.f32 %v773, %v328
    %v775 = vadd.f32 %v774, %v329
    %v776 = vsel %vm406, %v330, 0.0
    %v777 = vadd.f32 %v775, %v776
    %778 = vadd.xlane.f32.xlu0 %v777
    %v779 = vpop.xlane.xlu0 %778
    %v780 = vadd.f32 %v331, %v332
    %v781 = vadd.f32 %v780, %v333
    %v782 = vadd.f32 %v781, %v334
    %v783 = vadd.f32 %v782, %v335
    %v784 = vadd.f32 %v783, %v336
    %v785 = vsel %vm406, %v337, 0.0
    %v786 = vadd.f32 %v784, %v785
    %787 = vadd.xlane.f32.xlu0 %v786
    %v788 = vpop.xlane.xlu0 %787
    %v789 = vadd.f32 %v338, %v339
    %v790 = vadd.f32 %v789, %v340
    %v791 = vadd.f32 %v790, %v341
    %v792 = vadd.f32 %v791, %v342
    %v793 = vadd.f32 %v792, %v343
    %v794 = vsel %vm406, %v344, 0.0
    %v795 = vadd.f32 %v793, %v794
    %796 = vadd.xlane.f32.xlu0 %v795
    %v797 = vpop.xlane.xlu0 %796
    %v798 = vadd.f32 %v345, %v346
    %v799 = vadd.f32 %v798, %v347
    %v800 = vadd.f32 %v799, %v348
    %v801 = vadd.f32 %v800, %v349
    %v802 = vadd.f32 %v801, %v350
    %v803 = vsel %vm406, %v351, 0.0
    %v804 = vadd.f32 %v802, %v803
    %805 = vadd.xlane.f32.xlu0 %v804
    %v806 = vpop.xlane.xlu0 %805
    %v807 = vadd.f32 %v352, %v353
    %v808 = vadd.f32 %v807, %v354
    %v809 = vadd.f32 %v808, %v355
    %v810 = vadd.f32 %v809, %v356
    %v811 = vadd.f32 %v810, %v357
    %v812 = vsel %vm406, %v358, 0.0
    %v813 = vadd.f32 %v811, %v812
    %814 = vadd.xlane.f32.xlu0 %v813
    %v815 = vpop.xlane.xlu0 %814
    %v816 = vadd.f32 %v359, %v360
    %v817 = vadd.f32 %v816, %v361
    %v818 = vadd.f32 %v817, %v362
    %v819 = vadd.f32 %v818, %v363
    %v820 = vadd.f32 %v819, %v364
    %v821 = vsel %vm406, %v365, 0.0
    %v822 = vadd.f32 %v820, %v821
    %823 = vadd.xlane.f32.xlu0 %v822
    %v824 = vpop.xlane.xlu0 %823
    %v825 = vadd.f32 %v366, %v367
    %v826 = vadd.f32 %v825, %v368
    %v827 = vadd.f32 %v826, %v369
    %v828 = vadd.f32 %v827, %v370
    %v829 = vadd.f32 %v828, %v371
    %v830 = vsel %vm406, %v372, 0.0
    %v831 = vadd.f32 %v829, %v830
    %832 = vadd.xlane.f32.xlu0 %v831
    %v833 = vpop.xlane.xlu0 %832
    %v834 = vadd.f32 %v373, %v374
    %v835 = vadd.f32 %v834, %v375
    %v836 = vadd.f32 %v835, %v376
    %v837 = vadd.f32 %v836, %v377
    %v838 = vadd.f32 %v837, %v378
    %v839 = vsel %vm406, %v379, 0.0
    %v840 = vadd.f32 %v838, %v839
    %841 = vadd.xlane.f32.xlu0 %v840
    %v842 = vpop.xlane.xlu0 %841
    %v843 = vadd.f32 %v380, %v381
    %v844 = vadd.f32 %v843, %v382
    %v845 = vadd.f32 %v844, %v383
    %v846 = vadd.f32 %v845, %v384
    %v847 = vadd.f32 %v846, %v385
    %v848 = vsel %vm406, %v386, 0.0
    %v849 = vadd.f32 %v847, %v848
    %850 = vadd.xlane.f32.xlu0 %v849
    %v851 = vpop.xlane.xlu0 %850
    %v852 = vadd.f32 %v387, %v388
    %v853 = vadd.f32 %v852, %v389
    %v854 = vadd.f32 %v853, %v390
    %v855 = vadd.f32 %v854, %v391
    %v856 = vadd.f32 %v855, %v392
    %v857 = vsel %vm406, %v393, 0.0
    %v858 = vadd.f32 %v856, %v857
    %859 = vadd.xlane.f32.xlu0 %v858
    %v860 = vpop.xlane.xlu0 %859
    %v861 = vadd.f32 %v394, %v395
    %v862 = vadd.f32 %v861, %v396
    %v863 = vadd.f32 %v862, %v397
    %v864 = vadd.f32 %v863, %v398
    %v865 = vadd.f32 %v864, %v399
    %v866 = vsel %vm406, %v400, 0.0
    %v867 = vadd.f32 %v865, %v866
    %868 = vadd.xlane.f32.xlu0 %v867
    %v869 = vpop.xlane.xlu0 %868
    %v870 = vadd.f32 %v410, 0.0
    %v871 = vadd.f32 %v419, 0.0
    %v872 = vadd.f32 %v428, 0.0
    %v873 = vadd.f32 %v437, 0.0
    %v874 = vadd.f32 %v446, 0.0
    %v875 = vadd.f32 %v455, 0.0
    %v876 = vadd.f32 %v464, 0.0
    %v877 = vadd.f32 %v473, 0.0
    %v878 = vadd.f32 %v482, 0.0
    %v879 = vadd.f32 %v491, 0.0
    %v880 = vadd.f32 %v500, 0.0
    %v881 = vadd.f32 %v509, 0.0
    %v882 = vadd.f32 %v518, 0.0
    %v883 = vadd.f32 %v527, 0.0
    %v884 = vadd.f32 %v536, 0.0
    %v885 = vadd.f32 %v545, 0.0
    %v886 = vadd.f32 %v554, 0.0
    %v887 = vadd.f32 %v563, 0.0
    %v888 = vadd.f32 %v572, 0.0
    %v889 = vadd.f32 %v581, 0.0
    %v890 = vadd.f32 %v590, 0.0
    %v891 = vadd.f32 %v599, 0.0
    %v892 = vadd.f32 %v608, 0.0
    %v893 = vadd.f32 %v617, 0.0
    %v894 = vadd.f32 %v626, 0.0
    %v895 = vadd.f32 %v635, 0.0
    %v896 = vadd.f32 %v644, 0.0
    %v897 = vadd.f32 %v653, 0.0
    %v898 = vadd.f32 %v662, 0.0
    %v899 = vadd.f32 %v671, 0.0
    %v900 = vadd.f32 %v680, 0.0
    %v901 = vadd.f32 %v689, 0.0
    %v902 = vadd.f32 %v698, 0.0
    %v903 = vadd.f32 %v707, 0.0
    %v904 = vadd.f32 %v716, 0.0
    %v905 = vadd.f32 %v725, 0.0
    %v906 = vadd.f32 %v734, 0.0
    %v907 = vadd.f32 %v743, 0.0
    %v908 = vadd.f32 %v752, 0.0
    %v909 = vadd.f32 %v761, 0.0
    %v910 = vadd.f32 %v770, 0.0
    %v911 = vadd.f32 %v779, 0.0
    %v912 = vadd.f32 %v788, 0.0
    %v913 = vadd.f32 %v797, 0.0
    %v914 = vadd.f32 %v806, 0.0
    %v915 = vadd.f32 %v815, 0.0
    %v916 = vadd.f32 %v824, 0.0
    %v917 = vadd.f32 %v833, 0.0
    %v918 = vadd.f32 %v842, 0.0
    %v919 = vadd.f32 %v851, 0.0
    %v920 = vadd.f32 %v860, 0.0
    %v921 = vadd.f32 %v869, 0.0
    %v922 = vmul.f32 %v37, %v37
    %v923 = vmul.f32 %v38, %v38
    %v924 = vmul.f32 %v39, %v39
    %v925 = vmul.f32 %v40, %v40
    %v926 = vmul.f32 %v41, %v41
    %v927 = vmul.f32 %v42, %v42
    %v928 = vmul.f32 %v43, %v43
    %v929 = vmul.f32 %v44, %v44
    %v930 = vmul.f32 %v45, %v45
    %v931 = vmul.f32 %v46, %v46
    %v932 = vmul.f32 %v47, %v47
    %v933 = vmul.f32 %v48, %v48
    %v934 = vmul.f32 %v49, %v49
    %v935 = vmul.f32 %v50, %v50
    %v936 = vmul.f32 %v51, %v51
    %v937 = vmul.f32 %v52, %v52
    %v938 = vmul.f32 %v53, %v53
    %v939 = vmul.f32 %v54, %v54
    %v940 = vmul.f32 %v55, %v55
    %v941 = vmul.f32 %v56, %v56
    %v942 = vmul.f32 %v57, %v57
    %v943 = vmul.f32 %v58, %v58
    %v944 = vmul.f32 %v59, %v59
    %v945 = vmul.f32 %v60, %v60
    %v946 = vmul.f32 %v61, %v61
    %v947 = vmul.f32 %v62, %v62
    %v948 = vmul.f32 %v63, %v63
    %v949 = vmul.f32 %v64, %v64
    %v950 = vmul.f32 %v65, %v65
    %v951 = vmul.f32 %v66, %v66
    %v952 = vmul.f32 %v67, %v67
    %v953 = vmul.f32 %v68, %v68
    %v954 = vmul.f32 %v69, %v69
    %v955 = vmul.f32 %v70, %v70
    %v956 = vmul.f32 %v71, %v71
    %v957 = vmul.f32 %v72, %v72
    %v958 = vmul.f32 %v73, %v73
    %v959 = vmul.f32 %v74, %v74
    %v960 = vmul.f32 %v75, %v75
    %v961 = vmul.f32 %v76, %v76
    %v962 = vmul.f32 %v77, %v77
    %v963 = vmul.f32 %v78, %v78
    %v964 = vmul.f32 %v79, %v79
    %v965 = vmul.f32 %v80, %v80
    %v966 = vmul.f32 %v81, %v81
    %v967 = vmul.f32 %v82, %v82
    %v968 = vmul.f32 %v83, %v83
    %v969 = vmul.f32 %v84, %v84
    %v970 = vmul.f32 %v85, %v85
    %v971 = vmul.f32 %v86, %v86
    %v972 = vmul.f32 %v87, %v87
    %v973 = vmul.f32 %v88, %v88
    %v974 = vmul.f32 %v89, %v89
    %v975 = vmul.f32 %v90, %v90
    %v976 = vmul.f32 %v91, %v91
    %v977 = vmul.f32 %v92, %v92
    %v978 = vmul.f32 %v93, %v93
    %v979 = vmul.f32 %v94, %v94
    %v980 = vmul.f32 %v95, %v95
    %v981 = vmul.f32 %v96, %v96
    %v982 = vmul.f32 %v97, %v97
    %v983 = vmul.f32 %v98, %v98
    %v984 = vmul.f32 %v99, %v99
    %v985 = vmul.f32 %v100, %v100
    %v986 = vmul.f32 %v101, %v101
    %v987 = vmul.f32 %v102, %v102
    %v988 = vmul.f32 %v103, %v103
    %v989 = vmul.f32 %v104, %v104
    %v990 = vmul.f32 %v105, %v105
    %v991 = vmul.f32 %v106, %v106
    %v992 = vmul.f32 %v107, %v107
    %v993 = vmul.f32 %v108, %v108
    %v994 = vmul.f32 %v109, %v109
    %v995 = vmul.f32 %v110, %v110
    %v996 = vmul.f32 %v111, %v111
    %v997 = vmul.f32 %v112, %v112
    %v998 = vmul.f32 %v113, %v113
    %v999 = vmul.f32 %v114, %v114
    %v1000 = vmul.f32 %v115, %v115
    %v1001 = vmul.f32 %v116, %v116
    %v1002 = vmul.f32 %v117, %v117
    %v1003 = vmul.f32 %v118, %v118
    %v1004 = vmul.f32 %v119, %v119
    %v1005 = vmul.f32 %v120, %v120
    %v1006 = vmul.f32 %v121, %v121
    %v1007 = vmul.f32 %v122, %v122
    %v1008 = vmul.f32 %v123, %v123
    %v1009 = vmul.f32 %v124, %v124
    %v1010 = vmul.f32 %v125, %v125
    %v1011 = vmul.f32 %v126, %v126
    %v1012 = vmul.f32 %v127, %v127
    %v1013 = vmul.f32 %v128, %v128
    %v1014 = vmul.f32 %v129, %v129
    %v1015 = vmul.f32 %v130, %v130
    %v1016 = vmul.f32 %v131, %v131
    %v1017 = vmul.f32 %v132, %v132
    %v1018 = vmul.f32 %v133, %v133
    %v1019 = vmul.f32 %v134, %v134
    %v1020 = vmul.f32 %v135, %v135
    %v1021 = vmul.f32 %v136, %v136
    %v1022 = vmul.f32 %v137, %v137
    %v1023 = vmul.f32 %v138, %v138
    %v1024 = vmul.f32 %v139, %v139
    %v1025 = vmul.f32 %v140, %v140
    %v1026 = vmul.f32 %v141, %v141
    %v1027 = vmul.f32 %v142, %v142
    %v1028 = vmul.f32 %v143, %v143
    %v1029 = vmul.f32 %v144, %v144
    %v1030 = vmul.f32 %v145, %v145
    %v1031 = vmul.f32 %v146, %v146
    %v1032 = vmul.f32 %v147, %v147
    %v1033 = vmul.f32 %v148, %v148
    %v1034 = vmul.f32 %v149, %v149
    %v1035 = vmul.f32 %v150, %v150
    %v1036 = vmul.f32 %v151, %v151
    %v1037 = vmul.f32 %v152, %v152
    %v1038 = vmul.f32 %v153, %v153
    %v1039 = vmul.f32 %v154, %v154
    %v1040 = vmul.f32 %v155, %v155
    %v1041 = vmul.f32 %v156, %v156
    %v1042 = vmul.f32 %v157, %v157
    %v1043 = vmul.f32 %v158, %v158
    %v1044 = vmul.f32 %v159, %v159
    %v1045 = vmul.f32 %v160, %v160
    %v1046 = vmul.f32 %v161, %v161
    %v1047 = vmul.f32 %v162, %v162
    %v1048 = vmul.f32 %v163, %v163
    %v1049 = vmul.f32 %v164, %v164
    %v1050 = vmul.f32 %v165, %v165
    %v1051 = vmul.f32 %v166, %v166
    %v1052 = vmul.f32 %v167, %v167
    %v1053 = vmul.f32 %v168, %v168
    %v1054 = vmul.f32 %v169, %v169
    %v1055 = vmul.f32 %v170, %v170
    %v1056 = vmul.f32 %v171, %v171
    %v1057 = vmul.f32 %v172, %v172
    %v1058 = vmul.f32 %v173, %v173
    %v1059 = vmul.f32 %v174, %v174
    %v1060 = vmul.f32 %v175, %v175
    %v1061 = vmul.f32 %v176, %v176
    %v1062 = vmul.f32 %v177, %v177
    %v1063 = vmul.f32 %v178, %v178
    %v1064 = vmul.f32 %v179, %v179
    %v1065 = vmul.f32 %v180, %v180
    %v1066 = vmul.f32 %v181, %v181
    %v1067 = vmul.f32 %v182, %v182
    %v1068 = vmul.f32 %v183, %v183
    %v1069 = vmul.f32 %v184, %v184
    %v1070 = vmul.f32 %v185, %v185
    %v1071 = vmul.f32 %v186, %v186
    %v1072 = vmul.f32 %v187, %v187
    %v1073 = vmul.f32 %v188, %v188
    %v1074 = vmul.f32 %v189, %v189
    %v1075 = vmul.f32 %v190, %v190
    %v1076 = vmul.f32 %v191, %v191
    %v1077 = vmul.f32 %v192, %v192
    %v1078 = vmul.f32 %v193, %v193
    %v1079 = vmul.f32 %v194, %v194
    %v1080 = vmul.f32 %v195, %v195
    %v1081 = vmul.f32 %v196, %v196
    %v1082 = vmul.f32 %v197, %v197
    %v1083 = vmul.f32 %v198, %v198
    %v1084 = vmul.f32 %v199, %v199
    %v1085 = vmul.f32 %v200, %v200
    %v1086 = vmul.f32 %v201, %v201
    %v1087 = vmul.f32 %v202, %v202
    %v1088 = vmul.f32 %v203, %v203
    %v1089 = vmul.f32 %v204, %v204
    %v1090 = vmul.f32 %v205, %v205
    %v1091 = vmul.f32 %v206, %v206
    %v1092 = vmul.f32 %v207, %v207
    %v1093 = vmul.f32 %v208, %v208
    %v1094 = vmul.f32 %v209, %v209
    %v1095 = vmul.f32 %v210, %v210
    %v1096 = vmul.f32 %v211, %v211
    %v1097 = vmul.f32 %v212, %v212
    %v1098 = vmul.f32 %v213, %v213
    %v1099 = vmul.f32 %v214, %v214
    %v1100 = vmul.f32 %v215, %v215
    %v1101 = vmul.f32 %v216, %v216
    %v1102 = vmul.f32 %v217, %v217
    %v1103 = vmul.f32 %v218, %v218
    %v1104 = vmul.f32 %v219, %v219
    %v1105 = vmul.f32 %v220, %v220
    %v1106 = vmul.f32 %v221, %v221
    %v1107 = vmul.f32 %v222, %v222
    %v1108 = vmul.f32 %v223, %v223
    %v1109 = vmul.f32 %v224, %v224
    %v1110 = vmul.f32 %v225, %v225
    %v1111 = vmul.f32 %v226, %v226
    %v1112 = vmul.f32 %v227, %v227
    %v1113 = vmul.f32 %v228, %v228
    %v1114 = vmul.f32 %v229, %v229
    %v1115 = vmul.f32 %v230, %v230
    %v1116 = vmul.f32 %v231, %v231
    %v1117 = vmul.f32 %v232, %v232
    %v1118 = vmul.f32 %v233, %v233
    %v1119 = vmul.f32 %v234, %v234
    %v1120 = vmul.f32 %v235, %v235
    %v1121 = vmul.f32 %v236, %v236
    %v1122 = vmul.f32 %v237, %v237
    %v1123 = vmul.f32 %v238, %v238
    %v1124 = vmul.f32 %v239, %v239
    %v1125 = vmul.f32 %v240, %v240
    %v1126 = vmul.f32 %v241, %v241
    %v1127 = vmul.f32 %v242, %v242
    %v1128 = vmul.f32 %v243, %v243
    %v1129 = vmul.f32 %v244, %v244
    %v1130 = vmul.f32 %v245, %v245
    %v1131 = vmul.f32 %v246, %v246
    %v1132 = vmul.f32 %v247, %v247
    %v1133 = vmul.f32 %v248, %v248
    %v1134 = vmul.f32 %v249, %v249
    %v1135 = vmul.f32 %v250, %v250
    %v1136 = vmul.f32 %v251, %v251
    %v1137 = vmul.f32 %v252, %v252
    %v1138 = vmul.f32 %v253, %v253
    %v1139 = vmul.f32 %v254, %v254
    %v1140 = vmul.f32 %v255, %v255
    %v1141 = vmul.f32 %v256, %v256
    %v1142 = vmul.f32 %v257, %v257
    %v1143 = vmul.f32 %v258, %v258
    %v1144 = vmul.f32 %v259, %v259
    %v1145 = vmul.f32 %v260, %v260
    %v1146 = vmul.f32 %v261, %v261
    %v1147 = vmul.f32 %v262, %v262
    %v1148 = vmul.f32 %v263, %v263
    %v1149 = vmul.f32 %v264, %v264
    %v1150 = vmul.f32 %v265, %v265
    %v1151 = vmul.f32 %v266, %v266
    %v1152 = vmul.f32 %v267, %v267
    %v1153 = vmul.f32 %v268, %v268
    %v1154 = vmul.f32 %v269, %v269
    %v1155 = vmul.f32 %v270, %v270
    %v1156 = vmul.f32 %v271, %v271
    %v1157 = vmul.f32 %v272, %v272
    %v1158 = vmul.f32 %v273, %v273
    %v1159 = vmul.f32 %v274, %v274
    %v1160 = vmul.f32 %v275, %v275
    %v1161 = vmul.f32 %v276, %v276
    %v1162 = vmul.f32 %v277, %v277
    %v1163 = vmul.f32 %v278, %v278
    %v1164 = vmul.f32 %v279, %v279
    %v1165 = vmul.f32 %v280, %v280
    %v1166 = vmul.f32 %v281, %v281
    %v1167 = vmul.f32 %v282, %v282
    %v1168 = vmul.f32 %v283, %v283
    %v1169 = vmul.f32 %v284, %v284
    %v1170 = vmul.f32 %v285, %v285
    %v1171 = vmul.f32 %v286, %v286
    %v1172 = vmul.f32 %v287, %v287
    %v1173 = vmul.f32 %v288, %v288
    %v1174 = vmul.f32 %v289, %v289
    %v1175 = vmul.f32 %v290, %v290
    %v1176 = vmul.f32 %v291, %v291
    %v1177 = vmul.f32 %v292, %v292
    %v1178 = vmul.f32 %v293, %v293
    %v1179 = vmul.f32 %v294, %v294
    %v1180 = vmul.f32 %v295, %v295
    %v1181 = vmul.f32 %v296, %v296
    %v1182 = vmul.f32 %v297, %v297
    %v1183 = vmul.f32 %v298, %v298
    %v1184 = vmul.f32 %v299, %v299
    %v1185 = vmul.f32 %v300, %v300
    %v1186 = vmul.f32 %v301, %v301
    %v1187 = vmul.f32 %v302, %v302
    %v1188 = vmul.f32 %v303, %v303
    %v1189 = vmul.f32 %v304, %v304
    %v1190 = vmul.f32 %v305, %v305
    %v1191 = vmul.f32 %v306, %v306
    %v1192 = vmul.f32 %v307, %v307
    %v1193 = vmul.f32 %v308, %v308
    %v1194 = vmul.f32 %v309, %v309
    %v1195 = vmul.f32 %v310, %v310
    %v1196 = vmul.f32 %v311, %v311
    %v1197 = vmul.f32 %v312, %v312
    %v1198 = vmul.f32 %v313, %v313
    %v1199 = vmul.f32 %v314, %v314
    %v1200 = vmul.f32 %v315, %v315
    %v1201 = vmul.f32 %v316, %v316
    %v1202 = vmul.f32 %v317, %v317
    %v1203 = vmul.f32 %v318, %v318
    %v1204 = vmul.f32 %v319, %v319
    %v1205 = vmul.f32 %v320, %v320
    %v1206 = vmul.f32 %v321, %v321
    %v1207 = vmul.f32 %v322, %v322
    %v1208 = vmul.f32 %v323, %v323
    %v1209 = vmul.f32 %v324, %v324
    %v1210 = vmul.f32 %v325, %v325
    %v1211 = vmul.f32 %v326, %v326
    %v1212 = vmul.f32 %v327, %v327
    %v1213 = vmul.f32 %v328, %v328
    %v1214 = vmul.f32 %v329, %v329
    %v1215 = vmul.f32 %v330, %v330
    %v1216 = vmul.f32 %v331, %v331
    %v1217 = vmul.f32 %v332, %v332
    %v1218 = vmul.f32 %v333, %v333
    %v1219 = vmul.f32 %v334, %v334
    %v1220 = vmul.f32 %v335, %v335
    %v1221 = vmul.f32 %v336, %v336
    %v1222 = vmul.f32 %v337, %v337
    %v1223 = vmul.f32 %v338, %v338
    %v1224 = vmul.f32 %v339, %v339
    %v1225 = vmul.f32 %v340, %v340
    %v1226 = vmul.f32 %v341, %v341
    %v1227 = vmul.f32 %v342, %v342
    %v1228 = vmul.f32 %v343, %v343
    %v1229 = vmul.f32 %v344, %v344
    %v1230 = vmul.f32 %v345, %v345
    %v1231 = vmul.f32 %v346, %v346
    %v1232 = vmul.f32 %v347, %v347
    %v1233 = vmul.f32 %v348, %v348
    %v1234 = vmul.f32 %v349, %v349
    %v1235 = vmul.f32 %v350, %v350
    %v1236 = vmul.f32 %v351, %v351
    %v1237 = vmul.f32 %v352, %v352
    %v1238 = vmul.f32 %v353, %v353
    %v1239 = vmul.f32 %v354, %v354
    %v1240 = vmul.f32 %v355, %v355
    %v1241 = vmul.f32 %v356, %v356
    %v1242 = vmul.f32 %v357, %v357
    %v1243 = vmul.f32 %v358, %v358
    %v1244 = vmul.f32 %v359, %v359
    %v1245 = vmul.f32 %v360, %v360
    %v1246 = vmul.f32 %v361, %v361
    %v1247 = vmul.f32 %v362, %v362
    %v1248 = vmul.f32 %v363, %v363
    %v1249 = vmul.f32 %v364, %v364
    %v1250 = vmul.f32 %v365, %v365
    %v1251 = vmul.f32 %v366, %v366
    %v1252 = vmul.f32 %v367, %v367
    %v1253 = vmul.f32 %v368, %v368
    %v1254 = vmul.f32 %v369, %v369
    %v1255 = vmul.f32 %v370, %v370
    %v1256 = vmul.f32 %v371, %v371
    %v1257 = vmul.f32 %v372, %v372
    %v1258 = vmul.f32 %v373, %v373
    %v1259 = vmul.f32 %v374, %v374
    %v1260 = vmul.f32 %v375, %v375
    %v1261 = vmul.f32 %v376, %v376
    %v1262 = vmul.f32 %v377, %v377
    %v1263 = vmul.f32 %v378, %v378
    %v1264 = vmul.f32 %v379, %v379
    %v1265 = vmul.f32 %v380, %v380
    %v1266 = vmul.f32 %v381, %v381
    %v1267 = vmul.f32 %v382, %v382
    %v1268 = vmul.f32 %v383, %v383
    %v1269 = vmul.f32 %v384, %v384
    %v1270 = vmul.f32 %v385, %v385
    %v1271 = vmul.f32 %v386, %v386
    %v1272 = vmul.f32 %v387, %v387
    %v1273 = vmul.f32 %v388, %v388
    %v1274 = vmul.f32 %v389, %v389
    %v1275 = vmul.f32 %v390, %v390
    %v1276 = vmul.f32 %v391, %v391
    %v1277 = vmul.f32 %v392, %v392
    %v1278 = vmul.f32 %v393, %v393
    %v1279 = vmul.f32 %v394, %v394
    %v1280 = vmul.f32 %v395, %v395
    %v1281 = vmul.f32 %v396, %v396
    %v1282 = vmul.f32 %v397, %v397
    %v1283 = vmul.f32 %v398, %v398
    %v1284 = vmul.f32 %v399, %v399
    %v1285 = vmul.f32 %v400, %v400
    %v1286 = vadd.f32 %v922, %v923
    %v1287 = vadd.f32 %v1286, %v924
    %v1288 = vadd.f32 %v1287, %v925
    %v1289 = vadd.f32 %v1288, %v926
    %v1290 = vadd.f32 %v1289, %v927
    %v1291 = vsel %vm406, %v928, 0.0
    %v1292 = vadd.f32 %v1290, %v1291
    %1293 = vadd.xlane.f32.xlu0 %v1292
    %v1294 = vpop.xlane.xlu0 %1293
    %v1295 = vadd.f32 %v929, %v930
    %v1296 = vadd.f32 %v1295, %v931
    %v1297 = vadd.f32 %v1296, %v932
    %v1298 = vadd.f32 %v1297, %v933
    %v1299 = vadd.f32 %v1298, %v934
    %v1300 = vsel %vm406, %v935, 0.0
    %v1301 = vadd.f32 %v1299, %v1300
    %1302 = vadd.xlane.f32.xlu0 %v1301
    %v1303 = vpop.xlane.xlu0 %1302
    %v1304 = vadd.f32 %v936, %v937
    %v1305 = vadd.f32 %v1304, %v938
    %v1306 = vadd.f32 %v1305, %v939
    %v1307 = vadd.f32 %v1306, %v940
    %v1308 = vadd.f32 %v1307, %v941
    %v1309 = vsel %vm406, %v942, 0.0
    %v1310 = vadd.f32 %v1308, %v1309
    %1311 = vadd.xlane.f32.xlu0 %v1310
    %v1312 = vpop.xlane.xlu0 %1311
    %v1313 = vadd.f32 %v943, %v944
    %v1314 = vadd.f32 %v1313, %v945
    %v1315 = vadd.f32 %v1314, %v946
    %v1316 = vadd.f32 %v1315, %v947
    %v1317 = vadd.f32 %v1316, %v948
    %v1318 = vsel %vm406, %v949, 0.0
    %v1319 = vadd.f32 %v1317, %v1318
    %1320 = vadd.xlane.f32.xlu0 %v1319
    %v1321 = vpop.xlane.xlu0 %1320
    %v1322 = vadd.f32 %v950, %v951
    %v1323 = vadd.f32 %v1322, %v952
    %v1324 = vadd.f32 %v1323, %v953
    %v1325 = vadd.f32 %v1324, %v954
    %v1326 = vadd.f32 %v1325, %v955
    %v1327 = vsel %vm406, %v956, 0.0
    %v1328 = vadd.f32 %v1326, %v1327
    %1329 = vadd.xlane.f32.xlu0 %v1328
    %v1330 = vpop.xlane.xlu0 %1329
    %v1331 = vadd.f32 %v957, %v958
    %v1332 = vadd.f32 %v1331, %v959
    %v1333 = vadd.f32 %v1332, %v960
    %v1334 = vadd.f32 %v1333, %v961
    %v1335 = vadd.f32 %v1334, %v962
    %v1336 = vsel %vm406, %v963, 0.0
    %v1337 = vadd.f32 %v1335, %v1336
    %1338 = vadd.xlane.f32.xlu0 %v1337
    %v1339 = vpop.xlane.xlu0 %1338
    %v1340 = vadd.f32 %v964, %v965
    %v1341 = vadd.f32 %v1340, %v966
    %v1342 = vadd.f32 %v1341, %v967
    %v1343 = vadd.f32 %v1342, %v968
    %v1344 = vadd.f32 %v1343, %v969
    %v1345 = vsel %vm406, %v970, 0.0
    %v1346 = vadd.f32 %v1344, %v1345
    %1347 = vadd.xlane.f32.xlu0 %v1346
    %v1348 = vpop.xlane.xlu0 %1347
    %v1349 = vadd.f32 %v971, %v972
    %v1350 = vadd.f32 %v1349, %v973
    %v1351 = vadd.f32 %v1350, %v974
    %v1352 = vadd.f32 %v1351, %v975
    %v1353 = vadd.f32 %v1352, %v976
    %v1354 = vsel %vm406, %v977, 0.0
    %v1355 = vadd.f32 %v1353, %v1354
    %1356 = vadd.xlane.f32.xlu0 %v1355
    %v1357 = vpop.xlane.xlu0 %1356
    %v1358 = vadd.f32 %v978, %v979
    %v1359 = vadd.f32 %v1358, %v980
    %v1360 = vadd.f32 %v1359, %v981
    %v1361 = vadd.f32 %v1360, %v982
    %v1362 = vadd.f32 %v1361, %v983
    %v1363 = vsel %vm406, %v984, 0.0
    %v1364 = vadd.f32 %v1362, %v1363
    %1365 = vadd.xlane.f32.xlu0 %v1364
    %v1366 = vpop.xlane.xlu0 %1365
    %v1367 = vadd.f32 %v985, %v986
    %v1368 = vadd.f32 %v1367, %v987
    %v1369 = vadd.f32 %v1368, %v988
    %v1370 = vadd.f32 %v1369, %v989
    %v1371 = vadd.f32 %v1370, %v990
    %v1372 = vsel %vm406, %v991, 0.0
    %v1373 = vadd.f32 %v1371, %v1372
    %1374 = vadd.xlane.f32.xlu0 %v1373
    %v1375 = vpop.xlane.xlu0 %1374
    %v1376 = vadd.f32 %v992, %v993
    %v1377 = vadd.f32 %v1376, %v994
    %v1378 = vadd.f32 %v1377, %v995
    %v1379 = vadd.f32 %v1378, %v996
    %v1380 = vadd.f32 %v1379, %v997
    %v1381 = vsel %vm406, %v998, 0.0
    %v1382 = vadd.f32 %v1380, %v1381
    %1383 = vadd.xlane.f32.xlu0 %v1382
    %v1384 = vpop.xlane.xlu0 %1383
    %v1385 = vadd.f32 %v999, %v1000
    %v1386 = vadd.f32 %v1385, %v1001
    %v1387 = vadd.f32 %v1386, %v1002
    %v1388 = vadd.f32 %v1387, %v1003
    %v1389 = vadd.f32 %v1388, %v1004
    %v1390 = vsel %vm406, %v1005, 0.0
    %v1391 = vadd.f32 %v1389, %v1390
    %1392 = vadd.xlane.f32.xlu0 %v1391
    %v1393 = vpop.xlane.xlu0 %1392
    %v1394 = vadd.f32 %v1006, %v1007
    %v1395 = vadd.f32 %v1394, %v1008
    %v1396 = vadd.f32 %v1395, %v1009
    %v1397 = vadd.f32 %v1396, %v1010
    %v1398 = vadd.f32 %v1397, %v1011
    %v1399 = vsel %vm406, %v1012, 0.0
    %v1400 = vadd.f32 %v1398, %v1399
    %1401 = vadd.xlane.f32.xlu0 %v1400
    %v1402 = vpop.xlane.xlu0 %1401
    %v1403 = vadd.f32 %v1013, %v1014
    %v1404 = vadd.f32 %v1403, %v1015
    %v1405 = vadd.f32 %v1404, %v1016
    %v1406 = vadd.f32 %v1405, %v1017
    %v1407 = vadd.f32 %v1406, %v1018
    %v1408 = vsel %vm406, %v1019, 0.0
    %v1409 = vadd.f32 %v1407, %v1408
    %1410 = vadd.xlane.f32.xlu0 %v1409
    %v1411 = vpop.xlane.xlu0 %1410
    %v1412 = vadd.f32 %v1020, %v1021
    %v1413 = vadd.f32 %v1412, %v1022
    %v1414 = vadd.f32 %v1413, %v1023
    %v1415 = vadd.f32 %v1414, %v1024
    %v1416 = vadd.f32 %v1415, %v1025
    %v1417 = vsel %vm406, %v1026, 0.0
    %v1418 = vadd.f32 %v1416, %v1417
    %1419 = vadd.xlane.f32.xlu0 %v1418
    %v1420 = vpop.xlane.xlu0 %1419
    %v1421 = vadd.f32 %v1027, %v1028
    %v1422 = vadd.f32 %v1421, %v1029
    %v1423 = vadd.f32 %v1422, %v1030
    %v1424 = vadd.f32 %v1423, %v1031
    %v1425 = vadd.f32 %v1424, %v1032
    %v1426 = vsel %vm406, %v1033, 0.0
    %v1427 = vadd.f32 %v1425, %v1426
    %1428 = vadd.xlane.f32.xlu0 %v1427
    %v1429 = vpop.xlane.xlu0 %1428
    %v1430 = vadd.f32 %v1034, %v1035
    %v1431 = vadd.f32 %v1430, %v1036
    %v1432 = vadd.f32 %v1431, %v1037
    %v1433 = vadd.f32 %v1432, %v1038
    %v1434 = vadd.f32 %v1433, %v1039
    %v1435 = vsel %vm406, %v1040, 0.0
    %v1436 = vadd.f32 %v1434, %v1435
    %1437 = vadd.xlane.f32.xlu0 %v1436
    %v1438 = vpop.xlane.xlu0 %1437
    %v1439 = vadd.f32 %v1041, %v1042
    %v1440 = vadd.f32 %v1439, %v1043
    %v1441 = vadd.f32 %v1440, %v1044
    %v1442 = vadd.f32 %v1441, %v1045
    %v1443 = vadd.f32 %v1442, %v1046
    %v1444 = vsel %vm406, %v1047, 0.0
    %v1445 = vadd.f32 %v1443, %v1444
    %1446 = vadd.xlane.f32.xlu0 %v1445
    %v1447 = vpop.xlane.xlu0 %1446
    %v1448 = vadd.f32 %v1048, %v1049
    %v1449 = vadd.f32 %v1448, %v1050
    %v1450 = vadd.f32 %v1449, %v1051
    %v1451 = vadd.f32 %v1450, %v1052
    %v1452 = vadd.f32 %v1451, %v1053
    %v1453 = vsel %vm406, %v1054, 0.0
    %v1454 = vadd.f32 %v1452, %v1453
    %1455 = vadd.xlane.f32.xlu0 %v1454
    %v1456 = vpop.xlane.xlu0 %1455
    %v1457 = vadd.f32 %v1055, %v1056
    %v1458 = vadd.f32 %v1457, %v1057
    %v1459 = vadd.f32 %v1458, %v1058
    %v1460 = vadd.f32 %v1459, %v1059
    %v1461 = vadd.f32 %v1460, %v1060
    %v1462 = vsel %vm406, %v1061, 0.0
    %v1463 = vadd.f32 %v1461, %v1462
    %1464 = vadd.xlane.f32.xlu0 %v1463
    %v1465 = vpop.xlane.xlu0 %1464
    %v1466 = vadd.f32 %v1062, %v1063
    %v1467 = vadd.f32 %v1466, %v1064
    %v1468 = vadd.f32 %v1467, %v1065
    %v1469 = vadd.f32 %v1468, %v1066
    %v1470 = vadd.f32 %v1469, %v1067
    %v1471 = vsel %vm406, %v1068, 0.0
    %v1472 = vadd.f32 %v1470, %v1471
    %1473 = vadd.xlane.f32.xlu0 %v1472
    %v1474 = vpop.xlane.xlu0 %1473
    %v1475 = vadd.f32 %v1069, %v1070
    %v1476 = vadd.f32 %v1475, %v1071
    %v1477 = vadd.f32 %v1476, %v1072
    %v1478 = vadd.f32 %v1477, %v1073
    %v1479 = vadd.f32 %v1478, %v1074
    %v1480 = vsel %vm406, %v1075, 0.0
    %v1481 = vadd.f32 %v1479, %v1480
    %1482 = vadd.xlane.f32.xlu0 %v1481
    %v1483 = vpop.xlane.xlu0 %1482
    %v1484 = vadd.f32 %v1076, %v1077
    %v1485 = vadd.f32 %v1484, %v1078
    %v1486 = vadd.f32 %v1485, %v1079
    %v1487 = vadd.f32 %v1486, %v1080
    %v1488 = vadd.f32 %v1487, %v1081
    %v1489 = vsel %vm406, %v1082, 0.0
    %v1490 = vadd.f32 %v1488, %v1489
    %1491 = vadd.xlane.f32.xlu0 %v1490
    %v1492 = vpop.xlane.xlu0 %1491
    %v1493 = vadd.f32 %v1083, %v1084
    %v1494 = vadd.f32 %v1493, %v1085
    %v1495 = vadd.f32 %v1494, %v1086
    %v1496 = vadd.f32 %v1495, %v1087
    %v1497 = vadd.f32 %v1496, %v1088
    %v1498 = vsel %vm406, %v1089, 0.0
    %v1499 = vadd.f32 %v1497, %v1498
    %1500 = vadd.xlane.f32.xlu0 %v1499
    %v1501 = vpop.xlane.xlu0 %1500
    %v1502 = vadd.f32 %v1090, %v1091
    %v1503 = vadd.f32 %v1502, %v1092
    %v1504 = vadd.f32 %v1503, %v1093
    %v1505 = vadd.f32 %v1504, %v1094
    %v1506 = vadd.f32 %v1505, %v1095
    %v1507 = vsel %vm406, %v1096, 0.0
    %v1508 = vadd.f32 %v1506, %v1507
    %1509 = vadd.xlane.f32.xlu0 %v1508
    %v1510 = vpop.xlane.xlu0 %1509
    %v1511 = vadd.f32 %v1097, %v1098
    %v1512 = vadd.f32 %v1511, %v1099
    %v1513 = vadd.f32 %v1512, %v1100
    %v1514 = vadd.f32 %v1513, %v1101
    %v1515 = vadd.f32 %v1514, %v1102
    %v1516 = vsel %vm406, %v1103, 0.0
    %v1517 = vadd.f32 %v1515, %v1516
    %1518 = vadd.xlane.f32.xlu0 %v1517
    %v1519 = vpop.xlane.xlu0 %1518
    %v1520 = vadd.f32 %v1104, %v1105
    %v1521 = vadd.f32 %v1520, %v1106
    %v1522 = vadd.f32 %v1521, %v1107
    %v1523 = vadd.f32 %v1522, %v1108
    %v1524 = vadd.f32 %v1523, %v1109
    %v1525 = vsel %vm406, %v1110, 0.0
    %v1526 = vadd.f32 %v1524, %v1525
    %1527 = vadd.xlane.f32.xlu0 %v1526
    %v1528 = vpop.xlane.xlu0 %1527
    %v1529 = vadd.f32 %v1111, %v1112
    %v1530 = vadd.f32 %v1529, %v1113
    %v1531 = vadd.f32 %v1530, %v1114
    %v1532 = vadd.f32 %v1531, %v1115
    %v1533 = vadd.f32 %v1532, %v1116
    %v1534 = vsel %vm406, %v1117, 0.0
    %v1535 = vadd.f32 %v1533, %v1534
    %1536 = vadd.xlane.f32.xlu0 %v1535
    %v1537 = vpop.xlane.xlu0 %1536
    %v1538 = vadd.f32 %v1118, %v1119
    %v1539 = vadd.f32 %v1538, %v1120
    %v1540 = vadd.f32 %v1539, %v1121
    %v1541 = vadd.f32 %v1540, %v1122
    %v1542 = vadd.f32 %v1541, %v1123
    %v1543 = vsel %vm406, %v1124, 0.0
    %v1544 = vadd.f32 %v1542, %v1543
    %1545 = vadd.xlane.f32.xlu0 %v1544
    %v1546 = vpop.xlane.xlu0 %1545
    %v1547 = vadd.f32 %v1125, %v1126
    %v1548 = vadd.f32 %v1547, %v1127
    %v1549 = vadd.f32 %v1548, %v1128
    %v1550 = vadd.f32 %v1549, %v1129
    %v1551 = vadd.f32 %v1550, %v1130
    %v1552 = vsel %vm406, %v1131, 0.0
    %v1553 = vadd.f32 %v1551, %v1552
    %1554 = vadd.xlane.f32.xlu0 %v1553
    %v1555 = vpop.xlane.xlu0 %1554
    %v1556 = vadd.f32 %v1132, %v1133
    %v1557 = vadd.f32 %v1556, %v1134
    %v1558 = vadd.f32 %v1557, %v1135
    %v1559 = vadd.f32 %v1558, %v1136
    %v1560 = vadd.f32 %v1559, %v1137
    %v1561 = vsel %vm406, %v1138, 0.0
    %v1562 = vadd.f32 %v1560, %v1561
    %1563 = vadd.xlane.f32.xlu0 %v1562
    %v1564 = vpop.xlane.xlu0 %1563
    %v1565 = vadd.f32 %v1139, %v1140
    %v1566 = vadd.f32 %v1565, %v1141
    %v1567 = vadd.f32 %v1566, %v1142
    %v1568 = vadd.f32 %v1567, %v1143
    %v1569 = vadd.f32 %v1568, %v1144
    %v1570 = vsel %vm406, %v1145, 0.0
    %v1571 = vadd.f32 %v1569, %v1570
    %1572 = vadd.xlane.f32.xlu0 %v1571
    %v1573 = vpop.xlane.xlu0 %1572
    %v1574 = vadd.f32 %v1146, %v1147
    %v1575 = vadd.f32 %v1574, %v1148
    %v1576 = vadd.f32 %v1575, %v1149
    %v1577 = vadd.f32 %v1576, %v1150
    %v1578 = vadd.f32 %v1577, %v1151
    %v1579 = vsel %vm406, %v1152, 0.0
    %v1580 = vadd.f32 %v1578, %v1579
    %1581 = vadd.xlane.f32.xlu0 %v1580
    %v1582 = vpop.xlane.xlu0 %1581
    %v1583 = vadd.f32 %v1153, %v1154
    %v1584 = vadd.f32 %v1583, %v1155
    %v1585 = vadd.f32 %v1584, %v1156
    %v1586 = vadd.f32 %v1585, %v1157
    %v1587 = vadd.f32 %v1586, %v1158
    %v1588 = vsel %vm406, %v1159, 0.0
    %v1589 = vadd.f32 %v1587, %v1588
    %1590 = vadd.xlane.f32.xlu0 %v1589
    %v1591 = vpop.xlane.xlu0 %1590
    %v1592 = vadd.f32 %v1160, %v1161
    %v1593 = vadd.f32 %v1592, %v1162
    %v1594 = vadd.f32 %v1593, %v1163
    %v1595 = vadd.f32 %v1594, %v1164
    %v1596 = vadd.f32 %v1595, %v1165
    %v1597 = vsel %vm406, %v1166, 0.0
    %v1598 = vadd.f32 %v1596, %v1597
    %1599 = vadd.xlane.f32.xlu0 %v1598
    %v1600 = vpop.xlane.xlu0 %1599
    %v1601 = vadd.f32 %v1167, %v1168
    %v1602 = vadd.f32 %v1601, %v1169
    %v1603 = vadd.f32 %v1602, %v1170
    %v1604 = vadd.f32 %v1603, %v1171
    %v1605 = vadd.f32 %v1604, %v1172
    %v1606 = vsel %vm406, %v1173, 0.0
    %v1607 = vadd.f32 %v1605, %v1606
    %1608 = vadd.xlane.f32.xlu0 %v1607
    %v1609 = vpop.xlane.xlu0 %1608
    %v1610 = vadd.f32 %v1174, %v1175
    %v1611 = vadd.f32 %v1610, %v1176
    %v1612 = vadd.f32 %v1611, %v1177
    %v1613 = vadd.f32 %v1612, %v1178
    %v1614 = vadd.f32 %v1613, %v1179
    %v1615 = vsel %vm406, %v1180, 0.0
    %v1616 = vadd.f32 %v1614, %v1615
    %1617 = vadd.xlane.f32.xlu0 %v1616
    %v1618 = vpop.xlane.xlu0 %1617
    %v1619 = vadd.f32 %v1181, %v1182
    %v1620 = vadd.f32 %v1619, %v1183
    %v1621 = vadd.f32 %v1620, %v1184
    %v1622 = vadd.f32 %v1621, %v1185
    %v1623 = vadd.f32 %v1622, %v1186
    %v1624 = vsel %vm406, %v1187, 0.0
    %v1625 = vadd.f32 %v1623, %v1624
    %1626 = vadd.xlane.f32.xlu0 %v1625
    %v1627 = vpop.xlane.xlu0 %1626
    %v1628 = vadd.f32 %v1188, %v1189
    %v1629 = vadd.f32 %v1628, %v1190
    %v1630 = vadd.f32 %v1629, %v1191
    %v1631 = vadd.f32 %v1630, %v1192
    %v1632 = vadd.f32 %v1631, %v1193
    %v1633 = vsel %vm406, %v1194, 0.0
    %v1634 = vadd.f32 %v1632, %v1633
    %1635 = vadd.xlane.f32.xlu0 %v1634
    %v1636 = vpop.xlane.xlu0 %1635
    %v1637 = vadd.f32 %v1195, %v1196
    %v1638 = vadd.f32 %v1637, %v1197
    %v1639 = vadd.f32 %v1638, %v1198
    %v1640 = vadd.f32 %v1639, %v1199
    %v1641 = vadd.f32 %v1640, %v1200
    %v1642 = vsel %vm406, %v1201, 0.0
    %v1643 = vadd.f32 %v1641, %v1642
    %1644 = vadd.xlane.f32.xlu0 %v1643
    %v1645 = vpop.xlane.xlu0 %1644
    %v1646 = vadd.f32 %v1202, %v1203
    %v1647 = vadd.f32 %v1646, %v1204
    %v1648 = vadd.f32 %v1647, %v1205
    %v1649 = vadd.f32 %v1648, %v1206
    %v1650 = vadd.f32 %v1649, %v1207
    %v1651 = vsel %vm406, %v1208, 0.0
    %v1652 = vadd.f32 %v1650, %v1651
    %1653 = vadd.xlane.f32.xlu0 %v1652
    %v1654 = vpop.xlane.xlu0 %1653
    %v1655 = vadd.f32 %v1209, %v1210
    %v1656 = vadd.f32 %v1655, %v1211
    %v1657 = vadd.f32 %v1656, %v1212
    %v1658 = vadd.f32 %v1657, %v1213
    %v1659 = vadd.f32 %v1658, %v1214
    %v1660 = vsel %vm406, %v1215, 0.0
    %v1661 = vadd.f32 %v1659, %v1660
    %1662 = vadd.xlane.f32.xlu0 %v1661
    %v1663 = vpop.xlane.xlu0 %1662
    %v1664 = vadd.f32 %v1216, %v1217
    %v1665 = vadd.f32 %v1664, %v1218
    %v1666 = vadd.f32 %v1665, %v1219
    %v1667 = vadd.f32 %v1666, %v1220
    %v1668 = vadd.f32 %v1667, %v1221
    %v1669 = vsel %vm406, %v1222, 0.0
    %v1670 = vadd.f32 %v1668, %v1669
    %1671 = vadd.xlane.f32.xlu0 %v1670
    %v1672 = vpop.xlane.xlu0 %1671
    %v1673 = vadd.f32 %v1223, %v1224
    %v1674 = vadd.f32 %v1673, %v1225
    %v1675 = vadd.f32 %v1674, %v1226
    %v1676 = vadd.f32 %v1675, %v1227
    %v1677 = vadd.f32 %v1676, %v1228
    %v1678 = vsel %vm406, %v1229, 0.0
    %v1679 = vadd.f32 %v1677, %v1678
    %1680 = vadd.xlane.f32.xlu0 %v1679
    %v1681 = vpop.xlane.xlu0 %1680
    %v1682 = vadd.f32 %v1230, %v1231
    %v1683 = vadd.f32 %v1682, %v1232
    %v1684 = vadd.f32 %v1683, %v1233
    %v1685 = vadd.f32 %v1684, %v1234
    %v1686 = vadd.f32 %v1685, %v1235
    %v1687 = vsel %vm406, %v1236, 0.0
    %v1688 = vadd.f32 %v1686, %v1687
    %1689 = vadd.xlane.f32.xlu0 %v1688
    %v1690 = vpop.xlane.xlu0 %1689
    %v1691 = vadd.f32 %v1237, %v1238
    %v1692 = vadd.f32 %v1691, %v1239
    %v1693 = vadd.f32 %v1692, %v1240
    %v1694 = vadd.f32 %v1693, %v1241
    %v1695 = vadd.f32 %v1694, %v1242
    %v1696 = vsel %vm406, %v1243, 0.0
    %v1697 = vadd.f32 %v1695, %v1696
    %1698 = vadd.xlane.f32.xlu0 %v1697
    %v1699 = vpop.xlane.xlu0 %1698
    %v1700 = vadd.f32 %v1244, %v1245
    %v1701 = vadd.f32 %v1700, %v1246
    %v1702 = vadd.f32 %v1701, %v1247
    %v1703 = vadd.f32 %v1702, %v1248
    %v1704 = vadd.f32 %v1703, %v1249
    %v1705 = vsel %vm406, %v1250, 0.0
    %v1706 = vadd.f32 %v1704, %v1705
    %1707 = vadd.xlane.f32.xlu0 %v1706
    %v1708 = vpop.xlane.xlu0 %1707
    %v1709 = vadd.f32 %v1251, %v1252
    %v1710 = vadd.f32 %v1709, %v1253
    %v1711 = vadd.f32 %v1710, %v1254
    %v1712 = vadd.f32 %v1711, %v1255
    %v1713 = vadd.f32 %v1712, %v1256
    %v1714 = vsel %vm406, %v1257, 0.0
    %v1715 = vadd.f32 %v1713, %v1714
    %1716 = vadd.xlane.f32.xlu0 %v1715
    %v1717 = vpop.xlane.xlu0 %1716
    %v1718 = vadd.f32 %v1258, %v1259
    %v1719 = vadd.f32 %v1718, %v1260
    %v1720 = vadd.f32 %v1719, %v1261
    %v1721 = vadd.f32 %v1720, %v1262
    %v1722 = vadd.f32 %v1721, %v1263
    %v1723 = vsel %vm406, %v1264, 0.0
    %v1724 = vadd.f32 %v1722, %v1723
    %1725 = vadd.xlane.f32.xlu0 %v1724
    %v1726 = vpop.xlane.xlu0 %1725
    %v1727 = vadd.f32 %v1265, %v1266
    %v1728 = vadd.f32 %v1727, %v1267
    %v1729 = vadd.f32 %v1728, %v1268
    %v1730 = vadd.f32 %v1729, %v1269
    %v1731 = vadd.f32 %v1730, %v1270
    %v1732 = vsel %vm406, %v1271, 0.0
    %v1733 = vadd.f32 %v1731, %v1732
    %1734 = vadd.xlane.f32.xlu0 %v1733
    %v1735 = vpop.xlane.xlu0 %1734
    %v1736 = vadd.f32 %v1272, %v1273
    %v1737 = vadd.f32 %v1736, %v1274
    %v1738 = vadd.f32 %v1737, %v1275
    %v1739 = vadd.f32 %v1738, %v1276
    %v1740 = vadd.f32 %v1739, %v1277
    %v1741 = vsel %vm406, %v1278, 0.0
    %v1742 = vadd.f32 %v1740, %v1741
    %1743 = vadd.xlane.f32.xlu0 %v1742
    %v1744 = vpop.xlane.xlu0 %1743
    %v1745 = vadd.f32 %v1279, %v1280
    %v1746 = vadd.f32 %v1745, %v1281
    %v1747 = vadd.f32 %v1746, %v1282
    %v1748 = vadd.f32 %v1747, %v1283
    %v1749 = vadd.f32 %v1748, %v1284
    %v1750 = vsel %vm406, %v1285, 0.0
    %v1751 = vadd.f32 %v1749, %v1750
    %1752 = vadd.xlane.f32.xlu0 %v1751
    %v1753 = vpop.xlane.xlu0 %1752
    %v1754 = vadd.f32 %v1294, 0.0
    %v1755 = vadd.f32 %v1303, 0.0
    %v1756 = vadd.f32 %v1312, 0.0
    %v1757 = vadd.f32 %v1321, 0.0
    %v1758 = vadd.f32 %v1330, 0.0
    %v1759 = vadd.f32 %v1339, 0.0
    %v1760 = vadd.f32 %v1348, 0.0
    %v1761 = vadd.f32 %v1357, 0.0
    %v1762 = vadd.f32 %v1366, 0.0
    %v1763 = vadd.f32 %v1375, 0.0
    %v1764 = vadd.f32 %v1384, 0.0
    %v1765 = vadd.f32 %v1393, 0.0
    %v1766 = vadd.f32 %v1402, 0.0
    %v1767 = vadd.f32 %v1411, 0.0
    %v1768 = vadd.f32 %v1420, 0.0
    %v1769 = vadd.f32 %v1429, 0.0
    %v1770 = vadd.f32 %v1438, 0.0
    %v1771 = vadd.f32 %v1447, 0.0
    %v1772 = vadd.f32 %v1456, 0.0
    %v1773 = vadd.f32 %v1465, 0.0
    %v1774 = vadd.f32 %v1474, 0.0
    %v1775 = vadd.f32 %v1483, 0.0
    %v1776 = vadd.f32 %v1492, 0.0
    %v1777 = vadd.f32 %v1501, 0.0
    %v1778 = vadd.f32 %v1510, 0.0
    %v1779 = vadd.f32 %v1519, 0.0
    %v1780 = vadd.f32 %v1528, 0.0
    %v1781 = vadd.f32 %v1537, 0.0
    %v1782 = vadd.f32 %v1546, 0.0
    %v1783 = vadd.f32 %v1555, 0.0
    %v1784 = vadd.f32 %v1564, 0.0
    %v1785 = vadd.f32 %v1573, 0.0
    %v1786 = vadd.f32 %v1582, 0.0
    %v1787 = vadd.f32 %v1591, 0.0
    %v1788 = vadd.f32 %v1600, 0.0
    %v1789 = vadd.f32 %v1609, 0.0
    %v1790 = vadd.f32 %v1618, 0.0
    %v1791 = vadd.f32 %v1627, 0.0
    %v1792 = vadd.f32 %v1636, 0.0
    %v1793 = vadd.f32 %v1645, 0.0
    %v1794 = vadd.f32 %v1654, 0.0
    %v1795 = vadd.f32 %v1663, 0.0
    %v1796 = vadd.f32 %v1672, 0.0
    %v1797 = vadd.f32 %v1681, 0.0
    %v1798 = vadd.f32 %v1690, 0.0
    %v1799 = vadd.f32 %v1699, 0.0
    %v1800 = vadd.f32 %v1708, 0.0
    %v1801 = vadd.f32 %v1717, 0.0
    %v1802 = vadd.f32 %v1726, 0.0
    %v1803 = vadd.f32 %v1735, 0.0
    %v1804 = vadd.f32 %v1744, 0.0
    %v1805 = vadd.f32 %v1753, 0.0
    %v1806 = vmul.f32 %v870, 0.0012755102
    %v1807 = vmul.f32 %v871, 0.0012755102
    %v1808 = vmul.f32 %v872, 0.0012755102
    %v1809 = vmul.f32 %v873, 0.0012755102
    %v1810 = vmul.f32 %v874, 0.0012755102
    %v1811 = vmul.f32 %v875, 0.0012755102
    %v1812 = vmul.f32 %v876, 0.0012755102
    %v1813 = vmul.f32 %v877, 0.0012755102
    %v1814 = vmul.f32 %v878, 0.0012755102
    %v1815 = vmul.f32 %v879, 0.0012755102
    %v1816 = vmul.f32 %v880, 0.0012755102
    %v1817 = vmul.f32 %v881, 0.0012755102
    %v1818 = vmul.f32 %v882, 0.0012755102
    %v1819 = vmul.f32 %v883, 0.0012755102
    %v1820 = vmul.f32 %v884, 0.0012755102
    %v1821 = vmul.f32 %v885, 0.0012755102
    %v1822 = vmul.f32 %v886, 0.0012755102
    %v1823 = vmul.f32 %v887, 0.0012755102
    %v1824 = vmul.f32 %v888, 0.0012755102
    %v1825 = vmul.f32 %v889, 0.0012755102
    %v1826 = vmul.f32 %v890, 0.0012755102
    %v1827 = vmul.f32 %v891, 0.0012755102
    %v1828 = vmul.f32 %v892, 0.0012755102
    %v1829 = vmul.f32 %v893, 0.0012755102
    %v1830 = vmul.f32 %v894, 0.0012755102
    %v1831 = vmul.f32 %v895, 0.0012755102
    %v1832 = vmul.f32 %v896, 0.0012755102
    %v1833 = vmul.f32 %v897, 0.0012755102
    %v1834 = vmul.f32 %v898, 0.0012755102
    %v1835 = vmul.f32 %v899, 0.0012755102
    %v1836 = vmul.f32 %v900, 0.0012755102
    %v1837 = vmul.f32 %v901, 0.0012755102
    %v1838 = vmul.f32 %v902, 0.0012755102
    %v1839 = vmul.f32 %v903, 0.0012755102
    %v1840 = vmul.f32 %v904, 0.0012755102
    %v1841 = vmul.f32 %v905, 0.0012755102
    %v1842 = vmul.f32 %v906, 0.0012755102
    %v1843 = vmul.f32 %v907, 0.0012755102
    %v1844 = vmul.f32 %v908, 0.0012755102
    %v1845 = vmul.f32 %v909, 0.0012755102
    %v1846 = vmul.f32 %v910, 0.0012755102
    %v1847 = vmul.f32 %v911, 0.0012755102
    %v1848 = vmul.f32 %v912, 0.0012755102
    %v1849 = vmul.f32 %v913, 0.0012755102
    %v1850 = vmul.f32 %v914, 0.0012755102
    %v1851 = vmul.f32 %v915, 0.0012755102
    %v1852 = vmul.f32 %v916, 0.0012755102
    %v1853 = vmul.f32 %v917, 0.0012755102
    %v1854 = vmul.f32 %v918, 0.0012755102
    %v1855 = vmul.f32 %v919, 0.0012755102
    %v1856 = vmul.f32 %v920, 0.0012755102
    %v1857 = vmul.f32 %v921, 0.0012755102
    %v1858 = vmul.f32 %v1754, 0.0012755102
    %v1859 = vmul.f32 %v1755, 0.0012755102
    %v1860 = vmul.f32 %v1756, 0.0012755102
    %v1861 = vmul.f32 %v1757, 0.0012755102
    %v1862 = vmul.f32 %v1758, 0.0012755102
    %v1863 = vmul.f32 %v1759, 0.0012755102
    %v1864 = vmul.f32 %v1760, 0.0012755102
    %v1865 = vmul.f32 %v1761, 0.0012755102
    %v1866 = vmul.f32 %v1762, 0.0012755102
    %v1867 = vmul.f32 %v1763, 0.0012755102
    %v1868 = vmul.f32 %v1764, 0.0012755102
    %v1869 = vmul.f32 %v1765, 0.0012755102
    %v1870 = vmul.f32 %v1766, 0.0012755102
    %v1871 = vmul.f32 %v1767, 0.0012755102
    %v1872 = vmul.f32 %v1768, 0.0012755102
    %v1873 = vmul.f32 %v1769, 0.0012755102
    %v1874 = vmul.f32 %v1770, 0.0012755102
    %v1875 = vmul.f32 %v1771, 0.0012755102
    %v1876 = vmul.f32 %v1772, 0.0012755102
    %v1877 = vmul.f32 %v1773, 0.0012755102
    %v1878 = vmul.f32 %v1774, 0.0012755102
    %v1879 = vmul.f32 %v1775, 0.0012755102
    %v1880 = vmul.f32 %v1776, 0.0012755102
    %v1881 = vmul.f32 %v1777, 0.0012755102
    %v1882 = vmul.f32 %v1778, 0.0012755102
    %v1883 = vmul.f32 %v1779, 0.0012755102
    %v1884 = vmul.f32 %v1780, 0.0012755102
    %v1885 = vmul.f32 %v1781, 0.0012755102
    %v1886 = vmul.f32 %v1782, 0.0012755102
    %v1887 = vmul.f32 %v1783, 0.0012755102
    %v1888 = vmul.f32 %v1784, 0.0012755102
    %v1889 = vmul.f32 %v1785, 0.0012755102
    %v1890 = vmul.f32 %v1786, 0.0012755102
    %v1891 = vmul.f32 %v1787, 0.0012755102
    %v1892 = vmul.f32 %v1788, 0.0012755102
    %v1893 = vmul.f32 %v1789, 0.0012755102
    %v1894 = vmul.f32 %v1790, 0.0012755102
    %v1895 = vmul.f32 %v1791, 0.0012755102
    %v1896 = vmul.f32 %v1792, 0.0012755102
    %v1897 = vmul.f32 %v1793, 0.0012755102
    %v1898 = vmul.f32 %v1794, 0.0012755102
    %v1899 = vmul.f32 %v1795, 0.0012755102
    %v1900 = vmul.f32 %v1796, 0.0012755102
    %v1901 = vmul.f32 %v1797, 0.0012755102
    %v1902 = vmul.f32 %v1798, 0.0012755102
    %v1903 = vmul.f32 %v1799, 0.0012755102
    %v1904 = vmul.f32 %v1800, 0.0012755102
    %v1905 = vmul.f32 %v1801, 0.0012755102
    %v1906 = vmul.f32 %v1802, 0.0012755102
    %v1907 = vmul.f32 %v1803, 0.0012755102
    %v1908 = vmul.f32 %v1804, 0.0012755102
    %v1909 = vmul.f32 %v1805, 0.0012755102
    %v1910 = vmul.f32 %v1806, %v1806
    %v1911 = vmul.f32 %v1807, %v1807
    %v1912 = vmul.f32 %v1808, %v1808
    %v1913 = vmul.f32 %v1809, %v1809
    %v1914 = vmul.f32 %v1810, %v1810
    %v1915 = vmul.f32 %v1811, %v1811
    %v1916 = vmul.f32 %v1812, %v1812
    %v1917 = vmul.f32 %v1813, %v1813
    %v1918 = vmul.f32 %v1814, %v1814
    %v1919 = vmul.f32 %v1815, %v1815
    %v1920 = vmul.f32 %v1816, %v1816
    %v1921 = vmul.f32 %v1817, %v1817
    %v1922 = vmul.f32 %v1818, %v1818
    %v1923 = vmul.f32 %v1819, %v1819
    %v1924 = vmul.f32 %v1820, %v1820
    %v1925 = vmul.f32 %v1821, %v1821
    %v1926 = vmul.f32 %v1822, %v1822
    %v1927 = vmul.f32 %v1823, %v1823
    %v1928 = vmul.f32 %v1824, %v1824
    %v1929 = vmul.f32 %v1825, %v1825
    %v1930 = vmul.f32 %v1826, %v1826
    %v1931 = vmul.f32 %v1827, %v1827
    %v1932 = vmul.f32 %v1828, %v1828
    %v1933 = vmul.f32 %v1829, %v1829
    %v1934 = vmul.f32 %v1830, %v1830
    %v1935 = vmul.f32 %v1831, %v1831
    %v1936 = vmul.f32 %v1832, %v1832
    %v1937 = vmul.f32 %v1833, %v1833
    %v1938 = vmul.f32 %v1834, %v1834
    %v1939 = vmul.f32 %v1835, %v1835
    %v1940 = vmul.f32 %v1836, %v1836
    %v1941 = vmul.f32 %v1837, %v1837
    %v1942 = vmul.f32 %v1838, %v1838
    %v1943 = vmul.f32 %v1839, %v1839
    %v1944 = vmul.f32 %v1840, %v1840
    %v1945 = vmul.f32 %v1841, %v1841
    %v1946 = vmul.f32 %v1842, %v1842
    %v1947 = vmul.f32 %v1843, %v1843
    %v1948 = vmul.f32 %v1844, %v1844
    %v1949 = vmul.f32 %v1845, %v1845
    %v1950 = vmul.f32 %v1846, %v1846
    %v1951 = vmul.f32 %v1847, %v1847
    %v1952 = vmul.f32 %v1848, %v1848
    %v1953 = vmul.f32 %v1849, %v1849
    %v1954 = vmul.f32 %v1850, %v1850
    %v1955 = vmul.f32 %v1851, %v1851
    %v1956 = vmul.f32 %v1852, %v1852
    %v1957 = vmul.f32 %v1853, %v1853
    %v1958 = vmul.f32 %v1854, %v1854
    %v1959 = vmul.f32 %v1855, %v1855
    %v1960 = vmul.f32 %v1856, %v1856
    %v1961 = vmul.f32 %v1857, %v1857
    %v1962 = vsub.f32 %v1858, %v1910
    %v1963 = vsub.f32 %v1859, %v1911
    %v1964 = vsub.f32 %v1860, %v1912
    %v1965 = vsub.f32 %v1861, %v1913
    %v1966 = vsub.f32 %v1862, %v1914
    %v1967 = vsub.f32 %v1863, %v1915
    %v1968 = vsub.f32 %v1864, %v1916
    %v1969 = vsub.f32 %v1865, %v1917
    %v1970 = vsub.f32 %v1866, %v1918
    %v1971 = vsub.f32 %v1867, %v1919
    %v1972 = vsub.f32 %v1868, %v1920
    %v1973 = vsub.f32 %v1869, %v1921
    %v1974 = vsub.f32 %v1870, %v1922
    %v1975 = vsub.f32 %v1871, %v1923
    %v1976 = vsub.f32 %v1872, %v1924
    %v1977 = vsub.f32 %v1873, %v1925
    %v1978 = vsub.f32 %v1874, %v1926
    %v1979 = vsub.f32 %v1875, %v1927
    %v1980 = vsub.f32 %v1876, %v1928
    %v1981 = vsub.f32 %v1877, %v1929
    %v1982 = vsub.f32 %v1878, %v1930
    %v1983 = vsub.f32 %v1879, %v1931
    %v1984 = vsub.f32 %v1880, %v1932
    %v1985 = vsub.f32 %v1881, %v1933
    %v1986 = vsub.f32 %v1882, %v1934
    %v1987 = vsub.f32 %v1883, %v1935
    %v1988 = vsub.f32 %v1884, %v1936
    %v1989 = vsub.f32 %v1885, %v1937
    %v1990 = vsub.f32 %v1886, %v1938
    %v1991 = vsub.f32 %v1887, %v1939
    %v1992 = vsub.f32 %v1888, %v1940
    %v1993 = vsub.f32 %v1889, %v1941
    %v1994 = vsub.f32 %v1890, %v1942
    %v1995 = vsub.f32 %v1891, %v1943
    %v1996 = vsub.f32 %v1892, %v1944
    %v1997 = vsub.f32 %v1893, %v1945
    %v1998 = vsub.f32 %v1894, %v1946
    %v1999 = vsub.f32 %v1895, %v1947
    %v2000 = vsub.f32 %v1896, %v1948
    %v2001 = vsub.f32 %v1897, %v1949
    %v2002 = vsub.f32 %v1898, %v1950
    %v2003 = vsub.f32 %v1899, %v1951
    %v2004 = vsub.f32 %v1900, %v1952
    %v2005 = vsub.f32 %v1901, %v1953
    %v2006 = vsub.f32 %v1902, %v1954
    %v2007 = vsub.f32 %v1903, %v1955
    %v2008 = vsub.f32 %v1904, %v1956
    %v2009 = vsub.f32 %v1905, %v1957
    %v2010 = vsub.f32 %v1906, %v1958
    %v2011 = vsub.f32 %v1907, %v1959
    %v2012 = vsub.f32 %v1908, %v1960
    %v2013 = vsub.f32 %v1909, %v1961
    %v2014 = vld [vmem:[%s2] sm:$0xff]
    %v2015 = vld [vmem:[%s2 + $0x8] sm:$0xff]
    %v2016 = vld [vmem:[%s2 + $0x10] sm:$0xff]
    %v2017 = vld [vmem:[%s2 + $0x18] sm:$0xff]
    %v2018 = vld [vmem:[%s2 + $0x20] sm:$0xff]
    %v2019 = vld [vmem:[%s2 + $0x28] sm:$0xff]
    %v2020 = vld [vmem:[%s2 + $0x30] sm:$0xff]
    %v2021 = vld [vmem:[%s2 + $0x38] sm:$0xff]
    %v2022 = vld [vmem:[%s2 + $0x40] sm:$0xff]
    %v2023 = vld [vmem:[%s2 + $0x48] sm:$0xff]
    %v2024 = vld [vmem:[%s2 + $0x50] sm:$0xff]
    %v2025 = vld [vmem:[%s2 + $0x58] sm:$0xff]
    %v2026 = vld [vmem:[%s2 + $0x60] sm:$0xff]
    %v2027 = vld [vmem:[%s2 + $0x68] sm:$0xff]
    %v2028 = vld [vmem:[%s2 + $0x70] sm:$0xff]
    %v2029 = vld [vmem:[%s2 + $0x78] sm:$0xff]
    %v2030 = vld [vmem:[%s2 + $0x80] sm:$0xff]
    %v2031 = vld [vmem:[%s2 + $0x88] sm:$0xff]
    %v2032 = vld [vmem:[%s2 + $0x90] sm:$0xff]
    %v2033 = vld [vmem:[%s2 + $0x98] sm:$0xff]
    %v2034 = vld [vmem:[%s2 + $0xa0] sm:$0xff]
    %v2035 = vld [vmem:[%s2 + $0xa8] sm:$0xff]
    %v2036 = vld [vmem:[%s2 + $0xb0] sm:$0xff]
    %v2037 = vld [vmem:[%s2 + $0xb8] sm:$0xff]
    %v2038 = vld [vmem:[%s2 + $0xc0] sm:$0xff]
    %v2039 = vld [vmem:[%s2 + $0xc8] sm:$0xff]
    %v2040 = vld [vmem:[%s2 + $0xd0] sm:$0xff]
    %v2041 = vld [vmem:[%s2 + $0xd8] sm:$0xff]
    %v2042 = vld [vmem:[%s2 + $0xe0] sm:$0xff]
    %v2043 = vld [vmem:[%s2 + $0xe8] sm:$0xff]
    %v2044 = vld [vmem:[%s2 + $0xf0] sm:$0xff]
    %v2045 = vld [vmem:[%s2 + $0xf8] sm:$0xff]
    %v2046 = vld [vmem:[%s2 + $0x100] sm:$0xff]
    %v2047 = vld [vmem:[%s2 + $0x108] sm:$0xff]
    %v2048 = vld [vmem:[%s2 + $0x110] sm:$0xff]
    %v2049 = vld [vmem:[%s2 + $0x118] sm:$0xff]
    %v2050 = vld [vmem:[%s2 + $0x120] sm:$0xff]
    %v2051 = vld [vmem:[%s2 + $0x128] sm:$0xff]
    %v2052 = vld [vmem:[%s2 + $0x130] sm:$0xff]
    %v2053 = vld [vmem:[%s2 + $0x138] sm:$0xff]
    %v2054 = vld [vmem:[%s2 + $0x140] sm:$0xff]
    %v2055 = vld [vmem:[%s2 + $0x148] sm:$0xff]
    %v2056 = vld [vmem:[%s2 + $0x150] sm:$0xff]
    %v2057 = vld [vmem:[%s2 + $0x158] sm:$0xff]
    %v2058 = vld [vmem:[%s2 + $0x160] sm:$0xff]
    %v2059 = vld [vmem:[%s2 + $0x168] sm:$0xff]
    %v2060 = vld [vmem:[%s2 + $0x170] sm:$0xff]
    %v2061 = vld [vmem:[%s2 + $0x178] sm:$0xff]
    %v2062 = vld [vmem:[%s2 + $0x180] sm:$0xff]
    %v2063 = vld [vmem:[%s2 + $0x188] sm:$0xff]
    %v2064 = vld [vmem:[%s2 + $0x190] sm:$0xff]
    %v2065 = vld [vmem:[%s2 + $0x198] sm:$0xff]
    %v2066 = vadd.f32 %v1962, 1e-05
    %v2067 = vadd.f32 %v1963, 1e-05
    %v2068 = vadd.f32 %v1964, 1e-05
    %v2069 = vadd.f32 %v1965, 1e-05
    %v2070 = vadd.f32 %v1966, 1e-05
    %v2071 = vadd.f32 %v1967, 1e-05
    %v2072 = vadd.f32 %v1968, 1e-05
    %v2073 = vadd.f32 %v1969, 1e-05
    %v2074 = vadd.f32 %v1970, 1e-05
    %v2075 = vadd.f32 %v1971, 1e-05
    %v2076 = vadd.f32 %v1972, 1e-05
    %v2077 = vadd.f32 %v1973, 1e-05
    %v2078 = vadd.f32 %v1974, 1e-05
    %v2079 = vadd.f32 %v1975, 1e-05
    %v2080 = vadd.f32 %v1976, 1e-05
    %v2081 = vadd.f32 %v1977, 1e-05
    %v2082 = vadd.f32 %v1978, 1e-05
    %v2083 = vadd.f32 %v1979, 1e-05
    %v2084 = vadd.f32 %v1980, 1e-05
    %v2085 = vadd.f32 %v1981, 1e-05
    %v2086 = vadd.f32 %v1982, 1e-05
    %v2087 = vadd.f32 %v1983, 1e-05
    %v2088 = vadd.f32 %v1984, 1e-05
    %v2089 = vadd.f32 %v1985, 1e-05
    %v2090 = vadd.f32 %v1986, 1e-05
    %v2091 = vadd.f32 %v1987, 1e-05
    %v2092 = vadd.f32 %v1988, 1e-05
    %v2093 = vadd.f32 %v1989, 1e-05
    %v2094 = vadd.f32 %v1990, 1e-05
    %v2095 = vadd.f32 %v1991, 1e-05
    %v2096 = vadd.f32 %v1992, 1e-05
    %v2097 = vadd.f32 %v1993, 1e-05
    %v2098 = vadd.f32 %v1994, 1e-05
    %v2099 = vadd.f32 %v1995, 1e-05
    %v2100 = vadd.f32 %v1996, 1e-05
    %v2101 = vadd.f32 %v1997, 1e-05
    %v2102 = vadd.f32 %v1998, 1e-05
    %v2103 = vadd.f32 %v1999, 1e-05
    %v2104 = vadd.f32 %v2000, 1e-05
    %v2105 = vadd.f32 %v2001, 1e-05
    %v2106 = vadd.f32 %v2002, 1e-05
    %v2107 = vadd.f32 %v2003, 1e-05
    %v2108 = vadd.f32 %v2004, 1e-05
    %v2109 = vadd.f32 %v2005, 1e-05
    %v2110 = vadd.f32 %v2006, 1e-05
    %v2111 = vadd.f32 %v2007, 1e-05
    %v2112 = vadd.f32 %v2008, 1e-05
    %v2113 = vadd.f32 %v2009, 1e-05
    %v2114 = vadd.f32 %v2010, 1e-05
    %v2115 = vadd.f32 %v2011, 1e-05
    %v2116 = vadd.f32 %v2012, 1e-05
    %v2117 = vadd.f32 %v2013, 1e-05
    %v2118 = vrsqrt.pop %v2066
    %v2119 = vrsqrt.pop %v2067
    %v2120 = vrsqrt.pop %v2068
    %v2121 = vrsqrt.pop %v2069
    %v2122 = vrsqrt.pop %v2070
    %v2123 = vrsqrt.pop %v2071
    %v2124 = vrsqrt.pop %v2072
    %v2125 = vrsqrt.pop %v2073
    %v2126 = vrsqrt.pop %v2074
    %v2127 = vrsqrt.pop %v2075
    %v2128 = vrsqrt.pop %v2076
    %v2129 = vrsqrt.pop %v2077
    %v2130 = vrsqrt.pop %v2078
    %v2131 = vrsqrt.pop %v2079
    %v2132 = vrsqrt.pop %v2080
    %v2133 = vrsqrt.pop %v2081
    %v2134 = vrsqrt.pop %v2082
    %v2135 = vrsqrt.pop %v2083
    %v2136 = vrsqrt.pop %v2084
    %v2137 = vrsqrt.pop %v2085
    %v2138 = vrsqrt.pop %v2086
    %v2139 = vrsqrt.pop %v2087
    %v2140 = vrsqrt.pop %v2088
    %v2141 = vrsqrt.pop %v2089
    %v2142 = vrsqrt.pop %v2090
    %v2143 = vrsqrt.pop %v2091
    %v2144 = vrsqrt.pop %v2092
    %v2145 = vrsqrt.pop %v2093
    %v2146 = vrsqrt.pop %v2094
    %v2147 = vrsqrt.pop %v2095
    %v2148 = vrsqrt.pop %v2096
    %v2149 = vrsqrt.pop %v2097
    %v2150 = vrsqrt.pop %v2098
    %v2151 = vrsqrt.pop %v2099
    %v2152 = vrsqrt.pop %v2100
    %v2153 = vrsqrt.pop %v2101
    %v2154 = vrsqrt.pop %v2102
    %v2155 = vrsqrt.pop %v2103
    %v2156 = vrsqrt.pop %v2104
    %v2157 = vrsqrt.pop %v2105
    %v2158 = vrsqrt.pop %v2106
    %v2159 = vrsqrt.pop %v2107
    %v2160 = vrsqrt.pop %v2108
    %v2161 = vrsqrt.pop %v2109
    %v2162 = vrsqrt.pop %v2110
    %v2163 = vrsqrt.pop %v2111
    %v2164 = vrsqrt.pop %v2112
    %v2165 = vrsqrt.pop %v2113
    %v2166 = vrsqrt.pop %v2114
    %v2167 = vrsqrt.pop %v2115
    %v2168 = vrsqrt.pop %v2116
    %v2169 = vrsqrt.pop %v2117
    %v2170 = vmul.f32 %v2014, %v2118
    %v2171 = vmul.f32 %v2015, %v2119
    %v2172 = vmul.f32 %v2016, %v2120
    %v2173 = vmul.f32 %v2017, %v2121
    %v2174 = vmul.f32 %v2018, %v2122
    %v2175 = vmul.f32 %v2019, %v2123
    %v2176 = vmul.f32 %v2020, %v2124
    %v2177 = vmul.f32 %v2021, %v2125
    %v2178 = vmul.f32 %v2022, %v2126
    %v2179 = vmul.f32 %v2023, %v2127
    %v2180 = vmul.f32 %v2024, %v2128
    %v2181 = vmul.f32 %v2025, %v2129
    %v2182 = vmul.f32 %v2026, %v2130
    %v2183 = vmul.f32 %v2027, %v2131
    %v2184 = vmul.f32 %v2028, %v2132
    %v2185 = vmul.f32 %v2029, %v2133
    %v2186 = vmul.f32 %v2030, %v2134
    %v2187 = vmul.f32 %v2031, %v2135
    %v2188 = vmul.f32 %v2032, %v2136
    %v2189 = vmul.f32 %v2033, %v2137
    %v2190 = vmul.f32 %v2034, %v2138
    %v2191 = vmul.f32 %v2035, %v2139
    %v2192 = vmul.f32 %v2036, %v2140
    %v2193 = vmul.f32 %v2037, %v2141
    %v2194 = vmul.f32 %v2038, %v2142
    %v2195 = vmul.f32 %v2039, %v2143
    %v2196 = vmul.f32 %v2040, %v2144
    %v2197 = vmul.f32 %v2041, %v2145
    %v2198 = vmul.f32 %v2042, %v2146
    %v2199 = vmul.f32 %v2043, %v2147
    %v2200 = vmul.f32 %v2044, %v2148
    %v2201 = vmul.f32 %v2045, %v2149
    %v2202 = vmul.f32 %v2046, %v2150
    %v2203 = vmul.f32 %v2047, %v2151
    %v2204 = vmul.f32 %v2048, %v2152
    %v2205 = vmul.f32 %v2049, %v2153
    %v2206 = vmul.f32 %v2050, %v2154
    %v2207 = vmul.f32 %v2051, %v2155
    %v2208 = vmul.f32 %v2052, %v2156
    %v2209 = vmul.f32 %v2053, %v2157
    %v2210 = vmul.f32 %v2054, %v2158
    %v2211 = vmul.f32 %v2055, %v2159
    %v2212 = vmul.f32 %v2056, %v2160
    %v2213 = vmul.f32 %v2057, %v2161
    %v2214 = vmul.f32 %v2058, %v2162
    %v2215 = vmul.f32 %v2059, %v2163
    %v2216 = vmul.f32 %v2060, %v2164
    %v2217 = vmul.f32 %v2061, %v2165
    %v2218 = vmul.f32 %v2062, %v2166
    %v2219 = vmul.f32 %v2063, %v2167
    %v2220 = vmul.f32 %v2064, %v2168
    %v2221 = vmul.f32 %v2065, %v2169
    %v2222 = vld [vmem:[%s3] sm:$0xff]
    %v2223 = vld [vmem:[%s3 + $0x8] sm:$0xff]
    %v2224 = vld [vmem:[%s3 + $0x10] sm:$0xff]
    %v2225 = vld [vmem:[%s3 + $0x18] sm:$0xff]
    %v2226 = vld [vmem:[%s3 + $0x20] sm:$0xff]
    %v2227 = vld [vmem:[%s3 + $0x28] sm:$0xff]
    %v2228 = vld [vmem:[%s3 + $0x30] sm:$0xff]
    %v2229 = vld [vmem:[%s3 + $0x38] sm:$0xff]
    %v2230 = vld [vmem:[%s3 + $0x40] sm:$0xff]
    %v2231 = vld [vmem:[%s3 + $0x48] sm:$0xff]
    %v2232 = vld [vmem:[%s3 + $0x50] sm:$0xff]
    %v2233 = vld [vmem:[%s3 + $0x58] sm:$0xff]
    %v2234 = vld [vmem:[%s3 + $0x60] sm:$0xff]
    %v2235 = vld [vmem:[%s3 + $0x68] sm:$0xff]
    %v2236 = vld [vmem:[%s3 + $0x70] sm:$0xff]
    %v2237 = vld [vmem:[%s3 + $0x78] sm:$0xff]
    %v2238 = vld [vmem:[%s3 + $0x80] sm:$0xff]
    %v2239 = vld [vmem:[%s3 + $0x88] sm:$0xff]
    %v2240 = vld [vmem:[%s3 + $0x90] sm:$0xff]
    %v2241 = vld [vmem:[%s3 + $0x98] sm:$0xff]
    %v2242 = vld [vmem:[%s3 + $0xa0] sm:$0xff]
    %v2243 = vld [vmem:[%s3 + $0xa8] sm:$0xff]
    %v2244 = vld [vmem:[%s3 + $0xb0] sm:$0xff]
    %v2245 = vld [vmem:[%s3 + $0xb8] sm:$0xff]
    %v2246 = vld [vmem:[%s3 + $0xc0] sm:$0xff]
    %v2247 = vld [vmem:[%s3 + $0xc8] sm:$0xff]
    %v2248 = vld [vmem:[%s3 + $0xd0] sm:$0xff]
    %v2249 = vld [vmem:[%s3 + $0xd8] sm:$0xff]
    %v2250 = vld [vmem:[%s3 + $0xe0] sm:$0xff]
    %v2251 = vld [vmem:[%s3 + $0xe8] sm:$0xff]
    %v2252 = vld [vmem:[%s3 + $0xf0] sm:$0xff]
    %v2253 = vld [vmem:[%s3 + $0xf8] sm:$0xff]
    %v2254 = vld [vmem:[%s3 + $0x100] sm:$0xff]
    %v2255 = vld [vmem:[%s3 + $0x108] sm:$0xff]
    %v2256 = vld [vmem:[%s3 + $0x110] sm:$0xff]
    %v2257 = vld [vmem:[%s3 + $0x118] sm:$0xff]
    %v2258 = vld [vmem:[%s3 + $0x120] sm:$0xff]
    %v2259 = vld [vmem:[%s3 + $0x128] sm:$0xff]
    %v2260 = vld [vmem:[%s3 + $0x130] sm:$0xff]
    %v2261 = vld [vmem:[%s3 + $0x138] sm:$0xff]
    %v2262 = vld [vmem:[%s3 + $0x140] sm:$0xff]
    %v2263 = vld [vmem:[%s3 + $0x148] sm:$0xff]
    %v2264 = vld [vmem:[%s3 + $0x150] sm:$0xff]
    %v2265 = vld [vmem:[%s3 + $0x158] sm:$0xff]
    %v2266 = vld [vmem:[%s3 + $0x160] sm:$0xff]
    %v2267 = vld [vmem:[%s3 + $0x168] sm:$0xff]
    %v2268 = vld [vmem:[%s3 + $0x170] sm:$0xff]
    %v2269 = vld [vmem:[%s3 + $0x178] sm:$0xff]
    %v2270 = vld [vmem:[%s3 + $0x180] sm:$0xff]
    %v2271 = vld [vmem:[%s3 + $0x188] sm:$0xff]
    %v2272 = vld [vmem:[%s3 + $0x190] sm:$0xff]
    %v2273 = vld [vmem:[%s3 + $0x198] sm:$0xff]
    %v2274 = vmul.f32 %v1806, %v2170
    %v2275 = vmul.f32 %v1807, %v2171
    %v2276 = vmul.f32 %v1808, %v2172
    %v2277 = vmul.f32 %v1809, %v2173
    %v2278 = vmul.f32 %v1810, %v2174
    %v2279 = vmul.f32 %v1811, %v2175
    %v2280 = vmul.f32 %v1812, %v2176
    %v2281 = vmul.f32 %v1813, %v2177
    %v2282 = vmul.f32 %v1814, %v2178
    %v2283 = vmul.f32 %v1815, %v2179
    %v2284 = vmul.f32 %v1816, %v2180
    %v2285 = vmul.f32 %v1817, %v2181
    %v2286 = vmul.f32 %v1818, %v2182
    %v2287 = vmul.f32 %v1819, %v2183
    %v2288 = vmul.f32 %v1820, %v2184
    %v2289 = vmul.f32 %v1821, %v2185
    %v2290 = vmul.f32 %v1822, %v2186
    %v2291 = vmul.f32 %v1823, %v2187
    %v2292 = vmul.f32 %v1824, %v2188
    %v2293 = vmul.f32 %v1825, %v2189
    %v2294 = vmul.f32 %v1826, %v2190
    %v2295 = vmul.f32 %v1827, %v2191
    %v2296 = vmul.f32 %v1828, %v2192
    %v2297 = vmul.f32 %v1829, %v2193
    %v2298 = vmul.f32 %v1830, %v2194
    %v2299 = vmul.f32 %v1831, %v2195
    %v2300 = vmul.f32 %v1832, %v2196
    %v2301 = vmul.f32 %v1833, %v2197
    %v2302 = vmul.f32 %v1834, %v2198
    %v2303 = vmul.f32 %v1835, %v2199
    %v2304 = vmul.f32 %v1836, %v2200
    %v2305 = vmul.f32 %v1837, %v2201
    %v2306 = vmul.f32 %v1838, %v2202
    %v2307 = vmul.f32 %v1839, %v2203
    %v2308 = vmul.f32 %v1840, %v2204
    %v2309 = vmul.f32 %v1841, %v2205
    %v2310 = vmul.f32 %v1842, %v2206
    %v2311 = vmul.f32 %v1843, %v2207
    %v2312 = vmul.f32 %v1844, %v2208
    %v2313 = vmul.f32 %v1845, %v2209
    %v2314 = vmul.f32 %v1846, %v2210
    %v2315 = vmul.f32 %v1847, %v2211
    %v2316 = vmul.f32 %v1848, %v2212
    %v2317 = vmul.f32 %v1849, %v2213
    %v2318 = vmul.f32 %v1850, %v2214
    %v2319 = vmul.f32 %v1851, %v2215
    %v2320 = vmul.f32 %v1852, %v2216
    %v2321 = vmul.f32 %v1853, %v2217
    %v2322 = vmul.f32 %v1854, %v2218
    %v2323 = vmul.f32 %v1855, %v2219
    %v2324 = vmul.f32 %v1856, %v2220
    %v2325 = vmul.f32 %v1857, %v2221
    %v2326 = vsub.f32 %v2222, %v2274
    %v2327 = vsub.f32 %v2223, %v2275
    %v2328 = vsub.f32 %v2224, %v2276
    %v2329 = vsub.f32 %v2225, %v2277
    %v2330 = vsub.f32 %v2226, %v2278
    %v2331 = vsub.f32 %v2227, %v2279
    %v2332 = vsub.f32 %v2228, %v2280
    %v2333 = vsub.f32 %v2229, %v2281
    %v2334 = vsub.f32 %v2230, %v2282
    %v2335 = vsub.f32 %v2231, %v2283
    %v2336 = vsub.f32 %v2232, %v2284
    %v2337 = vsub.f32 %v2233, %v2285
    %v2338 = vsub.f32 %v2234, %v2286
    %v2339 = vsub.f32 %v2235, %v2287
    %v2340 = vsub.f32 %v2236, %v2288
    %v2341 = vsub.f32 %v2237, %v2289
    %v2342 = vsub.f32 %v2238, %v2290
    %v2343 = vsub.f32 %v2239, %v2291
    %v2344 = vsub.f32 %v2240, %v2292
    %v2345 = vsub.f32 %v2241, %v2293
    %v2346 = vsub.f32 %v2242, %v2294
    %v2347 = vsub.f32 %v2243, %v2295
    %v2348 = vsub.f32 %v2244, %v2296
    %v2349 = vsub.f32 %v2245, %v2297
    %v2350 = vsub.f32 %v2246, %v2298
    %v2351 = vsub.f32 %v2247, %v2299
    %v2352 = vsub.f32 %v2248, %v2300
    %v2353 = vsub.f32 %v2249, %v2301
    %v2354 = vsub.f32 %v2250, %v2302
    %v2355 = vsub.f32 %v2251, %v2303
    %v2356 = vsub.f32 %v2252, %v2304
    %v2357 = vsub.f32 %v2253, %v2305
    %v2358 = vsub.f32 %v2254, %v2306
    %v2359 = vsub.f32 %v2255, %v2307
    %v2360 = vsub.f32 %v2256, %v2308
    %v2361 = vsub.f32 %v2257, %v2309
    %v2362 = vsub.f32 %v2258, %v2310
    %v2363 = vsub.f32 %v2259, %v2311
    %v2364 = vsub.f32 %v2260, %v2312
    %v2365 = vsub.f32 %v2261, %v2313
    %v2366 = vsub.f32 %v2262, %v2314
    %v2367 = vsub.f32 %v2263, %v2315
    %v2368 = vsub.f32 %v2264, %v2316
    %v2369 = vsub.f32 %v2265, %v2317
    %v2370 = vsub.f32 %v2266, %v2318
    %v2371 = vsub.f32 %v2267, %v2319
    %v2372 = vsub.f32 %v2268, %v2320
    %v2373 = vsub.f32 %v2269, %v2321
    %v2374 = vsub.f32 %v2270, %v2322
    %v2375 = vsub.f32 %v2271, %v2323
    %v2376 = vsub.f32 %v2272, %v2324
    %v2377 = vsub.f32 %v2273, %v2325
    %v2378 = vld [vmem:[%s1] sm:$0xff]
    %v2379 = vld [vmem:[%s1 + $0x8] sm:$0xff]
    %v2380 = vld [vmem:[%s1 + $0x10] sm:$0xff]
    %v2381 = vld [vmem:[%s1 + $0x18] sm:$0xff]
    %v2382 = vld [vmem:[%s1 + $0x20] sm:$0xff]
    %v2383 = vld [vmem:[%s1 + $0x28] sm:$0xff]
    %v2384 = vld [vmem:[%s1 + $0x30] sm:$0xff]
    %v2385 = vld [vmem:[%s1 + $0x38] sm:$0xff]
    %v2386 = vld [vmem:[%s1 + $0x40] sm:$0xff]
    %v2387 = vld [vmem:[%s1 + $0x48] sm:$0xff]
    %v2388 = vld [vmem:[%s1 + $0x50] sm:$0xff]
    %v2389 = vld [vmem:[%s1 + $0x58] sm:$0xff]
    %v2390 = vld [vmem:[%s1 + $0x60] sm:$0xff]
    %v2391 = vld [vmem:[%s1 + $0x68] sm:$0xff]
    %v2392 = vld [vmem:[%s1 + $0x70] sm:$0xff]
    %v2393 = vld [vmem:[%s1 + $0x78] sm:$0xff]
    %v2394 = vld [vmem:[%s1 + $0x80] sm:$0xff]
    %v2395 = vld [vmem:[%s1 + $0x88] sm:$0xff]
    %v2396 = vld [vmem:[%s1 + $0x90] sm:$0xff]
    %v2397 = vld [vmem:[%s1 + $0x98] sm:$0xff]
    %v2398 = vld [vmem:[%s1 + $0xa0] sm:$0xff]
    %v2399 = vld [vmem:[%s1 + $0xa8] sm:$0xff]
    %v2400 = vld [vmem:[%s1 + $0xb0] sm:$0xff]
    %v2401 = vld [vmem:[%s1 + $0xb8] sm:$0xff]
    %v2402 = vld [vmem:[%s1 + $0xc0] sm:$0xff]
    %v2403 = vld [vmem:[%s1 + $0xc8] sm:$0xff]
    %v2404 = vld [vmem:[%s1 + $0xd0] sm:$0xff]
    %v2405 = vld [vmem:[%s1 + $0xd8] sm:$0xff]
    %v2406 = vld [vmem:[%s1 + $0xe0] sm:$0xff]
    %v2407 = vld [vmem:[%s1 + $0xe8] sm:$0xff]
    %v2408 = vld [vmem:[%s1 + $0xf0] sm:$0xff]
    %v2409 = vld [vmem:[%s1 + $0xf8] sm:$0xff]
    %v2410 = vld [vmem:[%s1 + $0x100] sm:$0xff]
    %v2411 = vld [vmem:[%s1 + $0x108] sm:$0xff]
    %v2412 = vld [vmem:[%s1 + $0x110] sm:$0xff]
    %v2413 = vld [vmem:[%s1 + $0x118] sm:$0xff]
    %v2414 = vld [vmem:[%s1 + $0x120] sm:$0xff]
    %v2415 = vld [vmem:[%s1 + $0x128] sm:$0xff]
    %v2416 = vld [vmem:[%s1 + $0x130] sm:$0xff]
    %v2417 = vld [vmem:[%s1 + $0x138] sm:$0xff]
    %v2418 = vld [vmem:[%s1 + $0x140] sm:$0xff]
    %v2419 = vld [vmem:[%s1 + $0x148] sm:$0xff]
    %v2420 = vld [vmem:[%s1 + $0x150] sm:$0xff]
    %v2421 = vld [vmem:[%s1 + $0x158] sm:$0xff]
    %v2422 = vld [vmem:[%s1 + $0x160] sm:$0xff]
    %v2423 = vld [vmem:[%s1 + $0x168] sm:$0xff]
    %v2424 = vld [vmem:[%s1 + $0x170] sm:$0xff]
    %v2425 = vld [vmem:[%s1 + $0x178] sm:$0xff]
    %v2426 = vld [vmem:[%s1 + $0x180] sm:$0xff]
    %v2427 = vld [vmem:[%s1 + $0x188] sm:$0xff]
    %v2428 = vld [vmem:[%s1 + $0x190] sm:$0xff]
    %v2429 = vld [vmem:[%s1 + $0x198] sm:$0xff]
    %v2430 = vld [vmem:[%s1 + $0x1a0] sm:$0xff]
    %v2431 = vld [vmem:[%s1 + $0x1a8] sm:$0xff]
    %v2432 = vld [vmem:[%s1 + $0x1b0] sm:$0xff]
    %v2433 = vld [vmem:[%s1 + $0x1b8] sm:$0xff]
    %v2434 = vld [vmem:[%s1 + $0x1c0] sm:$0xff]
    %v2435 = vld [vmem:[%s1 + $0x1c8] sm:$0xff]
    %v2436 = vld [vmem:[%s1 + $0x1d0] sm:$0xff]
    %v2437 = vld [vmem:[%s1 + $0x1d8] sm:$0xff]
    %v2438 = vld [vmem:[%s1 + $0x1e0] sm:$0xff]
    %v2439 = vld [vmem:[%s1 + $0x1e8] sm:$0xff]
    %v2440 = vld [vmem:[%s1 + $0x1f0] sm:$0xff]
    %v2441 = vld [vmem:[%s1 + $0x1f8] sm:$0xff]
    %2443 = vset.pattern.permute.xlu0 0
    %2444 = vperm.xlu0 %2443, %v2170
    %v2445 = vpop.permute.xlu0 %2444
    %2448 = vset.pattern.permute.xlu0 0
    %2449 = vperm.xlu0 %2448, %v2171
    %v2450 = vpop.permute.xlu0 %2449
    %2453 = vset.pattern.permute.xlu0 0
    %2454 = vperm.xlu0 %2453, %v2172
    %v2455 = vpop.permute.xlu0 %2454
    %2458 = vset.pattern.permute.xlu0 0
    %2459 = vperm.xlu0 %2458, %v2173
    %v2460 = vpop.permute.xlu0 %2459
    %2463 = vset.pattern.permute.xlu0 0
    %2464 = vperm.xlu0 %2463, %v2174
    %v2465 = vpop.permute.xlu0 %2464
    %2468 = vset.pattern.permute.xlu0 0
    %2469 = vperm.xlu0 %2468, %v2175
    %v2470 = vpop.permute.xlu0 %2469
    %2473 = vset.pattern.permute.xlu0 0
    %2474 = vperm.xlu0 %2473, %v2176
    %v2475 = vpop.permute.xlu0 %2474
    %2478 = vset.pattern.permute.xlu0 0
    %2479 = vperm.xlu0 %2478, %v2177
    %v2480 = vpop.permute.xlu0 %2479
    %2483 = vset.pattern.permute.xlu0 0
    %2484 = vperm.xlu0 %2483, %v2178
    %v2485 = vpop.permute.xlu0 %2484
    %2488 = vset.pattern.permute.xlu0 0
    %2489 = vperm.xlu0 %2488, %v2179
    %v2490 = vpop.permute.xlu0 %2489
    %2493 = vset.pattern.permute.xlu0 0
    %2494 = vperm.xlu0 %2493, %v2180
    %v2495 = vpop.permute.xlu0 %2494
    %2498 = vset.pattern.permute.xlu0 0
    %2499 = vperm.xlu0 %2498, %v2181
    %v2500 = vpop.permute.xlu0 %2499
    %2503 = vset.pattern.permute.xlu0 0
    %2504 = vperm.xlu0 %2503, %v2182
    %v2505 = vpop.permute.xlu0 %2504
    %2508 = vset.pattern.permute.xlu0 0
    %2509 = vperm.xlu0 %2508, %v2183
    %v2510 = vpop.permute.xlu0 %2509
    %2513 = vset.pattern.permute.xlu0 0
    %2514 = vperm.xlu0 %2513, %v2184
    %v2515 = vpop.permute.xlu0 %2514
    %2518 = vset.pattern.permute.xlu0 0
    %2519 = vperm.xlu0 %2518, %v2185
    %v2520 = vpop.permute.xlu0 %2519
    %2523 = vset.pattern.permute.xlu0 0
    %2524 = vperm.xlu0 %2523, %v2186
    %v2525 = vpop.permute.xlu0 %2524
    %2528 = vset.pattern.permute.xlu0 0
    %2529 = vperm.xlu0 %2528, %v2187
    %v2530 = vpop.permute.xlu0 %2529
    %2533 = vset.pattern.permute.xlu0 0
    %2534 = vperm.xlu0 %2533, %v2188
    %v2535 = vpop.permute.xlu0 %2534
    %2538 = vset.pattern.permute.xlu0 0
    %2539 = vperm.xlu0 %2538, %v2189
    %v2540 = vpop.permute.xlu0 %2539
    %2543 = vset.pattern.permute.xlu0 0
    %2544 = vperm.xlu0 %2543, %v2190
    %v2545 = vpop.permute.xlu0 %2544
    %2548 = vset.pattern.permute.xlu0 0
    %2549 = vperm.xlu0 %2548, %v2191
    %v2550 = vpop.permute.xlu0 %2549
    %2553 = vset.pattern.permute.xlu0 0
    %2554 = vperm.xlu0 %2553, %v2192
    %v2555 = vpop.permute.xlu0 %2554
    %2558 = vset.pattern.permute.xlu0 0
    %2559 = vperm.xlu0 %2558, %v2193
    %v2560 = vpop.permute.xlu0 %2559
    %2563 = vset.pattern.permute.xlu0 0
    %2564 = vperm.xlu0 %2563, %v2194
    %v2565 = vpop.permute.xlu0 %2564
    %2568 = vset.pattern.permute.xlu0 0
    %2569 = vperm.xlu0 %2568, %v2195
    %v2570 = vpop.permute.xlu0 %2569
    %2573 = vset.pattern.permute.xlu0 0
    %2574 = vperm.xlu0 %2573, %v2196
    %v2575 = vpop.permute.xlu0 %2574
    %2578 = vset.pattern.permute.xlu0 0
    %2579 = vperm.xlu0 %2578, %v2197
    %v2580 = vpop.permute.xlu0 %2579
    %2583 = vset.pattern.permute.xlu0 0
    %2584 = vperm.xlu0 %2583, %v2198
    %v2585 = vpop.permute.xlu0 %2584
    %2588 = vset.pattern.permute.xlu0 0
    %2589 = vperm.xlu0 %2588, %v2199
    %v2590 = vpop.permute.xlu0 %2589
    %2593 = vset.pattern.permute.xlu0 0
    %2594 = vperm.xlu0 %2593, %v2200
    %v2595 = vpop.permute.xlu0 %2594
    %2598 = vset.pattern.permute.xlu0 0
    %2599 = vperm.xlu0 %2598, %v2201
    %v2600 = vpop.permute.xlu0 %2599
    %2603 = vset.pattern.permute.xlu0 0
    %2604 = vperm.xlu0 %2603, %v2202
    %v2605 = vpop.permute.xlu0 %2604
    %2608 = vset.pattern.permute.xlu0 0
    %2609 = vperm.xlu0 %2608, %v2203
    %v2610 = vpop.permute.xlu0 %2609
    %2613 = vset.pattern.permute.xlu0 0
    %2614 = vperm.xlu0 %2613, %v2204
    %v2615 = vpop.permute.xlu0 %2614
    %2618 = vset.pattern.permute.xlu0 0
    %2619 = vperm.xlu0 %2618, %v2205
    %v2620 = vpop.permute.xlu0 %2619
    %2623 = vset.pattern.permute.xlu0 0
    %2624 = vperm.xlu0 %2623, %v2206
    %v2625 = vpop.permute.xlu0 %2624
    %2628 = vset.pattern.permute.xlu0 0
    %2629 = vperm.xlu0 %2628, %v2207
    %v2630 = vpop.permute.xlu0 %2629
    %2633 = vset.pattern.permute.xlu0 0
    %2634 = vperm.xlu0 %2633, %v2208
    %v2635 = vpop.permute.xlu0 %2634
    %2638 = vset.pattern.permute.xlu0 0
    %2639 = vperm.xlu0 %2638, %v2209
    %v2640 = vpop.permute.xlu0 %2639
    %2643 = vset.pattern.permute.xlu0 0
    %2644 = vperm.xlu0 %2643, %v2210
    %v2645 = vpop.permute.xlu0 %2644
    %2648 = vset.pattern.permute.xlu0 0
    %2649 = vperm.xlu0 %2648, %v2211
    %v2650 = vpop.permute.xlu0 %2649
    %2653 = vset.pattern.permute.xlu0 0
    %2654 = vperm.xlu0 %2653, %v2212
    %v2655 = vpop.permute.xlu0 %2654
    %2658 = vset.pattern.permute.xlu0 0
    %2659 = vperm.xlu0 %2658, %v2213
    %v2660 = vpop.permute.xlu0 %2659
    %2663 = vset.pattern.permute.xlu0 0
    %2664 = vperm.xlu0 %2663, %v2214
    %v2665 = vpop.permute.xlu0 %2664
    %2668 = vset.pattern.permute.xlu0 0
    %2669 = vperm.xlu0 %2668, %v2215
    %v2670 = vpop.permute.xlu0 %2669
    %2673 = vset.pattern.permute.xlu0 0
    %2674 = vperm.xlu0 %2673, %v2216
    %v2675 = vpop.permute.xlu0 %2674
    %2678 = vset.pattern.permute.xlu0 0
    %2679 = vperm.xlu0 %2678, %v2217
    %v2680 = vpop.permute.xlu0 %2679
    %2683 = vset.pattern.permute.xlu0 0
    %2684 = vperm.xlu0 %2683, %v2218
    %v2685 = vpop.permute.xlu0 %2684
    %2688 = vset.pattern.permute.xlu0 0
    %2689 = vperm.xlu0 %2688, %v2219
    %v2690 = vpop.permute.xlu0 %2689
    %2693 = vset.pattern.permute.xlu0 0
    %2694 = vperm.xlu0 %2693, %v2220
    %v2695 = vpop.permute.xlu0 %2694
    %2698 = vset.pattern.permute.xlu0 0
    %2699 = vperm.xlu0 %2698, %v2221
    %v2700 = vpop.permute.xlu0 %2699
    %v2702 = vmul.f32 %v37, %v2445
    %v2703 = vmul.f32 %v38, %v2445
    %v2704 = vmul.f32 %v39, %v2445
    %v2705 = vmul.f32 %v40, %v2445
    %v2706 = vmul.f32 %v41, %v2445
    %v2707 = vmul.f32 %v42, %v2445
    %v2708 = vmul.f32 %v43, %v2445
    %v2709 = vmul.f32 %v44, %v2450
    %v2710 = vmul.f32 %v45, %v2450
    %v2711 = vmul.f32 %v46, %v2450
    %v2712 = vmul.f32 %v47, %v2450
    %v2713 = vmul.f32 %v48, %v2450
    %v2714 = vmul.f32 %v49, %v2450
    %v2715 = vmul.f32 %v50, %v2450
    %v2716 = vmul.f32 %v51, %v2455
    %v2717 = vmul.f32 %v52, %v2455
    %v2718 = vmul.f32 %v53, %v2455
    %v2719 = vmul.f32 %v54, %v2455
    %v2720 = vmul.f32 %v55, %v2455
    %v2721 = vmul.f32 %v56, %v2455
    %v2722 = vmul.f32 %v57, %v2455
    %v2723 = vmul.f32 %v58, %v2460
    %v2724 = vmul.f32 %v59, %v2460
    %v2725 = vmul.f32 %v60, %v2460
    %v2726 = vmul.f32 %v61, %v2460
    %v2727 = vmul.f32 %v62, %v2460
    %v2728 = vmul.f32 %v63, %v2460
    %v2729 = vmul.f32 %v64, %v2460
    %v2730 = vmul.f32 %v65, %v2465
    %v2731 = vmul.f32 %v66, %v2465
    %v2732 = vmul.f32 %v67, %v2465
    %v2733 = vmul.f32 %v68, %v2465
    %v2734 = vmul.f32 %v69, %v2465
    %v2735 = vmul.f32 %v70, %v2465
    %v2736 = vmul.f32 %v71, %v2465
    %v2737 = vmul.f32 %v72, %v2470
    %v2738 = vmul.f32 %v73, %v2470
    %v2739 = vmul.f32 %v74, %v2470
    %v2740 = vmul.f32 %v75, %v2470
    %v2741 = vmul.f32 %v76, %v2470
    %v2742 = vmul.f32 %v77, %v2470
    %v2743 = vmul.f32 %v78, %v2470
    %v2744 = vmul.f32 %v79, %v2475
    %v2745 = vmul.f32 %v80, %v2475
    %v2746 = vmul.f32 %v81, %v2475
    %v2747 = vmul.f32 %v82, %v2475
    %v2748 = vmul.f32 %v83, %v2475
    %v2749 = vmul.f32 %v84, %v2475
    %v2750 = vmul.f32 %v85, %v2475
    %v2751 = vmul.f32 %v86, %v2480
    %v2752 = vmul.f32 %v87, %v2480
    %v2753 = vmul.f32 %v88, %v2480
    %v2754 = vmul.f32 %v89, %v2480
    %v2755 = vmul.f32 %v90, %v2480
    %v2756 = vmul.f32 %v91, %v2480
    %v2757 = vmul.f32 %v92, %v2480
    %v2758 = vmul.f32 %v93, %v2485
    %v2759 = vmul.f32 %v94, %v2485
    %v2760 = vmul.f32 %v95, %v2485
    %v2761 = vmul.f32 %v96, %v2485
    %v2762 = vmul.f32 %v97, %v2485
    %v2763 = vmul.f32 %v98, %v2485
    %v2764 = vmul.f32 %v99, %v2485
    %v2765 = vmul.f32 %v100, %v2490
    %v2766 = vmul.f32 %v101, %v2490
    %v2767 = vmul.f32 %v102, %v2490
    %v2768 = vmul.f32 %v103, %v2490
    %v2769 = vmul.f32 %v104, %v2490
    %v2770 = vmul.f32 %v105, %v2490
    %v2771 = vmul.f32 %v106, %v2490
    %v2772 = vmul.f32 %v107, %v2495
    %v2773 = vmul.f32 %v108, %v2495
    %v2774 = vmul.f32 %v109, %v2495
    %v2775 = vmul.f32 %v110, %v2495
    %v2776 = vmul.f32 %v111, %v2495
    %v2777 = vmul.f32 %v112, %v2495
    %v2778 = vmul.f32 %v113, %v2495
    %v2779 = vmul.f32 %v114, %v2500
    %v2780 = vmul.f32 %v115, %v2500
    %v2781 = vmul.f32 %v116, %v2500
    %v2782 = vmul.f32 %v117, %v2500
    %v2783 = vmul.f32 %v118, %v2500
    %v2784 = vmul.f32 %v119, %v2500
    %v2785 = vmul.f32 %v120, %v2500
    %v2786 = vmul.f32 %v121, %v2505
    %v2787 = vmul.f32 %v122, %v2505
    %v2788 = vmul.f32 %v123, %v2505
    %v2789 = vmul.f32 %v124, %v2505
    %v2790 = vmul.f32 %v125, %v2505
    %v2791 = vmul.f32 %v126, %v2505
    %v2792 = vmul.f32 %v127, %v2505
    %v2793 = vmul.f32 %v128, %v2510
    %v2794 = vmul.f32 %v129, %v2510
    %v2795 = vmul.f32 %v130, %v2510
    %v2796 = vmul.f32 %v131, %v2510
    %v2797 = vmul.f32 %v132, %v2510
    %v2798 = vmul.f32 %v133, %v2510
    %v2799 = vmul.f32 %v134, %v2510
    %v2800 = vmul.f32 %v135, %v2515
    %v2801 = vmul.f32 %v136, %v2515
    %v2802 = vmul.f32 %v137, %v2515
    %v2803 = vmul.f32 %v138, %v2515
    %v2804 = vmul.f32 %v139, %v2515
    %v2805 = vmul.f32 %v140, %v2515
    %v2806 = vmul.f32 %v141, %v2515
    %v2807 = vmul.f32 %v142, %v2520
    %v2808 = vmul.f32 %v143, %v2520
    %v2809 = vmul.f32 %v144, %v2520
    %v2810 = vmul.f32 %v145, %v2520
    %v2811 = vmul.f32 %v146, %v2520
    %v2812 = vmul.f32 %v147, %v2520
    %v2813 = vmul.f32 %v148, %v2520
    %v2814 = vmul.f32 %v149, %v2525
    %v2815 = vmul.f32 %v150, %v2525
    %v2816 = vmul.f32 %v151, %v2525
    %v2817 = vmul.f32 %v152, %v2525
    %v2818 = vmul.f32 %v153, %v2525
    %v2819 = vmul.f32 %v154, %v2525
    %v2820 = vmul.f32 %v155, %v2525
    %v2821 = vmul.f32 %v156, %v2530
    %v2822 = vmul.f32 %v157, %v2530
    %v2823 = vmul.f32 %v158, %v2530
    %v2824 = vmul.f32 %v159, %v2530
    %v2825 = vmul.f32 %v160, %v2530
    %v2826 = vmul.f32 %v161, %v2530
    %v2827 = vmul.f32 %v162, %v2530
    %v2828 = vmul.f32 %v163, %v2535
    %v2829 = vmul.f32 %v164, %v2535
    %v2830 = vmul.f32 %v165, %v2535
    %v2831 = vmul.f32 %v166, %v2535
    %v2832 = vmul.f32 %v167, %v2535
    %v2833 = vmul.f32 %v168, %v2535
    %v2834 = vmul.f32 %v169, %v2535
    %v2835 = vmul.f32 %v170, %v2540
    %v2836 = vmul.f32 %v171, %v2540
    %v2837 = vmul.f32 %v172, %v2540
    %v2838 = vmul.f32 %v173, %v2540
    %v2839 = vmul.f32 %v174, %v2540
    %v2840 = vmul.f32 %v175, %v2540
    %v2841 = vmul.f32 %v176, %v2540
    %v2842 = vmul.f32 %v177, %v2545
    %v2843 = vmul.f32 %v178, %v2545
    %v2844 = vmul.f32 %v179, %v2545
    %v2845 = vmul.f32 %v180, %v2545
    %v2846 = vmul.f32 %v181, %v2545
    %v2847 = vmul.f32 %v182, %v2545
    %v2848 = vmul.f32 %v183, %v2545
    %v2849 = vmul.f32 %v184, %v2550
    %v2850 = vmul.f32 %v185, %v2550
    %v2851 = vmul.f32 %v186, %v2550
    %v2852 = vmul.f32 %v187, %v2550
    %v2853 = vmul.f32 %v188, %v2550
    %v2854 = vmul.f32 %v189, %v2550
    %v2855 = vmul.f32 %v190, %v2550
    %v2856 = vmul.f32 %v191, %v2555
    %v2857 = vmul.f32 %v192, %v2555
    %v2858 = vmul.f32 %v193, %v2555
    %v2859 = vmul.f32 %v194, %v2555
    %v2860 = vmul.f32 %v195, %v2555
    %v2861 = vmul.f32 %v196, %v2555
    %v2862 = vmul.f32 %v197, %v2555
    %v2863 = vmul.f32 %v198, %v2560
    %v2864 = vmul.f32 %v199, %v2560
    %v2865 = vmul.f32 %v200, %v2560
    %v2866 = vmul.f32 %v201, %v2560
    %v2867 = vmul.f32 %v202, %v2560
    %v2868 = vmul.f32 %v203, %v2560
    %v2869 = vmul.f32 %v204, %v2560
    %v2870 = vmul.f32 %v205, %v2565
    %v2871 = vmul.f32 %v206, %v2565
    %v2872 = vmul.f32 %v207, %v2565
    %v2873 = vmul.f32 %v208, %v2565
    %v2874 = vmul.f32 %v209, %v2565
    %v2875 = vmul.f32 %v210, %v2565
    %v2876 = vmul.f32 %v211, %v2565
    %v2877 = vmul.f32 %v212, %v2570
    %v2878 = vmul.f32 %v213, %v2570
    %v2879 = vmul.f32 %v214, %v2570
    %v2880 = vmul.f32 %v215, %v2570
    %v2881 = vmul.f32 %v216, %v2570
    %v2882 = vmul.f32 %v217, %v2570
    %v2883 = vmul.f32 %v218, %v2570
    %v2884 = vmul.f32 %v219, %v2575
    %v2885 = vmul.f32 %v220, %v2575
    %v2886 = vmul.f32 %v221, %v2575
    %v2887 = vmul.f32 %v222, %v2575
    %v2888 = vmul.f32 %v223, %v2575
    %v2889 = vmul.f32 %v224, %v2575
    %v2890 = vmul.f32 %v225, %v2575
    %v2891 = vmul.f32 %v226, %v2580
    %v2892 = vmul.f32 %v227, %v2580
    %v2893 = vmul.f32 %v228, %v2580
    %v2894 = vmul.f32 %v229, %v2580
    %v2895 = vmul.f32 %v230, %v2580
    %v2896 = vmul.f32 %v231, %v2580
    %v2897 = vmul.f32 %v232, %v2580
    %v2898 = vmul.f32 %v233, %v2585
    %v2899 = vmul.f32 %v234, %v2585
    %v2900 = vmul.f32 %v235, %v2585
    %v2901 = vmul.f32 %v236, %v2585
    %v2902 = vmul.f32 %v237, %v2585
    %v2903 = vmul.f32 %v238, %v2585
    %v2904 = vmul.f32 %v239, %v2585
    %v2905 = vmul.f32 %v240, %v2590
    %v2906 = vmul.f32 %v241, %v2590
    %v2907 = vmul.f32 %v242, %v2590
    %v2908 = vmul.f32 %v243, %v2590
    %v2909 = vmul.f32 %v244, %v2590
    %v2910 = vmul.f32 %v245, %v2590
    %v2911 = vmul.f32 %v246, %v2590
    %v2912 = vmul.f32 %v247, %v2595
    %v2913 = vmul.f32 %v248, %v2595
    %v2914 = vmul.f32 %v249, %v2595
    %v2915 = vmul.f32 %v250, %v2595
    %v2916 = vmul.f32 %v251, %v2595
    %v2917 = vmul.f32 %v252, %v2595
    %v2918 = vmul.f32 %v253, %v2595
    %v2919 = vmul.f32 %v254, %v2600
    %v2920 = vmul.f32 %v255, %v2600
    %v2921 = vmul.f32 %v256, %v2600
    %v2922 = vmul.f32 %v257, %v2600
    %v2923 = vmul.f32 %v258, %v2600
    %v2924 = vmul.f32 %v259, %v2600
    %v2925 = vmul.f32 %v260, %v2600
    %v2926 = vmul.f32 %v261, %v2605
    %v2927 = vmul.f32 %v262, %v2605
    %v2928 = vmul.f32 %v263, %v2605
    %v2929 = vmul.f32 %v264, %v2605
    %v2930 = vmul.f32 %v265, %v2605
    %v2931 = vmul.f32 %v266, %v2605
    %v2932 = vmul.f32 %v267, %v2605
    %v2933 = vmul.f32 %v268, %v2610
    %v2934 = vmul.f32 %v269, %v2610
    %v2935 = vmul.f32 %v270, %v2610
    %v2936 = vmul.f32 %v271, %v2610
    %v2937 = vmul.f32 %v272, %v2610
    %v2938 = vmul.f32 %v273, %v2610
    %v2939 = vmul.f32 %v274, %v2610
    %v2940 = vmul.f32 %v275, %v2615
    %v2941 = vmul.f32 %v276, %v2615
    %v2942 = vmul.f32 %v277, %v2615
    %v2943 = vmul.f32 %v278, %v2615
    %v2944 = vmul.f32 %v279, %v2615
    %v2945 = vmul.f32 %v280, %v2615
    %v2946 = vmul.f32 %v281, %v2615
    %v2947 = vmul.f32 %v282, %v2620
    %v2948 = vmul.f32 %v283, %v2620
    %v2949 = vmul.f32 %v284, %v2620
    %v2950 = vmul.f32 %v285, %v2620
    %v2951 = vmul.f32 %v286, %v2620
    %v2952 = vmul.f32 %v287, %v2620
    %v2953 = vmul.f32 %v288, %v2620
    %v2954 = vmul.f32 %v289, %v2625
    %v2955 = vmul.f32 %v290, %v2625
    %v2956 = vmul.f32 %v291, %v2625
    %v2957 = vmul.f32 %v292, %v2625
    %v2958 = vmul.f32 %v293, %v2625
    %v2959 = vmul.f32 %v294, %v2625
    %v2960 = vmul.f32 %v295, %v2625
    %v2961 = vmul.f32 %v296, %v2630
    %v2962 = vmul.f32 %v297, %v2630
    %v2963 = vmul.f32 %v298, %v2630
    %v2964 = vmul.f32 %v299, %v2630
    %v2965 = vmul.f32 %v300, %v2630
    %v2966 = vmul.f32 %v301, %v2630
    %v2967 = vmul.f32 %v302, %v2630
    %v2968 = vmul.f32 %v303, %v2635
    %v2969 = vmul.f32 %v304, %v2635
    %v2970 = vmul.f32 %v305, %v2635
    %v2971 = vmul.f32 %v306, %v2635
    %v2972 = vmul.f32 %v307, %v2635
    %v2973 = vmul.f32 %v308, %v2635
    %v2974 = vmul.f32 %v309, %v2635
    %v2975 = vmul.f32 %v310, %v2640
    %v2976 = vmul.f32 %v311, %v2640
    %v2977 = vmul.f32 %v312, %v2640
    %v2978 = vmul.f32 %v313, %v2640
    %v2979 = vmul.f32 %v314, %v2640
    %v2980 = vmul.f32 %v315, %v2640
    %v2981 = vmul.f32 %v316, %v2640
    %v2982 = vmul.f32 %v317, %v2645
    %v2983 = vmul.f32 %v318, %v2645
    %v2984 = vmul.f32 %v319, %v2645
    %v2985 = vmul.f32 %v320, %v2645
    %v2986 = vmul.f32 %v321, %v2645
    %v2987 = vmul.f32 %v322, %v2645
    %v2988 = vmul.f32 %v323, %v2645
    %v2989 = vmul.f32 %v324, %v2650
    %v2990 = vmul.f32 %v325, %v2650
    %v2991 = vmul.f32 %v326, %v2650
    %v2992 = vmul.f32 %v327, %v2650
    %v2993 = vmul.f32 %v328, %v2650
    %v2994 = vmul.f32 %v329, %v2650
    %v2995 = vmul.f32 %v330, %v2650
    %v2996 = vmul.f32 %v331, %v2655
    %v2997 = vmul.f32 %v332, %v2655
    %v2998 = vmul.f32 %v333, %v2655
    %v2999 = vmul.f32 %v334, %v2655
    %v3000 = vmul.f32 %v335, %v2655
    %v3001 = vmul.f32 %v336, %v2655
    %v3002 = vmul.f32 %v337, %v2655
    %v3003 = vmul.f32 %v338, %v2660
    %v3004 = vmul.f32 %v339, %v2660
    %v3005 = vmul.f32 %v340, %v2660
    %v3006 = vmul.f32 %v341, %v2660
    %v3007 = vmul.f32 %v342, %v2660
    %v3008 = vmul.f32 %v343, %v2660
    %v3009 = vmul.f32 %v344, %v2660
    %v3010 = vmul.f32 %v345, %v2665
    %v3011 = vmul.f32 %v346, %v2665
    %v3012 = vmul.f32 %v347, %v2665
    %v3013 = vmul.f32 %v348, %v2665
    %v3014 = vmul.f32 %v349, %v2665
    %v3015 = vmul.f32 %v350, %v2665
    %v3016 = vmul.f32 %v351, %v2665
    %v3017 = vmul.f32 %v352, %v2670
    %v3018 = vmul.f32 %v353, %v2670
    %v3019 = vmul.f32 %v354, %v2670
    %v3020 = vmul.f32 %v355, %v2670
    %v3021 = vmul.f32 %v356, %v2670
    %v3022 = vmul.f32 %v357, %v2670
    %v3023 = vmul.f32 %v358, %v2670
    %v3024 = vmul.f32 %v359, %v2675
    %v3025 = vmul.f32 %v360, %v2675
    %v3026 = vmul.f32 %v361, %v2675
    %v3027 = vmul.f32 %v362, %v2675
    %v3028 = vmul.f32 %v363, %v2675
    %v3029 = vmul.f32 %v364, %v2675
    %v3030 = vmul.f32 %v365, %v2675
    %v3031 = vmul.f32 %v366, %v2680
    %v3032 = vmul.f32 %v367, %v2680
    %v3033 = vmul.f32 %v368, %v2680
    %v3034 = vmul.f32 %v369, %v2680
    %v3035 = vmul.f32 %v370, %v2680
    %v3036 = vmul.f32 %v371, %v2680
    %v3037 = vmul.f32 %v372, %v2680
    %v3038 = vmul.f32 %v373, %v2685
    %v3039 = vmul.f32 %v374, %v2685
    %v3040 = vmul.f32 %v375, %v2685
    %v3041 = vmul.f32 %v376, %v2685
    %v3042 = vmul.f32 %v377, %v2685
    %v3043 = vmul.f32 %v378, %v2685
    %v3044 = vmul.f32 %v379, %v2685
    %v3045 = vmul.f32 %v380, %v2690
    %v3046 = vmul.f32 %v381, %v2690
    %v3047 = vmul.f32 %v382, %v2690
    %v3048 = vmul.f32 %v383, %v2690
    %v3049 = vmul.f32 %v384, %v2690
    %v3050 = vmul.f32 %v385, %v2690
    %v3051 = vmul.f32 %v386, %v2690
    %v3052 = vmul.f32 %v387, %v2695
    %v3053 = vmul.f32 %v388, %v2695
    %v3054 = vmul.f32 %v389, %v2695
    %v3055 = vmul.f32 %v390, %v2695
    %v3056 = vmul.f32 %v391, %v2695
    %v3057 = vmul.f32 %v392, %v2695
    %v3058 = vmul.f32 %v393, %v2695
    %v3059 = vmul.f32 %v394, %v2700
    %v3060 = vmul.f32 %v395, %v2700
    %v3061 = vmul.f32 %v396, %v2700
    %v3062 = vmul.f32 %v397, %v2700
    %v3063 = vmul.f32 %v398, %v2700
    %v3064 = vmul.f32 %v399, %v2700
    %v3065 = vmul.f32 %v400, %v2700
    %3067 = vset.pattern.permute.xlu0 0
    %3068 = vperm.xlu0 %3067, %v2326
    %v3069 = vpop.permute.xlu0 %3068
    %3072 = vset.pattern.permute.xlu0 0
    %3073 = vperm.xlu0 %3072, %v2327
    %v3074 = vpop.permute.xlu0 %3073
    %3077 = vset.pattern.permute.xlu0 0
    %3078 = vperm.xlu0 %3077, %v2328
    %v3079 = vpop.permute.xlu0 %3078
    %3082 = vset.pattern.permute.xlu0 0
    %3083 = vperm.xlu0 %3082, %v2329
    %v3084 = vpop.permute.xlu0 %3083
    %3087 = vset.pattern.permute.xlu0 0
    %3088 = vperm.xlu0 %3087, %v2330
    %v3089 = vpop.permute.xlu0 %3088
    %3092 = vset.pattern.permute.xlu0 0
    %3093 = vperm.xlu0 %3092, %v2331
    %v3094 = vpop.permute.xlu0 %3093
    %3097 = vset.pattern.permute.xlu0 0
    %3098 = vperm.xlu0 %3097, %v2332
    %v3099 = vpop.permute.xlu0 %3098
    %3102 = vset.pattern.permute.xlu0 0
    %3103 = vperm.xlu0 %3102, %v2333
    %v3104 = vpop.permute.xlu0 %3103
    %3107 = vset.pattern.permute.xlu0 0
    %3108 = vperm.xlu0 %3107, %v2334
    %v3109 = vpop.permute.xlu0 %3108
    %3112 = vset.pattern.permute.xlu0 0
    %3113 = vperm.xlu0 %3112, %v2335
    %v3114 = vpop.permute.xlu0 %3113
    %3117 = vset.pattern.permute.xlu0 0
    %3118 = vperm.xlu0 %3117, %v2336
    %v3119 = vpop.permute.xlu0 %3118
    %3122 = vset.pattern.permute.xlu0 0
    %3123 = vperm.xlu0 %3122, %v2337
    %v3124 = vpop.permute.xlu0 %3123
    %3127 = vset.pattern.permute.xlu0 0
    %3128 = vperm.xlu0 %3127, %v2338
    %v3129 = vpop.permute.xlu0 %3128
    %3132 = vset.pattern.permute.xlu0 0
    %3133 = vperm.xlu0 %3132, %v2339
    %v3134 = vpop.permute.xlu0 %3133
    %3137 = vset.pattern.permute.xlu0 0
    %3138 = vperm.xlu0 %3137, %v2340
    %v3139 = vpop.permute.xlu0 %3138
    %3142 = vset.pattern.permute.xlu0 0
    %3143 = vperm.xlu0 %3142, %v2341
    %v3144 = vpop.permute.xlu0 %3143
    %3147 = vset.pattern.permute.xlu0 0
    %3148 = vperm.xlu0 %3147, %v2342
    %v3149 = vpop.permute.xlu0 %3148
    %3152 = vset.pattern.permute.xlu0 0
    %3153 = vperm.xlu0 %3152, %v2343
    %v3154 = vpop.permute.xlu0 %3153
    %3157 = vset.pattern.permute.xlu0 0
    %3158 = vperm.xlu0 %3157, %v2344
    %v3159 = vpop.permute.xlu0 %3158
    %3162 = vset.pattern.permute.xlu0 0
    %3163 = vperm.xlu0 %3162, %v2345
    %v3164 = vpop.permute.xlu0 %3163
    %3167 = vset.pattern.permute.xlu0 0
    %3168 = vperm.xlu0 %3167, %v2346
    %v3169 = vpop.permute.xlu0 %3168
    %3172 = vset.pattern.permute.xlu0 0
    %3173 = vperm.xlu0 %3172, %v2347
    %v3174 = vpop.permute.xlu0 %3173
    %3177 = vset.pattern.permute.xlu0 0
    %3178 = vperm.xlu0 %3177, %v2348
    %v3179 = vpop.permute.xlu0 %3178
    %3182 = vset.pattern.permute.xlu0 0
    %3183 = vperm.xlu0 %3182, %v2349
    %v3184 = vpop.permute.xlu0 %3183
    %3187 = vset.pattern.permute.xlu0 0
    %3188 = vperm.xlu0 %3187, %v2350
    %v3189 = vpop.permute.xlu0 %3188
    %3192 = vset.pattern.permute.xlu0 0
    %3193 = vperm.xlu0 %3192, %v2351
    %v3194 = vpop.permute.xlu0 %3193
    %3197 = vset.pattern.permute.xlu0 0
    %3198 = vperm.xlu0 %3197, %v2352
    %v3199 = vpop.permute.xlu0 %3198
    %3202 = vset.pattern.permute.xlu0 0
    %3203 = vperm.xlu0 %3202, %v2353
    %v3204 = vpop.permute.xlu0 %3203
    %3207 = vset.pattern.permute.xlu0 0
    %3208 = vperm.xlu0 %3207, %v2354
    %v3209 = vpop.permute.xlu0 %3208
    %3212 = vset.pattern.permute.xlu0 0
    %3213 = vperm.xlu0 %3212, %v2355
    %v3214 = vpop.permute.xlu0 %3213
    %3217 = vset.pattern.permute.xlu0 0
    %3218 = vperm.xlu0 %3217, %v2356
    %v3219 = vpop.permute.xlu0 %3218
    %3222 = vset.pattern.permute.xlu0 0
    %3223 = vperm.xlu0 %3222, %v2357
    %v3224 = vpop.permute.xlu0 %3223
    %3227 = vset.pattern.permute.xlu0 0
    %3228 = vperm.xlu0 %3227, %v2358
    %v3229 = vpop.permute.xlu0 %3228
    %3232 = vset.pattern.permute.xlu0 0
    %3233 = vperm.xlu0 %3232, %v2359
    %v3234 = vpop.permute.xlu0 %3233
    %3237 = vset.pattern.permute.xlu0 0
    %3238 = vperm.xlu0 %3237, %v2360
    %v3239 = vpop.permute.xlu0 %3238
    %3242 = vset.pattern.permute.xlu0 0
    %3243 = vperm.xlu0 %3242, %v2361
    %v3244 = vpop.permute.xlu0 %3243
    %3247 = vset.pattern.permute.xlu0 0
    %3248 = vperm.xlu0 %3247, %v2362
    %v3249 = vpop.permute.xlu0 %3248
    %3252 = vset.pattern.permute.xlu0 0
    %3253 = vperm.xlu0 %3252, %v2363
    %v3254 = vpop.permute.xlu0 %3253
    %3257 = vset.pattern.permute.xlu0 0
    %3258 = vperm.xlu0 %3257, %v2364
    %v3259 = vpop.permute.xlu0 %3258
    %3262 = vset.pattern.permute.xlu0 0
    %3263 = vperm.xlu0 %3262, %v2365
    %v3264 = vpop.permute.xlu0 %3263
    %3267 = vset.pattern.permute.xlu0 0
    %3268 = vperm.xlu0 %3267, %v2366
    %v3269 = vpop.permute.xlu0 %3268
    %3272 = vset.pattern.permute.xlu0 0
    %3273 = vperm.xlu0 %3272, %v2367
    %v3274 = vpop.permute.xlu0 %3273
    %3277 = vset.pattern.permute.xlu0 0
    %3278 = vperm.xlu0 %3277, %v2368
    %v3279 = vpop.permute.xlu0 %3278
    %3282 = vset.pattern.permute.xlu0 0
    %3283 = vperm.xlu0 %3282, %v2369
    %v3284 = vpop.permute.xlu0 %3283
    %3287 = vset.pattern.permute.xlu0 0
    %3288 = vperm.xlu0 %3287, %v2370
    %v3289 = vpop.permute.xlu0 %3288
    %3292 = vset.pattern.permute.xlu0 0
    %3293 = vperm.xlu0 %3292, %v2371
    %v3294 = vpop.permute.xlu0 %3293
    %3297 = vset.pattern.permute.xlu0 0
    %3298 = vperm.xlu0 %3297, %v2372
    %v3299 = vpop.permute.xlu0 %3298
    %3302 = vset.pattern.permute.xlu0 0
    %3303 = vperm.xlu0 %3302, %v2373
    %v3304 = vpop.permute.xlu0 %3303
    %3307 = vset.pattern.permute.xlu0 0
    %3308 = vperm.xlu0 %3307, %v2374
    %v3309 = vpop.permute.xlu0 %3308
    %3312 = vset.pattern.permute.xlu0 0
    %3313 = vperm.xlu0 %3312, %v2375
    %v3314 = vpop.permute.xlu0 %3313
    %3317 = vset.pattern.permute.xlu0 0
    %3318 = vperm.xlu0 %3317, %v2376
    %v3319 = vpop.permute.xlu0 %3318
    %3322 = vset.pattern.permute.xlu0 0
    %3323 = vperm.xlu0 %3322, %v2377
    %v3324 = vpop.permute.xlu0 %3323
    %v3326 = vadd.f32 %v2702, %v3069
    %v3327 = vadd.f32 %v2703, %v3069
    %v3328 = vadd.f32 %v2704, %v3069
    %v3329 = vadd.f32 %v2705, %v3069
    %v3330 = vadd.f32 %v2706, %v3069
    %v3331 = vadd.f32 %v2707, %v3069
    %v3332 = vadd.f32 %v2708, %v3069
    %v3333 = vadd.f32 %v2709, %v3074
    %v3334 = vadd.f32 %v2710, %v3074
    %v3335 = vadd.f32 %v2711, %v3074
    %v3336 = vadd.f32 %v2712, %v3074
    %v3337 = vadd.f32 %v2713, %v3074
    %v3338 = vadd.f32 %v2714, %v3074
    %v3339 = vadd.f32 %v2715, %v3074
    %v3340 = vadd.f32 %v2716, %v3079
    %v3341 = vadd.f32 %v2717, %v3079
    %v3342 = vadd.f32 %v2718, %v3079
    %v3343 = vadd.f32 %v2719, %v3079
    %v3344 = vadd.f32 %v2720, %v3079
    %v3345 = vadd.f32 %v2721, %v3079
    %v3346 = vadd.f32 %v2722, %v3079
    %v3347 = vadd.f32 %v2723, %v3084
    %v3348 = vadd.f32 %v2724, %v3084
    %v3349 = vadd.f32 %v2725, %v3084
    %v3350 = vadd.f32 %v2726, %v3084
    %v3351 = vadd.f32 %v2727, %v3084
    %v3352 = vadd.f32 %v2728, %v3084
    %v3353 = vadd.f32 %v2729, %v3084
    %v3354 = vadd.f32 %v2730, %v3089
    %v3355 = vadd.f32 %v2731, %v3089
    %v3356 = vadd.f32 %v2732, %v3089
    %v3357 = vadd.f32 %v2733, %v3089
    %v3358 = vadd.f32 %v2734, %v3089
    %v3359 = vadd.f32 %v2735, %v3089
    %v3360 = vadd.f32 %v2736, %v3089
    %v3361 = vadd.f32 %v2737, %v3094
    %v3362 = vadd.f32 %v2738, %v3094
    %v3363 = vadd.f32 %v2739, %v3094
    %v3364 = vadd.f32 %v2740, %v3094
    %v3365 = vadd.f32 %v2741, %v3094
    %v3366 = vadd.f32 %v2742, %v3094
    %v3367 = vadd.f32 %v2743, %v3094
    %v3368 = vadd.f32 %v2744, %v3099
    %v3369 = vadd.f32 %v2745, %v3099
    %v3370 = vadd.f32 %v2746, %v3099
    %v3371 = vadd.f32 %v2747, %v3099
    %v3372 = vadd.f32 %v2748, %v3099
    %v3373 = vadd.f32 %v2749, %v3099
    %v3374 = vadd.f32 %v2750, %v3099
    %v3375 = vadd.f32 %v2751, %v3104
    %v3376 = vadd.f32 %v2752, %v3104
    %v3377 = vadd.f32 %v2753, %v3104
    %v3378 = vadd.f32 %v2754, %v3104
    %v3379 = vadd.f32 %v2755, %v3104
    %v3380 = vadd.f32 %v2756, %v3104
    %v3381 = vadd.f32 %v2757, %v3104
    %v3382 = vadd.f32 %v2758, %v3109
    %v3383 = vadd.f32 %v2759, %v3109
    %v3384 = vadd.f32 %v2760, %v3109
    %v3385 = vadd.f32 %v2761, %v3109
    %v3386 = vadd.f32 %v2762, %v3109
    %v3387 = vadd.f32 %v2763, %v3109
    %v3388 = vadd.f32 %v2764, %v3109
    %v3389 = vadd.f32 %v2765, %v3114
    %v3390 = vadd.f32 %v2766, %v3114
    %v3391 = vadd.f32 %v2767, %v3114
    %v3392 = vadd.f32 %v2768, %v3114
    %v3393 = vadd.f32 %v2769, %v3114
    %v3394 = vadd.f32 %v2770, %v3114
    %v3395 = vadd.f32 %v2771, %v3114
    %v3396 = vadd.f32 %v2772, %v3119
    %v3397 = vadd.f32 %v2773, %v3119
    %v3398 = vadd.f32 %v2774, %v3119
    %v3399 = vadd.f32 %v2775, %v3119
    %v3400 = vadd.f32 %v2776, %v3119
    %v3401 = vadd.f32 %v2777, %v3119
    %v3402 = vadd.f32 %v2778, %v3119
    %v3403 = vadd.f32 %v2779, %v3124
    %v3404 = vadd.f32 %v2780, %v3124
    %v3405 = vadd.f32 %v2781, %v3124
    %v3406 = vadd.f32 %v2782, %v3124
    %v3407 = vadd.f32 %v2783, %v3124
    %v3408 = vadd.f32 %v2784, %v3124
    %v3409 = vadd.f32 %v2785, %v3124
    %v3410 = vadd.f32 %v2786, %v3129
    %v3411 = vadd.f32 %v2787, %v3129
    %v3412 = vadd.f32 %v2788, %v3129
    %v3413 = vadd.f32 %v2789, %v3129
    %v3414 = vadd.f32 %v2790, %v3129
    %v3415 = vadd.f32 %v2791, %v3129
    %v3416 = vadd.f32 %v2792, %v3129
    %v3417 = vadd.f32 %v2793, %v3134
    %v3418 = vadd.f32 %v2794, %v3134
    %v3419 = vadd.f32 %v2795, %v3134
    %v3420 = vadd.f32 %v2796, %v3134
    %v3421 = vadd.f32 %v2797, %v3134
    %v3422 = vadd.f32 %v2798, %v3134
    %v3423 = vadd.f32 %v2799, %v3134
    %v3424 = vadd.f32 %v2800, %v3139
    %v3425 = vadd.f32 %v2801, %v3139
    %v3426 = vadd.f32 %v2802, %v3139
    %v3427 = vadd.f32 %v2803, %v3139
    %v3428 = vadd.f32 %v2804, %v3139
    %v3429 = vadd.f32 %v2805, %v3139
    %v3430 = vadd.f32 %v2806, %v3139
    %v3431 = vadd.f32 %v2807, %v3144
    %v3432 = vadd.f32 %v2808, %v3144
    %v3433 = vadd.f32 %v2809, %v3144
    %v3434 = vadd.f32 %v2810, %v3144
    %v3435 = vadd.f32 %v2811, %v3144
    %v3436 = vadd.f32 %v2812, %v3144
    %v3437 = vadd.f32 %v2813, %v3144
    %v3438 = vadd.f32 %v2814, %v3149
    %v3439 = vadd.f32 %v2815, %v3149
    %v3440 = vadd.f32 %v2816, %v3149
    %v3441 = vadd.f32 %v2817, %v3149
    %v3442 = vadd.f32 %v2818, %v3149
    %v3443 = vadd.f32 %v2819, %v3149
    %v3444 = vadd.f32 %v2820, %v3149
    %v3445 = vadd.f32 %v2821, %v3154
    %v3446 = vadd.f32 %v2822, %v3154
    %v3447 = vadd.f32 %v2823, %v3154
    %v3448 = vadd.f32 %v2824, %v3154
    %v3449 = vadd.f32 %v2825, %v3154
    %v3450 = vadd.f32 %v2826, %v3154
    %v3451 = vadd.f32 %v2827, %v3154
    %v3452 = vadd.f32 %v2828, %v3159
    %v3453 = vadd.f32 %v2829, %v3159
    %v3454 = vadd.f32 %v2830, %v3159
    %v3455 = vadd.f32 %v2831, %v3159
    %v3456 = vadd.f32 %v2832, %v3159
    %v3457 = vadd.f32 %v2833, %v3159
    %v3458 = vadd.f32 %v2834, %v3159
    %v3459 = vadd.f32 %v2835, %v3164
    %v3460 = vadd.f32 %v2836, %v3164
    %v3461 = vadd.f32 %v2837, %v3164
    %v3462 = vadd.f32 %v2838, %v3164
    %v3463 = vadd.f32 %v2839, %v3164
    %v3464 = vadd.f32 %v2840, %v3164
    %v3465 = vadd.f32 %v2841, %v3164
    %v3466 = vadd.f32 %v2842, %v3169
    %v3467 = vadd.f32 %v2843, %v3169
    %v3468 = vadd.f32 %v2844, %v3169
    %v3469 = vadd.f32 %v2845, %v3169
    %v3470 = vadd.f32 %v2846, %v3169
    %v3471 = vadd.f32 %v2847, %v3169
    %v3472 = vadd.f32 %v2848, %v3169
    %v3473 = vadd.f32 %v2849, %v3174
    %v3474 = vadd.f32 %v2850, %v3174
    %v3475 = vadd.f32 %v2851, %v3174
    %v3476 = vadd.f32 %v2852, %v3174
    %v3477 = vadd.f32 %v2853, %v3174
    %v3478 = vadd.f32 %v2854, %v3174
    %v3479 = vadd.f32 %v2855, %v3174
    %v3480 = vadd.f32 %v2856, %v3179
    %v3481 = vadd.f32 %v2857, %v3179
    %v3482 = vadd.f32 %v2858, %v3179
    %v3483 = vadd.f32 %v2859, %v3179
    %v3484 = vadd.f32 %v2860, %v3179
    %v3485 = vadd.f32 %v2861, %v3179
    %v3486 = vadd.f32 %v2862, %v3179
    %v3487 = vadd.f32 %v2863, %v3184
    %v3488 = vadd.f32 %v2864, %v3184
    %v3489 = vadd.f32 %v2865, %v3184
    %v3490 = vadd.f32 %v2866, %v3184
    %v3491 = vadd.f32 %v2867, %v3184
    %v3492 = vadd.f32 %v2868, %v3184
    %v3493 = vadd.f32 %v2869, %v3184
    %v3494 = vadd.f32 %v2870, %v3189
    %v3495 = vadd.f32 %v2871, %v3189
    %v3496 = vadd.f32 %v2872, %v3189
    %v3497 = vadd.f32 %v2873, %v3189
    %v3498 = vadd.f32 %v2874, %v3189
    %v3499 = vadd.f32 %v2875, %v3189
    %v3500 = vadd.f32 %v2876, %v3189
    %v3501 = vadd.f32 %v2877, %v3194
    %v3502 = vadd.f32 %v2878, %v3194
    %v3503 = vadd.f32 %v2879, %v3194
    %v3504 = vadd.f32 %v2880, %v3194
    %v3505 = vadd.f32 %v2881, %v3194
    %v3506 = vadd.f32 %v2882, %v3194
    %v3507 = vadd.f32 %v2883, %v3194
    %v3508 = vadd.f32 %v2884, %v3199
    %v3509 = vadd.f32 %v2885, %v3199
    %v3510 = vadd.f32 %v2886, %v3199
    %v3511 = vadd.f32 %v2887, %v3199
    %v3512 = vadd.f32 %v2888, %v3199
    %v3513 = vadd.f32 %v2889, %v3199
    %v3514 = vadd.f32 %v2890, %v3199
    %v3515 = vadd.f32 %v2891, %v3204
    %v3516 = vadd.f32 %v2892, %v3204
    %v3517 = vadd.f32 %v2893, %v3204
    %v3518 = vadd.f32 %v2894, %v3204
    %v3519 = vadd.f32 %v2895, %v3204
    %v3520 = vadd.f32 %v2896, %v3204
    %v3521 = vadd.f32 %v2897, %v3204
    %v3522 = vadd.f32 %v2898, %v3209
    %v3523 = vadd.f32 %v2899, %v3209
    %v3524 = vadd.f32 %v2900, %v3209
    %v3525 = vadd.f32 %v2901, %v3209
    %v3526 = vadd.f32 %v2902, %v3209
    %v3527 = vadd.f32 %v2903, %v3209
    %v3528 = vadd.f32 %v2904, %v3209
    %v3529 = vadd.f32 %v2905, %v3214
    %v3530 = vadd.f32 %v2906, %v3214
    %v3531 = vadd.f32 %v2907, %v3214
    %v3532 = vadd.f32 %v2908, %v3214
    %v3533 = vadd.f32 %v2909, %v3214
    %v3534 = vadd.f32 %v2910, %v3214
    %v3535 = vadd.f32 %v2911, %v3214
    %v3536 = vadd.f32 %v2912, %v3219
    %v3537 = vadd.f32 %v2913, %v3219
    %v3538 = vadd.f32 %v2914, %v3219
    %v3539 = vadd.f32 %v2915, %v3219
    %v3540 = vadd.f32 %v2916, %v3219
    %v3541 = vadd.f32 %v2917, %v3219
    %v3542 = vadd.f32 %v2918, %v3219
    %v3543 = vadd.f32 %v2919, %v3224
    %v3544 = vadd.f32 %v2920, %v3224
    %v3545 = vadd.f32 %v2921, %v3224
    %v3546 = vadd.f32 %v2922, %v3224
    %v3547 = vadd.f32 %v2923, %v3224
    %v3548 = vadd.f32 %v2924, %v3224
    %v3549 = vadd.f32 %v2925, %v3224
    %v3550 = vadd.f32 %v2926, %v3229
    %v3551 = vadd.f32 %v2927, %v3229
    %v3552 = vadd.f32 %v2928, %v3229
    %v3553 = vadd.f32 %v2929, %v3229
    %v3554 = vadd.f32 %v2930, %v3229
    %v3555 = vadd.f32 %v2931, %v3229
    %v3556 = vadd.f32 %v2932, %v3229
    %v3557 = vadd.f32 %v2933, %v3234
    %v3558 = vadd.f32 %v2934, %v3234
    %v3559 = vadd.f32 %v2935, %v3234
    %v3560 = vadd.f32 %v2936, %v3234
    %v3561 = vadd.f32 %v2937, %v3234
    %v3562 = vadd.f32 %v2938, %v3234
    %v3563 = vadd.f32 %v2939, %v3234
    %v3564 = vadd.f32 %v2940, %v3239
    %v3565 = vadd.f32 %v2941, %v3239
    %v3566 = vadd.f32 %v2942, %v3239
    %v3567 = vadd.f32 %v2943, %v3239
    %v3568 = vadd.f32 %v2944, %v3239
    %v3569 = vadd.f32 %v2945, %v3239
    %v3570 = vadd.f32 %v2946, %v3239
    %v3571 = vadd.f32 %v2947, %v3244
    %v3572 = vadd.f32 %v2948, %v3244
    %v3573 = vadd.f32 %v2949, %v3244
    %v3574 = vadd.f32 %v2950, %v3244
    %v3575 = vadd.f32 %v2951, %v3244
    %v3576 = vadd.f32 %v2952, %v3244
    %v3577 = vadd.f32 %v2953, %v3244
    %v3578 = vadd.f32 %v2954, %v3249
    %v3579 = vadd.f32 %v2955, %v3249
    %v3580 = vadd.f32 %v2956, %v3249
    %v3581 = vadd.f32 %v2957, %v3249
    %v3582 = vadd.f32 %v2958, %v3249
    %v3583 = vadd.f32 %v2959, %v3249
    %v3584 = vadd.f32 %v2960, %v3249
    %v3585 = vadd.f32 %v2961, %v3254
    %v3586 = vadd.f32 %v2962, %v3254
    %v3587 = vadd.f32 %v2963, %v3254
    %v3588 = vadd.f32 %v2964, %v3254
    %v3589 = vadd.f32 %v2965, %v3254
    %v3590 = vadd.f32 %v2966, %v3254
    %v3591 = vadd.f32 %v2967, %v3254
    %v3592 = vadd.f32 %v2968, %v3259
    %v3593 = vadd.f32 %v2969, %v3259
    %v3594 = vadd.f32 %v2970, %v3259
    %v3595 = vadd.f32 %v2971, %v3259
    %v3596 = vadd.f32 %v2972, %v3259
    %v3597 = vadd.f32 %v2973, %v3259
    %v3598 = vadd.f32 %v2974, %v3259
    %v3599 = vadd.f32 %v2975, %v3264
    %v3600 = vadd.f32 %v2976, %v3264
    %v3601 = vadd.f32 %v2977, %v3264
    %v3602 = vadd.f32 %v2978, %v3264
    %v3603 = vadd.f32 %v2979, %v3264
    %v3604 = vadd.f32 %v2980, %v3264
    %v3605 = vadd.f32 %v2981, %v3264
    %v3606 = vadd.f32 %v2982, %v3269
    %v3607 = vadd.f32 %v2983, %v3269
    %v3608 = vadd.f32 %v2984, %v3269
    %v3609 = vadd.f32 %v2985, %v3269
    %v3610 = vadd.f32 %v2986, %v3269
    %v3611 = vadd.f32 %v2987, %v3269
    %v3612 = vadd.f32 %v2988, %v3269
    %v3613 = vadd.f32 %v2989, %v3274
    %v3614 = vadd.f32 %v2990, %v3274
    %v3615 = vadd.f32 %v2991, %v3274
    %v3616 = vadd.f32 %v2992, %v3274
    %v3617 = vadd.f32 %v2993, %v3274
    %v3618 = vadd.f32 %v2994, %v3274
    %v3619 = vadd.f32 %v2995, %v3274
    %v3620 = vadd.f32 %v2996, %v3279
    %v3621 = vadd.f32 %v2997, %v3279
    %v3622 = vadd.f32 %v2998, %v3279
    %v3623 = vadd.f32 %v2999, %v3279
    %v3624 = vadd.f32 %v3000, %v3279
    %v3625 = vadd.f32 %v3001, %v3279
    %v3626 = vadd.f32 %v3002, %v3279
    %v3627 = vadd.f32 %v3003, %v3284
    %v3628 = vadd.f32 %v3004, %v3284
    %v3629 = vadd.f32 %v3005, %v3284
    %v3630 = vadd.f32 %v3006, %v3284
    %v3631 = vadd.f32 %v3007, %v3284
    %v3632 = vadd.f32 %v3008, %v3284
    %v3633 = vadd.f32 %v3009, %v3284
    %v3634 = vadd.f32 %v3010, %v3289
    %v3635 = vadd.f32 %v3011, %v3289
    %v3636 = vadd.f32 %v3012, %v3289
    %v3637 = vadd.f32 %v3013, %v3289
    %v3638 = vadd.f32 %v3014, %v3289
    %v3639 = vadd.f32 %v3015, %v3289
    %v3640 = vadd.f32 %v3016, %v3289
    %v3641 = vadd.f32 %v3017, %v3294
    %v3642 = vadd.f32 %v3018, %v3294
    %v3643 = vadd.f32 %v3019, %v3294
    %v3644 = vadd.f32 %v3020, %v3294
    %v3645 = vadd.f32 %v3021, %v3294
    %v3646 = vadd.f32 %v3022, %v3294
    %v3647 = vadd.f32 %v3023, %v3294
    %v3648 = vadd.f32 %v3024, %v3299
    %v3649 = vadd.f32 %v3025, %v3299
    %v3650 = vadd.f32 %v3026, %v3299
    %v3651 = vadd.f32 %v3027, %v3299
    %v3652 = vadd.f32 %v3028, %v3299
    %v3653 = vadd.f32 %v3029, %v3299
    %v3654 = vadd.f32 %v3030, %v3299
    %v3655 = vadd.f32 %v3031, %v3304
    %v3656 = vadd.f32 %v3032, %v3304
    %v3657 = vadd.f32 %v3033, %v3304
    %v3658 = vadd.f32 %v3034, %v3304
    %v3659 = vadd.f32 %v3035, %v3304
    %v3660 = vadd.f32 %v3036, %v3304
    %v3661 = vadd.f32 %v3037, %v3304
    %v3662 = vadd.f32 %v3038, %v3309
    %v3663 = vadd.f32 %v3039, %v3309
    %v3664 = vadd.f32 %v3040, %v3309
    %v3665 = vadd.f32 %v3041, %v3309
    %v3666 = vadd.f32 %v3042, %v3309
    %v3667 = vadd.f32 %v3043, %v3309
    %v3668 = vadd.f32 %v3044, %v3309
    %v3669 = vadd.f32 %v3045, %v3314
    %v3670 = vadd.f32 %v3046, %v3314
    %v3671 = vadd.f32 %v3047, %v3314
    %v3672 = vadd.f32 %v3048, %v3314
    %v3673 = vadd.f32 %v3049, %v3314
    %v3674 = vadd.f32 %v3050, %v3314
    %v3675 = vadd.f32 %v3051, %v3314
    %v3676 = vadd.f32 %v3052, %v3319
    %v3677 = vadd.f32 %v3053, %v3319
    %v3678 = vadd.f32 %v3054, %v3319
    %v3679 = vadd.f32 %v3055, %v3319
    %v3680 = vadd.f32 %v3056, %v3319
    %v3681 = vadd.f32 %v3057, %v3319
    %v3682 = vadd.f32 %v3058, %v3319
    %v3683 = vadd.f32 %v3059, %v3324
    %v3684 = vadd.f32 %v3060, %v3324
    %v3685 = vadd.f32 %v3061, %v3324
    %v3686 = vadd.f32 %v3062, %v3324
    %v3687 = vadd.f32 %v3063, %v3324
    %v3688 = vadd.f32 %v3064, %v3324
    %v3689 = vadd.f32 %v3065, %v3324
    %v3690 = vmax.f32 %v3326, 0.0
    %v3691 = vmax.f32 %v3327, 0.0
    %v3692 = vmax.f32 %v3328, 0.0
    %v3693 = vmax.f32 %v3329, 0.0
    %v3694 = vmax.f32 %v3330, 0.0
    %v3695 = vmax.f32 %v3331, 0.0
    %v3696 = vmax.f32 %v3332, 0.0
    %v3697 = vmax.f32 %v3333, 0.0
    %v3698 = vmax.f32 %v3334, 0.0
    %v3699 = vmax.f32 %v3335, 0.0
    %v3700 = vmax.f32 %v3336, 0.0
    %v3701 = vmax.f32 %v3337, 0.0
    %v3702 = vmax.f32 %v3338, 0.0
    %v3703 = vmax.f32 %v3339, 0.0
    %v3704 = vmax.f32 %v3340, 0.0
    %v3705 = vmax.f32 %v3341, 0.0
    %v3706 = vmax.f32 %v3342, 0.0
    %v3707 = vmax.f32 %v3343, 0.0
    %v3708 = vmax.f32 %v3344, 0.0
    %v3709 = vmax.f32 %v3345, 0.0
    %v3710 = vmax.f32 %v3346, 0.0
    %v3711 = vmax.f32 %v3347, 0.0
    %v3712 = vmax.f32 %v3348, 0.0
    %v3713 = vmax.f32 %v3349, 0.0
    %v3714 = vmax.f32 %v3350, 0.0
    %v3715 = vmax.f32 %v3351, 0.0
    %v3716 = vmax.f32 %v3352, 0.0
    %v3717 = vmax.f32 %v3353, 0.0
    %v3718 = vmax.f32 %v3354, 0.0
    %v3719 = vmax.f32 %v3355, 0.0
    %v3720 = vmax.f32 %v3356, 0.0
    %v3721 = vmax.f32 %v3357, 0.0
    %v3722 = vmax.f32 %v3358, 0.0
    %v3723 = vmax.f32 %v3359, 0.0
    %v3724 = vmax.f32 %v3360, 0.0
    %v3725 = vmax.f32 %v3361, 0.0
    %v3726 = vmax.f32 %v3362, 0.0
    %v3727 = vmax.f32 %v3363, 0.0
    %v3728 = vmax.f32 %v3364, 0.0
    %v3729 = vmax.f32 %v3365, 0.0
    %v3730 = vmax.f32 %v3366, 0.0
    %v3731 = vmax.f32 %v3367, 0.0
    %v3732 = vmax.f32 %v3368, 0.0
    %v3733 = vmax.f32 %v3369, 0.0
    %v3734 = vmax.f32 %v3370, 0.0
    %v3735 = vmax.f32 %v3371, 0.0
    %v3736 = vmax.f32 %v3372, 0.0
    %v3737 = vmax.f32 %v3373, 0.0
    %v3738 = vmax.f32 %v3374, 0.0
    %v3739 = vmax.f32 %v3375, 0.0
    %v3740 = vmax.f32 %v3376, 0.0
    %v3741 = vmax.f32 %v3377, 0.0
    %v3742 = vmax.f32 %v3378, 0.0
    %v3743 = vmax.f32 %v3379, 0.0
    %v3744 = vmax.f32 %v3380, 0.0
    %v3745 = vmax.f32 %v3381, 0.0
    %v3746 = vmax.f32 %v3382, 0.0
    %v3747 = vmax.f32 %v3383, 0.0
    %v3748 = vmax.f32 %v3384, 0.0
    %v3749 = vmax.f32 %v3385, 0.0
    %v3750 = vmax.f32 %v3386, 0.0
    %v3751 = vmax.f32 %v3387, 0.0
    %v3752 = vmax.f32 %v3388, 0.0
    %v3753 = vmax.f32 %v3389, 0.0
    %v3754 = vmax.f32 %v3390, 0.0
    %v3755 = vmax.f32 %v3391, 0.0
    %v3756 = vmax.f32 %v3392, 0.0
    %v3757 = vmax.f32 %v3393, 0.0
    %v3758 = vmax.f32 %v3394, 0.0
    %v3759 = vmax.f32 %v3395, 0.0
    %v3760 = vmax.f32 %v3396, 0.0
    %v3761 = vmax.f32 %v3397, 0.0
    %v3762 = vmax.f32 %v3398, 0.0
    %v3763 = vmax.f32 %v3399, 0.0
    %v3764 = vmax.f32 %v3400, 0.0
    %v3765 = vmax.f32 %v3401, 0.0
    %v3766 = vmax.f32 %v3402, 0.0
    %v3767 = vmax.f32 %v3403, 0.0
    %v3768 = vmax.f32 %v3404, 0.0
    %v3769 = vmax.f32 %v3405, 0.0
    %v3770 = vmax.f32 %v3406, 0.0
    %v3771 = vmax.f32 %v3407, 0.0
    %v3772 = vmax.f32 %v3408, 0.0
    %v3773 = vmax.f32 %v3409, 0.0
    %v3774 = vmax.f32 %v3410, 0.0
    %v3775 = vmax.f32 %v3411, 0.0
    %v3776 = vmax.f32 %v3412, 0.0
    %v3777 = vmax.f32 %v3413, 0.0
    %v3778 = vmax.f32 %v3414, 0.0
    %v3779 = vmax.f32 %v3415, 0.0
    %v3780 = vmax.f32 %v3416, 0.0
    %v3781 = vmax.f32 %v3417, 0.0
    %v3782 = vmax.f32 %v3418, 0.0
    %v3783 = vmax.f32 %v3419, 0.0
    %v3784 = vmax.f32 %v3420, 0.0
    %v3785 = vmax.f32 %v3421, 0.0
    %v3786 = vmax.f32 %v3422, 0.0
    %v3787 = vmax.f32 %v3423, 0.0
    %v3788 = vmax.f32 %v3424, 0.0
    %v3789 = vmax.f32 %v3425, 0.0
    %v3790 = vmax.f32 %v3426, 0.0
    %v3791 = vmax.f32 %v3427, 0.0
    %v3792 = vmax.f32 %v3428, 0.0
    %v3793 = vmax.f32 %v3429, 0.0
    %v3794 = vmax.f32 %v3430, 0.0
    %v3795 = vmax.f32 %v3431, 0.0
    %v3796 = vmax.f32 %v3432, 0.0
    %v3797 = vmax.f32 %v3433, 0.0
    %v3798 = vmax.f32 %v3434, 0.0
    %v3799 = vmax.f32 %v3435, 0.0
    %v3800 = vmax.f32 %v3436, 0.0
    %v3801 = vmax.f32 %v3437, 0.0
    %v3802 = vmax.f32 %v3438, 0.0
    %v3803 = vmax.f32 %v3439, 0.0
    %v3804 = vmax.f32 %v3440, 0.0
    %v3805 = vmax.f32 %v3441, 0.0
    %v3806 = vmax.f32 %v3442, 0.0
    %v3807 = vmax.f32 %v3443, 0.0
    %v3808 = vmax.f32 %v3444, 0.0
    %v3809 = vmax.f32 %v3445, 0.0
    %v3810 = vmax.f32 %v3446, 0.0
    %v3811 = vmax.f32 %v3447, 0.0
    %v3812 = vmax.f32 %v3448, 0.0
    %v3813 = vmax.f32 %v3449, 0.0
    %v3814 = vmax.f32 %v3450, 0.0
    %v3815 = vmax.f32 %v3451, 0.0
    %v3816 = vmax.f32 %v3452, 0.0
    %v3817 = vmax.f32 %v3453, 0.0
    %v3818 = vmax.f32 %v3454, 0.0
    %v3819 = vmax.f32 %v3455, 0.0
    %v3820 = vmax.f32 %v3456, 0.0
    %v3821 = vmax.f32 %v3457, 0.0
    %v3822 = vmax.f32 %v3458, 0.0
    %v3823 = vmax.f32 %v3459, 0.0
    %v3824 = vmax.f32 %v3460, 0.0
    %v3825 = vmax.f32 %v3461, 0.0
    %v3826 = vmax.f32 %v3462, 0.0
    %v3827 = vmax.f32 %v3463, 0.0
    %v3828 = vmax.f32 %v3464, 0.0
    %v3829 = vmax.f32 %v3465, 0.0
    %v3830 = vmax.f32 %v3466, 0.0
    %v3831 = vmax.f32 %v3467, 0.0
    %v3832 = vmax.f32 %v3468, 0.0
    %v3833 = vmax.f32 %v3469, 0.0
    %v3834 = vmax.f32 %v3470, 0.0
    %v3835 = vmax.f32 %v3471, 0.0
    %v3836 = vmax.f32 %v3472, 0.0
    %v3837 = vmax.f32 %v3473, 0.0
    %v3838 = vmax.f32 %v3474, 0.0
    %v3839 = vmax.f32 %v3475, 0.0
    %v3840 = vmax.f32 %v3476, 0.0
    %v3841 = vmax.f32 %v3477, 0.0
    %v3842 = vmax.f32 %v3478, 0.0
    %v3843 = vmax.f32 %v3479, 0.0
    %v3844 = vmax.f32 %v3480, 0.0
    %v3845 = vmax.f32 %v3481, 0.0
    %v3846 = vmax.f32 %v3482, 0.0
    %v3847 = vmax.f32 %v3483, 0.0
    %v3848 = vmax.f32 %v3484, 0.0
    %v3849 = vmax.f32 %v3485, 0.0
    %v3850 = vmax.f32 %v3486, 0.0
    %v3851 = vmax.f32 %v3487, 0.0
    %v3852 = vmax.f32 %v3488, 0.0
    %v3853 = vmax.f32 %v3489, 0.0
    %v3854 = vmax.f32 %v3490, 0.0
    %v3855 = vmax.f32 %v3491, 0.0
    %v3856 = vmax.f32 %v3492, 0.0
    %v3857 = vmax.f32 %v3493, 0.0
    %v3858 = vmax.f32 %v3494, 0.0
    %v3859 = vmax.f32 %v3495, 0.0
    %v3860 = vmax.f32 %v3496, 0.0
    %v3861 = vmax.f32 %v3497, 0.0
    %v3862 = vmax.f32 %v3498, 0.0
    %v3863 = vmax.f32 %v3499, 0.0
    %v3864 = vmax.f32 %v3500, 0.0
    %v3865 = vmax.f32 %v3501, 0.0
    %v3866 = vmax.f32 %v3502, 0.0
    %v3867 = vmax.f32 %v3503, 0.0
    %v3868 = vmax.f32 %v3504, 0.0
    %v3869 = vmax.f32 %v3505, 0.0
    %v3870 = vmax.f32 %v3506, 0.0
    %v3871 = vmax.f32 %v3507, 0.0
    %v3872 = vmax.f32 %v3508, 0.0
    %v3873 = vmax.f32 %v3509, 0.0
    %v3874 = vmax.f32 %v3510, 0.0
    %v3875 = vmax.f32 %v3511, 0.0
    %v3876 = vmax.f32 %v3512, 0.0
    %v3877 = vmax.f32 %v3513, 0.0
    %v3878 = vmax.f32 %v3514, 0.0
    %v3879 = vmax.f32 %v3515, 0.0
    %v3880 = vmax.f32 %v3516, 0.0
    %v3881 = vmax.f32 %v3517, 0.0
    %v3882 = vmax.f32 %v3518, 0.0
    %v3883 = vmax.f32 %v3519, 0.0
    %v3884 = vmax.f32 %v3520, 0.0
    %v3885 = vmax.f32 %v3521, 0.0
    %v3886 = vmax.f32 %v3522, 0.0
    %v3887 = vmax.f32 %v3523, 0.0
    %v3888 = vmax.f32 %v3524, 0.0
    %v3889 = vmax.f32 %v3525, 0.0
    %v3890 = vmax.f32 %v3526, 0.0
    %v3891 = vmax.f32 %v3527, 0.0
    %v3892 = vmax.f32 %v3528, 0.0
    %v3893 = vmax.f32 %v3529, 0.0
    %v3894 = vmax.f32 %v3530, 0.0
    %v3895 = vmax.f32 %v3531, 0.0
    %v3896 = vmax.f32 %v3532, 0.0
    %v3897 = vmax.f32 %v3533, 0.0
    %v3898 = vmax.f32 %v3534, 0.0
    %v3899 = vmax.f32 %v3535, 0.0
    %v3900 = vmax.f32 %v3536, 0.0
    %v3901 = vmax.f32 %v3537, 0.0
    %v3902 = vmax.f32 %v3538, 0.0
    %v3903 = vmax.f32 %v3539, 0.0
    %v3904 = vmax.f32 %v3540, 0.0
    %v3905 = vmax.f32 %v3541, 0.0
    %v3906 = vmax.f32 %v3542, 0.0
    %v3907 = vmax.f32 %v3543, 0.0
    %v3908 = vmax.f32 %v3544, 0.0
    %v3909 = vmax.f32 %v3545, 0.0
    %v3910 = vmax.f32 %v3546, 0.0
    %v3911 = vmax.f32 %v3547, 0.0
    %v3912 = vmax.f32 %v3548, 0.0
    %v3913 = vmax.f32 %v3549, 0.0
    %v3914 = vmax.f32 %v3550, 0.0
    %v3915 = vmax.f32 %v3551, 0.0
    %v3916 = vmax.f32 %v3552, 0.0
    %v3917 = vmax.f32 %v3553, 0.0
    %v3918 = vmax.f32 %v3554, 0.0
    %v3919 = vmax.f32 %v3555, 0.0
    %v3920 = vmax.f32 %v3556, 0.0
    %v3921 = vmax.f32 %v3557, 0.0
    %v3922 = vmax.f32 %v3558, 0.0
    %v3923 = vmax.f32 %v3559, 0.0
    %v3924 = vmax.f32 %v3560, 0.0
    %v3925 = vmax.f32 %v3561, 0.0
    %v3926 = vmax.f32 %v3562, 0.0
    %v3927 = vmax.f32 %v3563, 0.0
    %v3928 = vmax.f32 %v3564, 0.0
    %v3929 = vmax.f32 %v3565, 0.0
    %v3930 = vmax.f32 %v3566, 0.0
    %v3931 = vmax.f32 %v3567, 0.0
    %v3932 = vmax.f32 %v3568, 0.0
    %v3933 = vmax.f32 %v3569, 0.0
    %v3934 = vmax.f32 %v3570, 0.0
    %v3935 = vmax.f32 %v3571, 0.0
    %v3936 = vmax.f32 %v3572, 0.0
    %v3937 = vmax.f32 %v3573, 0.0
    %v3938 = vmax.f32 %v3574, 0.0
    %v3939 = vmax.f32 %v3575, 0.0
    %v3940 = vmax.f32 %v3576, 0.0
    %v3941 = vmax.f32 %v3577, 0.0
    %v3942 = vmax.f32 %v3578, 0.0
    %v3943 = vmax.f32 %v3579, 0.0
    %v3944 = vmax.f32 %v3580, 0.0
    %v3945 = vmax.f32 %v3581, 0.0
    %v3946 = vmax.f32 %v3582, 0.0
    %v3947 = vmax.f32 %v3583, 0.0
    %v3948 = vmax.f32 %v3584, 0.0
    %v3949 = vmax.f32 %v3585, 0.0
    %v3950 = vmax.f32 %v3586, 0.0
    %v3951 = vmax.f32 %v3587, 0.0
    %v3952 = vmax.f32 %v3588, 0.0
    %v3953 = vmax.f32 %v3589, 0.0
    %v3954 = vmax.f32 %v3590, 0.0
    %v3955 = vmax.f32 %v3591, 0.0
    %v3956 = vmax.f32 %v3592, 0.0
    %v3957 = vmax.f32 %v3593, 0.0
    %v3958 = vmax.f32 %v3594, 0.0
    %v3959 = vmax.f32 %v3595, 0.0
    %v3960 = vmax.f32 %v3596, 0.0
    %v3961 = vmax.f32 %v3597, 0.0
    %v3962 = vmax.f32 %v3598, 0.0
    %v3963 = vmax.f32 %v3599, 0.0
    %v3964 = vmax.f32 %v3600, 0.0
    %v3965 = vmax.f32 %v3601, 0.0
    %v3966 = vmax.f32 %v3602, 0.0
    %v3967 = vmax.f32 %v3603, 0.0
    %v3968 = vmax.f32 %v3604, 0.0
    %v3969 = vmax.f32 %v3605, 0.0
    %v3970 = vmax.f32 %v3606, 0.0
    %v3971 = vmax.f32 %v3607, 0.0
    %v3972 = vmax.f32 %v3608, 0.0
    %v3973 = vmax.f32 %v3609, 0.0
    %v3974 = vmax.f32 %v3610, 0.0
    %v3975 = vmax.f32 %v3611, 0.0
    %v3976 = vmax.f32 %v3612, 0.0
    %v3977 = vmax.f32 %v3613, 0.0
    %v3978 = vmax.f32 %v3614, 0.0
    %v3979 = vmax.f32 %v3615, 0.0
    %v3980 = vmax.f32 %v3616, 0.0
    %v3981 = vmax.f32 %v3617, 0.0
    %v3982 = vmax.f32 %v3618, 0.0
    %v3983 = vmax.f32 %v3619, 0.0
    %v3984 = vmax.f32 %v3620, 0.0
    %v3985 = vmax.f32 %v3621, 0.0
    %v3986 = vmax.f32 %v3622, 0.0
    %v3987 = vmax.f32 %v3623, 0.0
    %v3988 = vmax.f32 %v3624, 0.0
    %v3989 = vmax.f32 %v3625, 0.0
    %v3990 = vmax.f32 %v3626, 0.0
    %v3991 = vmax.f32 %v3627, 0.0
    %v3992 = vmax.f32 %v3628, 0.0
    %v3993 = vmax.f32 %v3629, 0.0
    %v3994 = vmax.f32 %v3630, 0.0
    %v3995 = vmax.f32 %v3631, 0.0
    %v3996 = vmax.f32 %v3632, 0.0
    %v3997 = vmax.f32 %v3633, 0.0
    %v3998 = vmax.f32 %v3634, 0.0
    %v3999 = vmax.f32 %v3635, 0.0
    %v4000 = vmax.f32 %v3636, 0.0
    %v4001 = vmax.f32 %v3637, 0.0
    %v4002 = vmax.f32 %v3638, 0.0
    %v4003 = vmax.f32 %v3639, 0.0
    %v4004 = vmax.f32 %v3640, 0.0
    %v4005 = vmax.f32 %v3641, 0.0
    %v4006 = vmax.f32 %v3642, 0.0
    %v4007 = vmax.f32 %v3643, 0.0
    %v4008 = vmax.f32 %v3644, 0.0
    %v4009 = vmax.f32 %v3645, 0.0
    %v4010 = vmax.f32 %v3646, 0.0
    %v4011 = vmax.f32 %v3647, 0.0
    %v4012 = vmax.f32 %v3648, 0.0
    %v4013 = vmax.f32 %v3649, 0.0
    %v4014 = vmax.f32 %v3650, 0.0
    %v4015 = vmax.f32 %v3651, 0.0
    %v4016 = vmax.f32 %v3652, 0.0
    %v4017 = vmax.f32 %v3653, 0.0
    %v4018 = vmax.f32 %v3654, 0.0
    %v4019 = vmax.f32 %v3655, 0.0
    %v4020 = vmax.f32 %v3656, 0.0
    %v4021 = vmax.f32 %v3657, 0.0
    %v4022 = vmax.f32 %v3658, 0.0
    %v4023 = vmax.f32 %v3659, 0.0
    %v4024 = vmax.f32 %v3660, 0.0
    %v4025 = vmax.f32 %v3661, 0.0
    %v4026 = vmax.f32 %v3662, 0.0
    %v4027 = vmax.f32 %v3663, 0.0
    %v4028 = vmax.f32 %v3664, 0.0
    %v4029 = vmax.f32 %v3665, 0.0
    %v4030 = vmax.f32 %v3666, 0.0
    %v4031 = vmax.f32 %v3667, 0.0
    %v4032 = vmax.f32 %v3668, 0.0
    %v4033 = vmax.f32 %v3669, 0.0
    %v4034 = vmax.f32 %v3670, 0.0
    %v4035 = vmax.f32 %v3671, 0.0
    %v4036 = vmax.f32 %v3672, 0.0
    %v4037 = vmax.f32 %v3673, 0.0
    %v4038 = vmax.f32 %v3674, 0.0
    %v4039 = vmax.f32 %v3675, 0.0
    %v4040 = vmax.f32 %v3676, 0.0
    %v4041 = vmax.f32 %v3677, 0.0
    %v4042 = vmax.f32 %v3678, 0.0
    %v4043 = vmax.f32 %v3679, 0.0
    %v4044 = vmax.f32 %v3680, 0.0
    %v4045 = vmax.f32 %v3681, 0.0
    %v4046 = vmax.f32 %v3682, 0.0
    %v4047 = vmax.f32 %v3683, 0.0
    %v4048 = vmax.f32 %v3684, 0.0
    %v4049 = vmax.f32 %v3685, 0.0
    %v4050 = vmax.f32 %v3686, 0.0
    %v4051 = vmax.f32 %v3687, 0.0
    %v4052 = vmax.f32 %v3688, 0.0
    %v4053 = vmax.f32 %v3689, 0.0
    %vm4054 = vcmask 261120
    %v4056 = vsel %vm4054, %v2381, 0
    %v4059 = vsel %vm4054, %v2385, 0
    %v4062 = vsel %vm4054, %v2389, 0
    %v4065 = vsel %vm4054, %v2393, 0
    %v4068 = vsel %vm4054, %v2397, 0
    %v4071 = vsel %vm4054, %v2401, 0
    %v4074 = vsel %vm4054, %v2405, 0
    %v4077 = vsel %vm4054, %v2409, 0
    %v4080 = vsel %vm4054, %v2413, 0
    %v4083 = vsel %vm4054, %v2417, 0
    %v4086 = vsel %vm4054, %v2421, 0
    %v4089 = vsel %vm4054, %v2425, 0
    %v4092 = vsel %vm4054, %v2429, 0
    %v4095 = vsel %vm4054, %v2433, 0
    %v4098 = vsel %vm4054, %v2437, 0
    %v4101 = vsel %vm4054, %v2441, 0
    %4103 = vmatprep.subr.mxu0 %v3691
    %4104 = vmatpush1.msra.mxu0 %v3690
    %4105 = vmatprep.subr.mxu0 %v3698
    %4106 = vmatpush1.msra.mxu0 %v3697
    %4107 = vmatprep.subr.mxu0 %v3705
    %4108 = vmatpush1.msra.mxu0 %v3704
    %4109 = vmatprep.subr.mxu0 %v3712
    %4110 = vmatpush1.msra.mxu0 %v3711
    %4111 = vmatprep.subr.mxu0 %v3719
    %4112 = vmatpush1.msra.mxu0 %v3718
    %4113 = vmatprep.subr.mxu0 %v3726
    %4114 = vmatpush1.msra.mxu0 %v3725
    %4115 = vmatprep.subr.mxu0 %v3733
    %4116 = vmatpush1.msra.mxu0 %v3732
    %4117 = vmatprep.subr.mxu0 %v3740
    %4118 = vmatpush1.msra.mxu0 %v3739
    %4119 = vmatprep.subr.mxu0 %v3747
    %4120 = vmatpush1.msra.mxu0 %v3746
    %4121 = vmatprep.subr.mxu0 %v3754
    %4122 = vmatpush1.msra.mxu0 %v3753
    %4123 = vmatprep.subr.mxu0 %v3761
    %4124 = vmatpush1.msra.mxu0 %v3760
    %4125 = vmatprep.subr.mxu0 %v3768
    %4126 = vmatpush1.msra.mxu0 %v3767
    %4127 = vmatprep.subr.mxu0 %v3775
    %4128 = vmatpush1.msra.mxu0 %v3774
    %4129 = vmatprep.subr.mxu0 %v3782
    %4130 = vmatpush1.msra.mxu0 %v3781
    %4131 = vmatprep.subr.mxu0 %v3789
    %4132 = vmatpush1.msra.mxu0 %v3788
    %4133 = vmatprep.subr.mxu0 %v3796
    %4134 = vmatpush1.msra.mxu0 %v3795
    %4135 = vmatprep.subr.mxu0 %v3803
    %4136 = vmatpush1.msra.mxu0 %v3802
    %4137 = vmatprep.subr.mxu0 %v3810
    %4138 = vmatpush1.msra.mxu0 %v3809
    %4139 = vmatprep.subr.mxu0 %v3817
    %4140 = vmatpush1.msra.mxu0 %v3816
    %4141 = vmatprep.subr.mxu0 %v3824
    %4142 = vmatpush1.msra.mxu0 %v3823
    %4143 = vmatprep.subr.mxu0 %v3831
    %4144 = vmatpush1.msra.mxu0 %v3830
    %4145 = vmatprep.subr.mxu0 %v3838
    %4146 = vmatpush1.msra.mxu0 %v3837
    %4147 = vmatprep.subr.mxu0 %v3845
    %4148 = vmatpush1.msra.mxu0 %v3844
    %4149 = vmatprep.subr.mxu0 %v3852
    %4150 = vmatpush1.msra.mxu0 %v3851
    %4151 = vmatprep.subr.mxu0 %v3859
    %4152 = vmatpush1.msra.mxu0 %v3858
    %4153 = vmatprep.subr.mxu0 %v3866
    %4154 = vmatpush1.msra.mxu0 %v3865
    %4155 = vmatprep.subr.mxu0 %v3873
    %4156 = vmatpush1.msra.mxu0 %v3872
    %4157 = vmatprep.subr.mxu0 %v3880
    %4158 = vmatpush1.msra.mxu0 %v3879
    %4159 = vmatprep.subr.mxu0 %v3887
    %4160 = vmatpush1.msra.mxu0 %v3886
    %4161 = vmatprep.subr.mxu0 %v3894
    %4162 = vmatpush1.msra.mxu0 %v3893
    %4163 = vmatprep.subr.mxu0 %v3901
    %4164 = vmatpush1.msra.mxu0 %v3900
    %4165 = vmatprep.subr.mxu0 %v3908
    %4166 = vmatpush1.msra.mxu0 %v3907
    %4167 = vmatprep.mubr.f32.mxu0 %v2379
    %4168 = vmatmul.mubr.f32.gmra.mrb[0].mxu0 %v2378
    %v4169 = vpop.f32.mrb[0].mxu0
    %v4170 = vadd.f32 0.0, %v4169
    %v4171 = vpop.f32.mrb[0].mxu0
    %v4172 = vadd.f32 0.0, %v4171
    %4173 = vmatprep.mubr.f32.mxu0 %v2383
    %4174 = vmatmul.mubr.f32.gmra.mrb[0].mxu0 %v2382
    %v4175 = vpop.f32.mrb[0].mxu0
    %v4176 = vadd.f32 0.0, %v4175
    %v4177 = vpop.f32.mrb[0].mxu0
    %v4178 = vadd.f32 0.0, %v4177
    %4179 = vmatprep.mubr.f32.mxu0 %v2387
    %4180 = vmatmul.mubr.f32.gmra.mrb[0].mxu0 %v2386
    %v4181 = vpop.f32.mrb[0].mxu0
    %v4182 = vadd.f32 0.0, %v4181
    %v4183 = vpop.f32.mrb[0].mxu0
    %v4184 = vadd.f32 0.0, %v4183
    %4185 = vmatprep.mubr.f32.mxu0 %v2391
    %4186 = vmatmul.mubr.f32.gmra.mrb[0].mxu0 %v2390
    %v4187 = vpop.f32.mrb[0].mxu0
    %v4188 = vadd.f32 0.0, %v4187
    %v4189 = vpop.f32.mrb[0].mxu0
    %v4190 = vadd.f32 0.0, %v4189
    %4191 = vmatprep.mubr.f32.mxu0 %v2395
    %4192 = vmatmul.mubr.f32.gmra.mrb[0].mxu0 %v2394
    %v4193 = vpop.f32.mrb[0].mxu0
    %v4194 = vadd.f32 0.0, %v4193
    %v4195 = vpop.f32.mrb[0].mxu0
    %v4196 = vadd.f32 0.0, %v4195
    %4197 = vmatprep.mubr.f32.mxu0 %v2399
    %4198 = vmatmul.mubr.f32.gmra.mrb[0].mxu0 %v2398
    %v4199 = vpop.f32.mrb[0].mxu0
    %v4200 = vadd.f32 0.0, %v4199
    %v4201 = vpop.f32.mrb[0].mxu0
    %v4202 = vadd.f32 0.0, %v4201
    %4203 = vmatprep.mubr.f32.mxu0 %v2403
    %4204 = vmatmul.mubr.f32.gmra.mrb[0].mxu0 %v2402
    %v4205 = vpop.f32.mrb[0].mxu0
    %v4206 = vadd.f32 0.0, %v4205
    %v4207 = vpop.f32.mrb[0].mxu0
    %v4208 = vadd.f32 0.0, %v4207
    %4209 = vmatprep.mubr.f32.mxu0 %v2407
    %4210 = vmatmul.mubr.f32.gmra.mrb[0].mxu0 %v2406
    %v4211 = vpop.f32.mrb[0].mxu0
    %v4212 = vadd.f32 0.0, %v4211
    %v4213 = vpop.f32.mrb[0].mxu0
    %v4214 = vadd.f32 0.0, %v4213
    %4215 = vmatprep.mubr.f32.mxu0 %v2411
    %4216 = vmatmul.mubr.f32.gmra.mrb[0].mxu0 %v2410
    %v4217 = vpop.f32.mrb[0].mxu0
    %v4218 = vadd.f32 0.0, %v4217
    %v4219 = vpop.f32.mrb[0].mxu0
    %v4220 = vadd.f32 0.0, %v4219
    %4221 = vmatprep.mubr.f32.mxu0 %v2415
    %4222 = vmatmul.mubr.f32.gmra.mrb[0].mxu0 %v2414
    %v4223 = vpop.f32.mrb[0].mxu0
    %v4224 = vadd.f32 0.0, %v4223
    %v4225 = vpop.f32.mrb[0].mxu0
    %v4226 = vadd.f32 0.0, %v4225
    %4227 = vmatprep.mubr.f32.mxu0 %v2419
    %4228 = vmatmul.mubr.f32.gmra.mrb[0].mxu0 %v2418
    %v4229 = vpop.f32.mrb[0].mxu0
    %v4230 = vadd.f32 0.0, %v4229
    %v4231 = vpop.f32.mrb[0].mxu0
    %v4232 = vadd.f32 0.0, %v4231
    %4233 = vmatprep.mubr.f32.mxu0 %v2423
    %4234 = vmatmul.mubr.f32.gmra.mrb[0].mxu0 %v2422
    %v4235 = vpop.f32.mrb[0].mxu0
    %v4236 = vadd.f32 0.0, %v4235
    %v4237 = vpop.f32.mrb[0].mxu0
    %v4238 = vadd.f32 0.0, %v4237
    %4239 = vmatprep.mubr.f32.mxu0 %v2427
    %4240 = vmatmul.mubr.f32.gmra.mrb[0].mxu0 %v2426
    %v4241 = vpop.f32.mrb[0].mxu0
    %v4242 = vadd.f32 0.0, %v4241
    %v4243 = vpop.f32.mrb[0].mxu0
    %v4244 = vadd.f32 0.0, %v4243
    %4245 = vmatprep.mubr.f32.mxu0 %v2431
    %4246 = vmatmul.mubr.f32.gmra.mrb[0].mxu0 %v2430
    %v4247 = vpop.f32.mrb[0].mxu0
    %v4248 = vadd.f32 0.0, %v4247
    %v4249 = vpop.f32.mrb[0].mxu0
    %v4250 = vadd.f32 0.0, %v4249
    %4251 = vmatprep.mubr.f32.mxu0 %v2435
    %4252 = vmatmul.mubr.f32.gmra.mrb[0].mxu0 %v2434
    %v4253 = vpop.f32.mrb[0].mxu0
    %v4254 = vadd.f32 0.0, %v4253
    %v4255 = vpop.f32.mrb[0].mxu0
    %v4256 = vadd.f32 0.0, %v4255
    %4257 = vmatprep.mubr.f32.mxu0 %v2439
    %4258 = vmatmul.mubr.f32.gmra.mrb[0].mxu0 %v2438
    %v4259 = vpop.f32.mrb[0].mxu0
    %v4260 = vadd.f32 0.0, %v4259
    %v4261 = vpop.f32.mrb[0].mxu0
    %v4262 = vadd.f32 0.0, %v4261
    %4263 = vdwg.mxu0
    %4264 = vmatprep.subr.mxu0 %v3915
    %4265 = vmatpush1.msra.mxu0 %v3914
    %4266 = vmatprep.subr.mxu0 %v3922
    %4267 = vmatpush1.msra.mxu0 %v3921
    %4268 = vmatprep.subr.mxu0 %v3929
    %4269 = vmatpush1.msra.mxu0 %v3928
    %4270 = vmatprep.subr.mxu0 %v3936
    %4271 = vmatpush1.msra.mxu0 %v3935
    %4272 = vmatprep.subr.mxu0 %v3943
    %4273 = vmatpush1.msra.mxu0 %v3942
    %4274 = vmatprep.subr.mxu0 %v3950
    %4275 = vmatpush1.msra.mxu0 %v3949
    %4276 = vmatprep.subr.mxu0 %v3957
    %4277 = vmatpush1.msra.mxu0 %v3956
    %4278 = vmatprep.subr.mxu0 %v3964
    %4279 = vmatpush1.msra.mxu0 %v3963
    %4280 = vmatprep.subr.mxu0 %v3971
    %4281 = vmatpush1.msra.mxu0 %v3970
    %4282 = vmatprep.subr.mxu0 %v3978
    %4283 = vmatpush1.msra.mxu0 %v3977
    %4284 = vmatprep.subr.mxu0 %v3985
    %4285 = vmatpush1.msra.mxu0 %v3984
    %4286 = vmatprep.subr.mxu0 %v3992
    %4287 = vmatpush1.msra.mxu0 %v3991
    %4288 = vmatprep.subr.mxu0 %v3999
    %4289 = vmatpush1.msra.mxu0 %v3998
    %4290 = vmatprep.subr.mxu0 %v4006
    %4291 = vmatpush1.msra.mxu0 %v4005
    %4292 = vmatprep.subr.mxu0 %v4013
    %4293 = vmatpush1.msra.mxu0 %v4012
    %4294 = vmatprep.subr.mxu0 %v4020
    %4295 = vmatpush1.msra.mxu0 %v4019
    %4296 = vmatprep.subr.mxu0 %v4027
    %4297 = vmatpush1.msra.mxu0 %v4026
    %4298 = vmatprep.subr.mxu0 %v4034
    %4299 = vmatpush1.msra.mxu0 %v4033
    %4300 = vmatprep.subr.mxu0 %v4041
    %4301 = vmatpush1.msra.mxu0 %v4040
    %4302 = vmatprep.subr.mxu0 %v4048
    %4303 = vmatpush1.msra.mxu0 %v4047
    %4304 = vmatprep.subr.mxu0 0.0
    %4305 = vmatpush1.msra.mxu0 0.0
    %4306 = vmatprep.subr.mxu0 0.0
    %4307 = vmatpush1.msra.mxu0 0.0
    %4308 = vmatprep.subr.mxu0 0.0
    %4309 = vmatpush1.msra.mxu0 0.0
    %4310 = vmatprep.subr.mxu0 0.0
    %4311 = vmatpush1.msra.mxu0 0.0
    %4312 = vmatprep.subr.mxu0 0.0
    %4313 = vmatpush1.msra.mxu0 0.0
    %4314 = vmatprep.subr.mxu0 0.0
    %4315 = vmatpush1.msra.mxu0 0.0
    %4316 = vmatprep.subr.mxu0 0.0
    %4317 = vmatpush1.msra.mxu0 0.0
    %4318 = vmatprep.subr.mxu0 0.0
    %4319 = vmatpush1.msra.mxu0 0.0
    %4320 = vmatprep.subr.mxu0 0.0
    %4321 = vmatpush1.msra.mxu0 0.0
    %4322 = vmatprep.subr.mxu0 0.0
    %4323 = vmatpush1.msra.mxu0 0.0
    %4324 = vmatprep.subr.mxu0 0.0
    %4325 = vmatpush1.msra.mxu0 0.0
    %4326 = vmatprep.subr.mxu0 0.0
    %4327 = vmatpush1.msra.mxu0 0.0
    %4328 = vmatprep.mubr.f32.mxu0 %v4056
    %4329 = vmatmul.mubr.f32.gmra.mrb[0].mxu0 %v2380
    %v4330 = vpop.f32.mrb[0].mxu0
    %v4331 = vadd.f32 %v4170, %v4330
    %v4332 = vpop.f32.mrb[0].mxu0
    %v4333 = vadd.f32 %v4172, %v4332
    %4334 = vmatprep.mubr.f32.mxu0 %v4059
    %4335 = vmatmul.mubr.f32.gmra.mrb[0].mxu0 %v2384
    %v4336 = vpop.f32.mrb[0].mxu0
    %v4337 = vadd.f32 %v4176, %v4336
    %v4338 = vpop.f32.mrb[0].mxu0
    %v4339 = vadd.f32 %v4178, %v4338
    %4340 = vmatprep.mubr.f32.mxu0 %v4062
    %4341 = vmatmul.mubr.f32.gmra.mrb[0].mxu0 %v2388
    %v4342 = vpop.f32.mrb[0].mxu0
    %v4343 = vadd.f32 %v4182, %v4342
    %v4344 = vpop.f32.mrb[0].mxu0
    %v4345 = vadd.f32 %v4184, %v4344
    %4346 = vmatprep.mubr.f32.mxu0 %v4065
    %4347 = vmatmul.mubr.f32.gmra.mrb[0].mxu0 %v2392
    %v4348 = vpop.f32.mrb[0].mxu0
    %v4349 = vadd.f32 %v4188, %v4348
    %v4350 = vpop.f32.mrb[0].mxu0
    %v4351 = vadd.f32 %v4190, %v4350
    %4352 = vmatprep.mubr.f32.mxu0 %v4068
    %4353 = vmatmul.mubr.f32.gmra.mrb[0].mxu0 %v2396
    %v4354 = vpop.f32.mrb[0].mxu0
    %v4355 = vadd.f32 %v4194, %v4354
    %v4356 = vpop.f32.mrb[0].mxu0
    %v4357 = vadd.f32 %v4196, %v4356
    %4358 = vmatprep.mubr.f32.mxu0 %v4071
    %4359 = vmatmul.mubr.f32.gmra.mrb[0].mxu0 %v2400
    %v4360 = vpop.f32.mrb[0].mxu0
    %v4361 = vadd.f32 %v4200, %v4360
    %v4362 = vpop.f32.mrb[0].mxu0
    %v4363 = vadd.f32 %v4202, %v4362
    %4364 = vmatprep.mubr.f32.mxu0 %v4074
    %4365 = vmatmul.mubr.f32.gmra.mrb[0].mxu0 %v2404
    %v4366 = vpop.f32.mrb[0].mxu0
    %v4367 = vadd.f32 %v4206, %v4366
    %v4368 = vpop.f32.mrb[0].mxu0
    %v4369 = vadd.f32 %v4208, %v4368
    %4370 = vmatprep.mubr.f32.mxu0 %v4077
    %4371 = vmatmul.mubr.f32.gmra.mrb[0].mxu0 %v2408
    %v4372 = vpop.f32.mrb[0].mxu0
    %v4373 = vadd.f32 %v4212, %v4372
    %v4374 = vpop.f32.mrb[0].mxu0
    %v4375 = vadd.f32 %v4214, %v4374
    %4376 = vmatprep.mubr.f32.mxu0 %v4080
    %4377 = vmatmul.mubr.f32.gmra.mrb[0].mxu0 %v2412
    %v4378 = vpop.f32.mrb[0].mxu0
    %v4379 = vadd.f32 %v4218, %v4378
    %v4380 = vpop.f32.mrb[0].mxu0
    %v4381 = vadd.f32 %v4220, %v4380
    %4382 = vmatprep.mubr.f32.mxu0 %v4083
    %4383 = vmatmul.mubr.f32.gmra.mrb[0].mxu0 %v2416
    %v4384 = vpop.f32.mrb[0].mxu0
    %v4385 = vadd.f32 %v4224, %v4384
    %v4386 = vpop.f32.mrb[0].mxu0
    %v4387 = vadd.f32 %v4226, %v4386
    %4388 = vmatprep.mubr.f32.mxu0 %v4086
    %4389 = vmatmul.mubr.f32.gmra.mrb[0].mxu0 %v2420
    %v4390 = vpop.f32.mrb[0].mxu0
    %v4391 = vadd.f32 %v4230, %v4390
    %v4392 = vpop.f32.mrb[0].mxu0
    %v4393 = vadd.f32 %v4232, %v4392
    %4394 = vmatprep.mubr.f32.mxu0 %v4089
    %4395 = vmatmul.mubr.f32.gmra.mrb[0].mxu0 %v2424
    %v4396 = vpop.f32.mrb[0].mxu0
    %v4397 = vadd.f32 %v4236, %v4396
    %v4398 = vpop.f32.mrb[0].mxu0
    %v4399 = vadd.f32 %v4238, %v4398
    %4400 = vmatprep.mubr.f32.mxu0 %v4092
    %4401 = vmatmul.mubr.f32.gmra.mrb[0].mxu0 %v2428
    %v4402 = vpop.f32.mrb[0].mxu0
    %v4403 = vadd.f32 %v4242, %v4402
    %v4404 = vpop.f32.mrb[0].mxu0
    %v4405 = vadd.f32 %v4244, %v4404
    %4406 = vmatprep.mubr.f32.mxu0 %v4095
    %4407 = vmatmul.mubr.f32.gmra.mrb[0].mxu0 %v2432
    %v4408 = vpop.f32.mrb[0].mxu0
    %v4409 = vadd.f32 %v4248, %v4408
    %v4410 = vpop.f32.mrb[0].mxu0
    %v4411 = vadd.f32 %v4250, %v4410
    %4412 = vmatprep.mubr.f32.mxu0 %v4098
    %4413 = vmatmul.mubr.f32.gmra.mrb[0].mxu0 %v2436
    %v4414 = vpop.f32.mrb[0].mxu0
    %v4415 = vadd.f32 %v4254, %v4414
    %v4416 = vpop.f32.mrb[0].mxu0
    %v4417 = vadd.f32 %v4256, %v4416
    %4418 = vmatprep.mubr.f32.mxu0 %v4101
    %4419 = vmatmul.mubr.f32.gmra.mrb[0].mxu0 %v2440
    %v4420 = vpop.f32.mrb[0].mxu0
    %v4421 = vadd.f32 %v4260, %v4420
    %v4422 = vpop.f32.mrb[0].mxu0
    %v4423 = vadd.f32 %v4262, %v4422
    %4424 = vdwg.mxu0
    %4425 = vmatprep.subr.mxu0 %v3693
    %4426 = vmatpush1.msra.mxu0 %v3692
    %4427 = vmatprep.subr.mxu0 %v3700
    %4428 = vmatpush1.msra.mxu0 %v3699
    %4429 = vmatprep.subr.mxu0 %v3707
    %4430 = vmatpush1.msra.mxu0 %v3706
    %4431 = vmatprep.subr.mxu0 %v3714
    %4432 = vmatpush1.msra.mxu0 %v3713
    %4433 = vmatprep.subr.mxu0 %v3721
    %4434 = vmatpush1.msra.mxu0 %v3720
    %4435 = vmatprep.subr.mxu0 %v3728
    %4436 = vmatpush1.msra.mxu0 %v3727
    %4437 = vmatprep.subr.mxu0 %v3735
    %4438 = vmatpush1.msra.mxu0 %v3734
    %4439 = vmatprep.subr.mxu0 %v3742
    %4440 = vmatpush1.msra.mxu0 %v3741
    %4441 = vmatprep.subr.mxu0 %v3749
    %4442 = vmatpush1.msra.mxu0 %v3748
    %4443 = vmatprep.subr.mxu0 %v3756
    %4444 = vmatpush1.msra.mxu0 %v3755
    %4445 = vmatprep.subr.mxu0 %v3763
    %4446 = vmatpush1.msra.mxu0 %v3762
    %4447 = vmatprep.subr.mxu0 %v3770
    %4448 = vmatpush1.msra.mxu0 %v3769
    %4449 = vmatprep.subr.mxu0 %v3777
    %4450 = vmatpush1.msra.mxu0 %v3776
    %4451 = vmatprep.subr.mxu0 %v3784
    %4452 = vmatpush1.msra.mxu0 %v3783
    %4453 = vmatprep.subr.mxu0 %v3791
    %4454 = vmatpush1.msra.mxu0 %v3790
    %4455 = vmatprep.subr.mxu0 %v3798
    %4456 = vmatpush1.msra.mxu0 %v3797
    %4457 = vmatprep.subr.mxu0 %v3805
    %4458 = vmatpush1.msra.mxu0 %v3804
    %4459 = vmatprep.subr.mxu0 %v3812
    %4460 = vmatpush1.msra.mxu0 %v3811
    %4461 = vmatprep.subr.mxu0 %v3819
    %4462 = vmatpush1.msra.mxu0 %v3818
    %4463 = vmatprep.subr.mxu0 %v3826
    %4464 = vmatpush1.msra.mxu0 %v3825
    %4465 = vmatprep.subr.mxu0 %v3833
    %4466 = vmatpush1.msra.mxu0 %v3832
    %4467 = vmatprep.subr.mxu0 %v3840
    %4468 = vmatpush1.msra.mxu0 %v3839
    %4469 = vmatprep.subr.mxu0 %v3847
    %4470 = vmatpush1.msra.mxu0 %v3846
    %4471 = vmatprep.subr.mxu0 %v3854
    %4472 = vmatpush1.msra.mxu0 %v3853
    %4473 = vmatprep.subr.mxu0 %v3861
    %4474 = vmatpush1.msra.mxu0 %v3860
    %4475 = vmatprep.subr.mxu0 %v3868
    %4476 = vmatpush1.msra.mxu0 %v3867
    %4477 = vmatprep.subr.mxu0 %v3875
    %4478 = vmatpush1.msra.mxu0 %v3874
    %4479 = vmatprep.subr.mxu0 %v3882
    %4480 = vmatpush1.msra.mxu0 %v3881
    %4481 = vmatprep.subr.mxu0 %v3889
    %4482 = vmatpush1.msra.mxu0 %v3888
    %4483 = vmatprep.subr.mxu0 %v3896
    %4484 = vmatpush1.msra.mxu0 %v3895
    %4485 = vmatprep.subr.mxu0 %v3903
    %4486 = vmatpush1.msra.mxu0 %v3902
    %4487 = vmatprep.subr.mxu0 %v3910
    %4488 = vmatpush1.msra.mxu0 %v3909
    %4489 = vmatprep.mubr.f32.mxu0 %v2379
    %4490 = vmatmul.mubr.f32.gmra.mrb[0].mxu0 %v2378
    %v4491 = vpop.f32.mrb[0].mxu0
    %v4492 = vadd.f32 0.0, %v4491
    %v4493 = vpop.f32.mrb[0].mxu0
    %v4494 = vadd.f32 0.0, %v4493
    %4495 = vmatprep.mubr.f32.mxu0 %v2383
    %4496 = vmatmul.mubr.f32.gmra.mrb[0].mxu0 %v2382
    %v4497 = vpop.f32.mrb[0].mxu0
    %v4498 = vadd.f32 0.0, %v4497
    %v4499 = vpop.f32.mrb[0].mxu0
    %v4500 = vadd.f32 0.0, %v4499
    %4501 = vmatprep.mubr.f32.mxu0 %v2387
    %4502 = vmatmul.mubr.f32.gmra.mrb[0].mxu0 %v2386
    %v4503 = vpop.f32.mrb[0].mxu0
    %v4504 = vadd.f32 0.0, %v4503
    %v4505 = vpop.f32.mrb[0].mxu0
    %v4506 = vadd.f32 0.0, %v4505
    %4507 = vmatprep.mubr.f32.mxu0 %v2391
    %4508 = vmatmul.mubr.f32.gmra.mrb[0].mxu0 %v2390
    %v4509 = vpop.f32.mrb[0].mxu0
    %v4510 = vadd.f32 0.0, %v4509
    %v4511 = vpop.f32.mrb[0].mxu0
    %v4512 = vadd.f32 0.0, %v4511
    %4513 = vmatprep.mubr.f32.mxu0 %v2395
    %4514 = vmatmul.mubr.f32.gmra.mrb[0].mxu0 %v2394
    %v4515 = vpop.f32.mrb[0].mxu0
    %v4516 = vadd.f32 0.0, %v4515
    %v4517 = vpop.f32.mrb[0].mxu0
    %v4518 = vadd.f32 0.0, %v4517
    %4519 = vmatprep.mubr.f32.mxu0 %v2399
    %4520 = vmatmul.mubr.f32.gmra.mrb[0].mxu0 %v2398
    %v4521 = vpop.f32.mrb[0].mxu0
    %v4522 = vadd.f32 0.0, %v4521
    %v4523 = vpop.f32.mrb[0].mxu0
    %v4524 = vadd.f32 0.0, %v4523
    %4525 = vmatprep.mubr.f32.mxu0 %v2403
    %4526 = vmatmul.mubr.f32.gmra.mrb[0].mxu0 %v2402
    %v4527 = vpop.f32.mrb[0].mxu0
    %v4528 = vadd.f32 0.0, %v4527
    %v4529 = vpop.f32.mrb[0].mxu0
    %v4530 = vadd.f32 0.0, %v4529
    %4531 = vmatprep.mubr.f32.mxu0 %v2407
    %4532 = vmatmul.mubr.f32.gmra.mrb[0].mxu0 %v2406
    %v4533 = vpop.f32.mrb[0].mxu0
    %v4534 = vadd.f32 0.0, %v4533
    %v4535 = vpop.f32.mrb[0].mxu0
    %v4536 = vadd.f32 0.0, %v4535
    %4537 = vmatprep.mubr.f32.mxu0 %v2411
    %4538 = vmatmul.mubr.f32.gmra.mrb[0].mxu0 %v2410
    %v4539 = vpop.f32.mrb[0].mxu0
    %v4540 = vadd.f32 0.0, %v4539
    %v4541 = vpop.f32.mrb[0].mxu0
    %v4542 = vadd.f32 0.0, %v4541
    %4543 = vmatprep.mubr.f32.mxu0 %v2415
    %4544 = vmatmul.mubr.f32.gmra.mrb[0].mxu0 %v2414
    %v4545 = vpop.f32.mrb[0].mxu0
    %v4546 = vadd.f32 0.0, %v4545
    %v4547 = vpop.f32.mrb[0].mxu0
    %v4548 = vadd.f32 0.0, %v4547
    %4549 = vmatprep.mubr.f32.mxu0 %v2419
    %4550 = vmatmul.mubr.f32.gmra.mrb[0].mxu0 %v2418
    %v4551 = vpop.f32.mrb[0].mxu0
    %v4552 = vadd.f32 0.0, %v4551
    %v4553 = vpop.f32.mrb[0].mxu0
    %v4554 = vadd.f32 0.0, %v4553
    %4555 = vmatprep.mubr.f32.mxu0 %v2423
    %4556 = vmatmul.mubr.f32.gmra.mrb[0].mxu0 %v2422
    %v4557 = vpop.f32.mrb[0].mxu0
    %v4558 = vadd.f32 0.0, %v4557
    %v4559 = vpop.f32.mrb[0].mxu0
    %v4560 = vadd.f32 0.0, %v4559
    %4561 = vmatprep.mubr.f32.mxu0 %v2427
    %4562 = vmatmul.mubr.f32.gmra.mrb[0].mxu0 %v2426
    %v4563 = vpop.f32.mrb[0].mxu0
    %v4564 = vadd.f32 0.0, %v4563
    %v4565 = vpop.f32.mrb[0].mxu0
    %v4566 = vadd.f32 0.0, %v4565
    %4567 = vmatprep.mubr.f32.mxu0 %v2431
    %4568 = vmatmul.mubr.f32.gmra.mrb[0].mxu0 %v2430
    %v4569 = vpop.f32.mrb[0].mxu0
    %v4570 = vadd.f32 0.0, %v4569
    %v4571 = vpop.f32.mrb[0].mxu0
    %v4572 = vadd.f32 0.0, %v4571
    %4573 = vmatprep.mubr.f32.mxu0 %v2435
    %4574 = vmatmul.mubr.f32.gmra.mrb[0].mxu0 %v2434
    %v4575 = vpop.f32.mrb[0].mxu0
    %v4576 = vadd.f32 0.0, %v4575
    %v4577 = vpop.f32.mrb[0].mxu0
    %v4578 = vadd.f32 0.0, %v4577
    %4579 = vmatprep.mubr.f32.mxu0 %v2439
    %4580 = vmatmul.mubr.f32.gmra.mrb[0].mxu0 %v2438
    %v4581 = vpop.f32.mrb[0].mxu0
    %v4582 = vadd.f32 0.0, %v4581
    %v4583 = vpop.f32.mrb[0].mxu0
    %v4584 = vadd.f32 0.0, %v4583
    %4585 = vdwg.mxu0
    %4586 = vmatprep.subr.mxu0 %v3917
    %4587 = vmatpush1.msra.mxu0 %v3916
    %4588 = vmatprep.subr.mxu0 %v3924
    %4589 = vmatpush1.msra.mxu0 %v3923
    %4590 = vmatprep.subr.mxu0 %v3931
    %4591 = vmatpush1.msra.mxu0 %v3930
    %4592 = vmatprep.subr.mxu0 %v3938
    %4593 = vmatpush1.msra.mxu0 %v3937
    %4594 = vmatprep.subr.mxu0 %v3945
    %4595 = vmatpush1.msra.mxu0 %v3944
    %4596 = vmatprep.subr.mxu0 %v3952
    %4597 = vmatpush1.msra.mxu0 %v3951
    %4598 = vmatprep.subr.mxu0 %v3959
    %4599 = vmatpush1.msra.mxu0 %v3958
    %4600 = vmatprep.subr.mxu0 %v3966
    %4601 = vmatpush1.msra.mxu0 %v3965
    %4602 = vmatprep.subr.mxu0 %v3973
    %4603 = vmatpush1.msra.mxu0 %v3972
    %4604 = vmatprep.subr.mxu0 %v3980
    %4605 = vmatpush1.msra.mxu0 %v3979
    %4606 = vmatprep.subr.mxu0 %v3987
    %4607 = vmatpush1.msra.mxu0 %v3986
    %4608 = vmatprep.subr.mxu0 %v3994
    %4609 = vmatpush1.msra.mxu0 %v3993
    %4610 = vmatprep.subr.mxu0 %v4001
    %4611 = vmatpush1.msra.mxu0 %v4000
    %4612 = vmatprep.subr.mxu0 %v4008
    %4613 = vmatpush1.msra.mxu0 %v4007
    %4614 = vmatprep.subr.mxu0 %v4015
    %4615 = vmatpush1.msra.mxu0 %v4014
    %4616 = vmatprep.subr.mxu0 %v4022
    %4617 = vmatpush1.msra.mxu0 %v4021
    %4618 = vmatprep.subr.mxu0 %v4029
    %4619 = vmatpush1.msra.mxu0 %v4028
    %4620 = vmatprep.subr.mxu0 %v4036
    %4621 = vmatpush1.msra.mxu0 %v4035
    %4622 = vmatprep.subr.mxu0 %v4043
    %4623 = vmatpush1.msra.mxu0 %v4042
    %4624 = vmatprep.subr.mxu0 %v4050
    %4625 = vmatpush1.msra.mxu0 %v4049
    %4626 = vmatprep.subr.mxu0 0.0
    %4627 = vmatpush1.msra.mxu0 0.0
    %4628 = vmatprep.subr.mxu0 0.0
    %4629 = vmatpush1.msra.mxu0 0.0
    %4630 = vmatprep.subr.mxu0 0.0
    %4631 = vmatpush1.msra.mxu0 0.0
    %4632 = vmatprep.subr.mxu0 0.0
    %4633 = vmatpush1.msra.mxu0 0.0
    %4634 = vmatprep.subr.mxu0 0.0
    %4635 = vmatpush1.msra.mxu0 0.0
    %4636 = vmatprep.subr.mxu0 0.0
    %4637 = vmatpush1.msra.mxu0 0.0
    %4638 = vmatprep.subr.mxu0 0.0
    %4639 = vmatpush1.msra.mxu0 0.0
    %4640 = vmatprep.subr.mxu0 0.0
    %4641 = vmatpush1.msra.mxu0 0.0
    %4642 = vmatprep.subr.mxu0 0.0
    %4643 = vmatpush1.msra.mxu0 0.0
    %4644 = vmatprep.subr.mxu0 0.0
    %4645 = vmatpush1.msra.mxu0 0.0
    %4646 = vmatprep.subr.mxu0 0.0
    %4647 = vmatpush1.msra.mxu0 0.0
    %4648 = vmatprep.subr.mxu0 0.0
    %4649 = vmatpush1.msra.mxu0 0.0
    %4650 = vmatprep.mubr.f32.mxu0 %v4056
    %4651 = vmatmul.mubr.f32.gmra.mrb[0].mxu0 %v2380
    %v4652 = vpop.f32.mrb[0].mxu0
    %v4653 = vadd.f32 %v4492, %v4652
    %v4654 = vpop.f32.mrb[0].mxu0
    %v4655 = vadd.f32 %v4494, %v4654
    %4656 = vmatprep.mubr.f32.mxu0 %v4059
    %4657 = vmatmul.mubr.f32.gmra.mrb[0].mxu0 %v2384
    %v4658 = vpop.f32.mrb[0].mxu0
    %v4659 = vadd.f32 %v4498, %v4658
    %v4660 = vpop.f32.mrb[0].mxu0
    %v4661 = vadd.f32 %v4500, %v4660
    %4662 = vmatprep.mubr.f32.mxu0 %v4062
    %4663 = vmatmul.mubr.f32.gmra.mrb[0].mxu0 %v2388
    %v4664 = vpop.f32.mrb[0].mxu0
    %v4665 = vadd.f32 %v4504, %v4664
    %v4666 = vpop.f32.mrb[0].mxu0
    %v4667 = vadd.f32 %v4506, %v4666
    %4668 = vmatprep.mubr.f32.mxu0 %v4065
    %4669 = vmatmul.mubr.f32.gmra.mrb[0].mxu0 %v2392
    %v4670 = vpop.f32.mrb[0].mxu0
    %v4671 = vadd.f32 %v4510, %v4670
    %v4672 = vpop.f32.mrb[0].mxu0
    %v4673 = vadd.f32 %v4512, %v4672
    %4674 = vmatprep.mubr.f32.mxu0 %v4068
    %4675 = vmatmul.mubr.f32.gmra.mrb[0].mxu0 %v2396
    %v4676 = vpop.f32.mrb[0].mxu0
    %v4677 = vadd.f32 %v4516, %v4676
    %v4678 = vpop.f32.mrb[0].mxu0
    %v4679 = vadd.f32 %v4518, %v4678
    %4680 = vmatprep.mubr.f32.mxu0 %v4071
    %4681 = vmatmul.mubr.f32.gmra.mrb[0].mxu0 %v2400
    %v4682 = vpop.f32.mrb[0].mxu0
    %v4683 = vadd.f32 %v4522, %v4682
    %v4684 = vpop.f32.mrb[0].mxu0
    %v4685 = vadd.f32 %v4524, %v4684
    %4686 = vmatprep.mubr.f32.mxu0 %v4074
    %4687 = vmatmul.mubr.f32.gmra.mrb[0].mxu0 %v2404
    %v4688 = vpop.f32.mrb[0].mxu0
    %v4689 = vadd.f32 %v4528, %v4688
    %v4690 = vpop.f32.mrb[0].mxu0
    %v4691 = vadd.f32 %v4530, %v4690
    %4692 = vmatprep.mubr.f32.mxu0 %v4077
    %4693 = vmatmul.mubr.f32.gmra.mrb[0].mxu0 %v2408
    %v4694 = vpop.f32.mrb[0].mxu0
    %v4695 = vadd.f32 %v4534, %v4694
    %v4696 = vpop.f32.mrb[0].mxu0
    %v4697 = vadd.f32 %v4536, %v4696
    %4698 = vmatprep.mubr.f32.mxu0 %v4080
    %4699 = vmatmul.mubr.f32.gmra.mrb[0].mxu0 %v2412
    %v4700 = vpop.f32.mrb[0].mxu0
    %v4701 = vadd.f32 %v4540, %v4700
    %v4702 = vpop.f32.mrb[0].mxu0
    %v4703 = vadd.f32 %v4542, %v4702
    %4704 = vmatprep.mubr.f32.mxu0 %v4083
    %4705 = vmatmul.mubr.f32.gmra.mrb[0].mxu0 %v2416
    %v4706 = vpop.f32.mrb[0].mxu0
    %v4707 = vadd.f32 %v4546, %v4706
    %v4708 = vpop.f32.mrb[0].mxu0
    %v4709 = vadd.f32 %v4548, %v4708
    %4710 = vmatprep.mubr.f32.mxu0 %v4086
    %4711 = vmatmul.mubr.f32.gmra.mrb[0].mxu0 %v2420
    %v4712 = vpop.f32.mrb[0].mxu0
    %v4713 = vadd.f32 %v4552, %v4712
    %v4714 = vpop.f32.mrb[0].mxu0
    %v4715 = vadd.f32 %v4554, %v4714
    %4716 = vmatprep.mubr.f32.mxu0 %v4089
    %4717 = vmatmul.mubr.f32.gmra.mrb[0].mxu0 %v2424
    %v4718 = vpop.f32.mrb[0].mxu0
    %v4719 = vadd.f32 %v4558, %v4718
    %v4720 = vpop.f32.mrb[0].mxu0
    %v4721 = vadd.f32 %v4560, %v4720
    %4722 = vmatprep.mubr.f32.mxu0 %v4092
    %4723 = vmatmul.mubr.f32.gmra.mrb[0].mxu0 %v2428
    %v4724 = vpop.f32.mrb[0].mxu0
    %v4725 = vadd.f32 %v4564, %v4724
    %v4726 = vpop.f32.mrb[0].mxu0
    %v4727 = vadd.f32 %v4566, %v4726
    %4728 = vmatprep.mubr.f32.mxu0 %v4095
    %4729 = vmatmul.mubr.f32.gmra.mrb[0].mxu0 %v2432
    %v4730 = vpop.f32.mrb[0].mxu0
    %v4731 = vadd.f32 %v4570, %v4730
    %v4732 = vpop.f32.mrb[0].mxu0
    %v4733 = vadd.f32 %v4572, %v4732
    %4734 = vmatprep.mubr.f32.mxu0 %v4098
    %4735 = vmatmul.mubr.f32.gmra.mrb[0].mxu0 %v2436
    %v4736 = vpop.f32.mrb[0].mxu0
    %v4737 = vadd.f32 %v4576, %v4736
    %v4738 = vpop.f32.mrb[0].mxu0
    %v4739 = vadd.f32 %v4578, %v4738
    %4740 = vmatprep.mubr.f32.mxu0 %v4101
    %4741 = vmatmul.mubr.f32.gmra.mrb[0].mxu0 %v2440
    %v4742 = vpop.f32.mrb[0].mxu0
    %v4743 = vadd.f32 %v4582, %v4742
    %v4744 = vpop.f32.mrb[0].mxu0
    %v4745 = vadd.f32 %v4584, %v4744
    %4746 = vdwg.mxu0
    %4747 = vmatprep.subr.mxu0 %v3695
    %4748 = vmatpush1.msra.mxu0 %v3694
    %4749 = vmatprep.subr.mxu0 %v3702
    %4750 = vmatpush1.msra.mxu0 %v3701
    %4751 = vmatprep.subr.mxu0 %v3709
    %4752 = vmatpush1.msra.mxu0 %v3708
    %4753 = vmatprep.subr.mxu0 %v3716
    %4754 = vmatpush1.msra.mxu0 %v3715
    %4755 = vmatprep.subr.mxu0 %v3723
    %4756 = vmatpush1.msra.mxu0 %v3722
    %4757 = vmatprep.subr.mxu0 %v3730
    %4758 = vmatpush1.msra.mxu0 %v3729
    %4759 = vmatprep.subr.mxu0 %v3737
    %4760 = vmatpush1.msra.mxu0 %v3736
    %4761 = vmatprep.subr.mxu0 %v3744
    %4762 = vmatpush1.msra.mxu0 %v3743
    %4763 = vmatprep.subr.mxu0 %v3751
    %4764 = vmatpush1.msra.mxu0 %v3750
    %4765 = vmatprep.subr.mxu0 %v3758
    %4766 = vmatpush1.msra.mxu0 %v3757
    %4767 = vmatprep.subr.mxu0 %v3765
    %4768 = vmatpush1.msra.mxu0 %v3764
    %4769 = vmatprep.subr.mxu0 %v3772
    %4770 = vmatpush1.msra.mxu0 %v3771
    %4771 = vmatprep.subr.mxu0 %v3779
    %4772 = vmatpush1.msra.mxu0 %v3778
    %4773 = vmatprep.subr.mxu0 %v3786
    %4774 = vmatpush1.msra.mxu0 %v3785
    %4775 = vmatprep.subr.mxu0 %v3793
    %4776 = vmatpush1.msra.mxu0 %v3792
    %4777 = vmatprep.subr.mxu0 %v3800
    %4778 = vmatpush1.msra.mxu0 %v3799
    %4779 = vmatprep.subr.mxu0 %v3807
    %4780 = vmatpush1.msra.mxu0 %v3806
    %4781 = vmatprep.subr.mxu0 %v3814
    %4782 = vmatpush1.msra.mxu0 %v3813
    %4783 = vmatprep.subr.mxu0 %v3821
    %4784 = vmatpush1.msra.mxu0 %v3820
    %4785 = vmatprep.subr.mxu0 %v3828
    %4786 = vmatpush1.msra.mxu0 %v3827
    %4787 = vmatprep.subr.mxu0 %v3835
    %4788 = vmatpush1.msra.mxu0 %v3834
    %4789 = vmatprep.subr.mxu0 %v3842
    %4790 = vmatpush1.msra.mxu0 %v3841
    %4791 = vmatprep.subr.mxu0 %v3849
    %4792 = vmatpush1.msra.mxu0 %v3848
    %4793 = vmatprep.subr.mxu0 %v3856
    %4794 = vmatpush1.msra.mxu0 %v3855
    %4795 = vmatprep.subr.mxu0 %v3863
    %4796 = vmatpush1.msra.mxu0 %v3862
    %4797 = vmatprep.subr.mxu0 %v3870
    %4798 = vmatpush1.msra.mxu0 %v3869
    %4799 = vmatprep.subr.mxu0 %v3877
    %4800 = vmatpush1.msra.mxu0 %v3876
    %4801 = vmatprep.subr.mxu0 %v3884
    %4802 = vmatpush1.msra.mxu0 %v3883
    %4803 = vmatprep.subr.mxu0 %v3891
    %4804 = vmatpush1.msra.mxu0 %v3890
    %4805 = vmatprep.subr.mxu0 %v3898
    %4806 = vmatpush1.msra.mxu0 %v3897
    %4807 = vmatprep.subr.mxu0 %v3905
    %4808 = vmatpush1.msra.mxu0 %v3904
    %4809 = vmatprep.subr.mxu0 %v3912
    %4810 = vmatpush1.msra.mxu0 %v3911
    %4811 = vmatprep.mubr.f32.mxu0 %v2379
    %4812 = vmatmul.mubr.f32.gmra.mrb[0].mxu0 %v2378
    %v4813 = vpop.f32.mrb[0].mxu0
    %v4814 = vadd.f32 0.0, %v4813
    %v4815 = vpop.f32.mrb[0].mxu0
    %v4816 = vadd.f32 0.0, %v4815
    %4817 = vmatprep.mubr.f32.mxu0 %v2383
    %4818 = vmatmul.mubr.f32.gmra.mrb[0].mxu0 %v2382
    %v4819 = vpop.f32.mrb[0].mxu0
    %v4820 = vadd.f32 0.0, %v4819
    %v4821 = vpop.f32.mrb[0].mxu0
    %v4822 = vadd.f32 0.0, %v4821
    %4823 = vmatprep.mubr.f32.mxu0 %v2387
    %4824 = vmatmul.mubr.f32.gmra.mrb[0].mxu0 %v2386
    %v4825 = vpop.f32.mrb[0].mxu0
    %v4826 = vadd.f32 0.0, %v4825
    %v4827 = vpop.f32.mrb[0].mxu0
    %v4828 = vadd.f32 0.0, %v4827
    %4829 = vmatprep.mubr.f32.mxu0 %v2391
    %4830 = vmatmul.mubr.f32.gmra.mrb[0].mxu0 %v2390
    %v4831 = vpop.f32.mrb[0].mxu0
    %v4832 = vadd.f32 0.0, %v4831
    %v4833 = vpop.f32.mrb[0].mxu0
    %v4834 = vadd.f32 0.0, %v4833
    %4835 = vmatprep.mubr.f32.mxu0 %v2395
    %4836 = vmatmul.mubr.f32.gmra.mrb[0].mxu0 %v2394
    %v4837 = vpop.f32.mrb[0].mxu0
    %v4838 = vadd.f32 0.0, %v4837
    %v4839 = vpop.f32.mrb[0].mxu0
    %v4840 = vadd.f32 0.0, %v4839
    %4841 = vmatprep.mubr.f32.mxu0 %v2399
    %4842 = vmatmul.mubr.f32.gmra.mrb[0].mxu0 %v2398
    %v4843 = vpop.f32.mrb[0].mxu0
    %v4844 = vadd.f32 0.0, %v4843
    %v4845 = vpop.f32.mrb[0].mxu0
    %v4846 = vadd.f32 0.0, %v4845
    %4847 = vmatprep.mubr.f32.mxu0 %v2403
    %4848 = vmatmul.mubr.f32.gmra.mrb[0].mxu0 %v2402
    %v4849 = vpop.f32.mrb[0].mxu0
    %v4850 = vadd.f32 0.0, %v4849
    %v4851 = vpop.f32.mrb[0].mxu0
    %v4852 = vadd.f32 0.0, %v4851
    %4853 = vmatprep.mubr.f32.mxu0 %v2407
    %4854 = vmatmul.mubr.f32.gmra.mrb[0].mxu0 %v2406
    %v4855 = vpop.f32.mrb[0].mxu0
    %v4856 = vadd.f32 0.0, %v4855
    %v4857 = vpop.f32.mrb[0].mxu0
    %v4858 = vadd.f32 0.0, %v4857
    %4859 = vmatprep.mubr.f32.mxu0 %v2411
    %4860 = vmatmul.mubr.f32.gmra.mrb[0].mxu0 %v2410
    %v4861 = vpop.f32.mrb[0].mxu0
    %v4862 = vadd.f32 0.0, %v4861
    %v4863 = vpop.f32.mrb[0].mxu0
    %v4864 = vadd.f32 0.0, %v4863
    %4865 = vmatprep.mubr.f32.mxu0 %v2415
    %4866 = vmatmul.mubr.f32.gmra.mrb[0].mxu0 %v2414
    %v4867 = vpop.f32.mrb[0].mxu0
    %v4868 = vadd.f32 0.0, %v4867
    %v4869 = vpop.f32.mrb[0].mxu0
    %v4870 = vadd.f32 0.0, %v4869
    %4871 = vmatprep.mubr.f32.mxu0 %v2419
    %4872 = vmatmul.mubr.f32.gmra.mrb[0].mxu0 %v2418
    %v4873 = vpop.f32.mrb[0].mxu0
    %v4874 = vadd.f32 0.0, %v4873
    %v4875 = vpop.f32.mrb[0].mxu0
    %v4876 = vadd.f32 0.0, %v4875
    %4877 = vmatprep.mubr.f32.mxu0 %v2423
    %4878 = vmatmul.mubr.f32.gmra.mrb[0].mxu0 %v2422
    %v4879 = vpop.f32.mrb[0].mxu0
    %v4880 = vadd.f32 0.0, %v4879
    %v4881 = vpop.f32.mrb[0].mxu0
    %v4882 = vadd.f32 0.0, %v4881
    %4883 = vmatprep.mubr.f32.mxu0 %v2427
    %4884 = vmatmul.mubr.f32.gmra.mrb[0].mxu0 %v2426
    %v4885 = vpop.f32.mrb[0].mxu0
    %v4886 = vadd.f32 0.0, %v4885
    %v4887 = vpop.f32.mrb[0].mxu0
    %v4888 = vadd.f32 0.0, %v4887
    %4889 = vmatprep.mubr.f32.mxu0 %v2431
    %4890 = vmatmul.mubr.f32.gmra.mrb[0].mxu0 %v2430
    %v4891 = vpop.f32.mrb[0].mxu0
    %v4892 = vadd.f32 0.0, %v4891
    %v4893 = vpop.f32.mrb[0].mxu0
    %v4894 = vadd.f32 0.0, %v4893
    %4895 = vmatprep.mubr.f32.mxu0 %v2435
    %4896 = vmatmul.mubr.f32.gmra.mrb[0].mxu0 %v2434
    %v4897 = vpop.f32.mrb[0].mxu0
    %v4898 = vadd.f32 0.0, %v4897
    %v4899 = vpop.f32.mrb[0].mxu0
    %v4900 = vadd.f32 0.0, %v4899
    %4901 = vmatprep.mubr.f32.mxu0 %v2439
    %4902 = vmatmul.mubr.f32.gmra.mrb[0].mxu0 %v2438
    %v4903 = vpop.f32.mrb[0].mxu0
    %v4904 = vadd.f32 0.0, %v4903
    %v4905 = vpop.f32.mrb[0].mxu0
    %v4906 = vadd.f32 0.0, %v4905
    %4907 = vdwg.mxu0
    %4908 = vmatprep.subr.mxu0 %v3919
    %4909 = vmatpush1.msra.mxu0 %v3918
    %4910 = vmatprep.subr.mxu0 %v3926
    %4911 = vmatpush1.msra.mxu0 %v3925
    %4912 = vmatprep.subr.mxu0 %v3933
    %4913 = vmatpush1.msra.mxu0 %v3932
    %4914 = vmatprep.subr.mxu0 %v3940
    %4915 = vmatpush1.msra.mxu0 %v3939
    %4916 = vmatprep.subr.mxu0 %v3947
    %4917 = vmatpush1.msra.mxu0 %v3946
    %4918 = vmatprep.subr.mxu0 %v3954
    %4919 = vmatpush1.msra.mxu0 %v3953
    %4920 = vmatprep.subr.mxu0 %v3961
    %4921 = vmatpush1.msra.mxu0 %v3960
    %4922 = vmatprep.subr.mxu0 %v3968
    %4923 = vmatpush1.msra.mxu0 %v3967
    %4924 = vmatprep.subr.mxu0 %v3975
    %4925 = vmatpush1.msra.mxu0 %v3974
    %4926 = vmatprep.subr.mxu0 %v3982
    %4927 = vmatpush1.msra.mxu0 %v3981
    %4928 = vmatprep.subr.mxu0 %v3989
    %4929 = vmatpush1.msra.mxu0 %v3988
    %4930 = vmatprep.subr.mxu0 %v3996
    %4931 = vmatpush1.msra.mxu0 %v3995
    %4932 = vmatprep.subr.mxu0 %v4003
    %4933 = vmatpush1.msra.mxu0 %v4002
    %4934 = vmatprep.subr.mxu0 %v4010
    %4935 = vmatpush1.msra.mxu0 %v4009
    %4936 = vmatprep.subr.mxu0 %v4017
    %4937 = vmatpush1.msra.mxu0 %v4016
    %4938 = vmatprep.subr.mxu0 %v4024
    %4939 = vmatpush1.msra.mxu0 %v4023
    %4940 = vmatprep.subr.mxu0 %v4031
    %4941 = vmatpush1.msra.mxu0 %v4030
    %4942 = vmatprep.subr.mxu0 %v4038
    %4943 = vmatpush1.msra.mxu0 %v4037
    %4944 = vmatprep.subr.mxu0 %v4045
    %4945 = vmatpush1.msra.mxu0 %v4044
    %4946 = vmatprep.subr.mxu0 %v4052
    %4947 = vmatpush1.msra.mxu0 %v4051
    %4948 = vmatprep.subr.mxu0 0.0
    %4949 = vmatpush1.msra.mxu0 0.0
    %4950 = vmatprep.subr.mxu0 0.0
    %4951 = vmatpush1.msra.mxu0 0.0
    %4952 = vmatprep.subr.mxu0 0.0
    %4953 = vmatpush1.msra.mxu0 0.0
    %4954 = vmatprep.subr.mxu0 0.0
    %4955 = vmatpush1.msra.mxu0 0.0
    %4956 = vmatprep.subr.mxu0 0.0
    %4957 = vmatpush1.msra.mxu0 0.0
    %4958 = vmatprep.subr.mxu0 0.0
    %4959 = vmatpush1.msra.mxu0 0.0
    %4960 = vmatprep.subr.mxu0 0.0
    %4961 = vmatpush1.msra.mxu0 0.0
    %4962 = vmatprep.subr.mxu0 0.0
    %4963 = vmatpush1.msra.mxu0 0.0
    %4964 = vmatprep.subr.mxu0 0.0
    %4965 = vmatpush1.msra.mxu0 0.0
    %4966 = vmatprep.subr.mxu0 0.0
    %4967 = vmatpush1.msra.mxu0 0.0
    %4968 = vmatprep.subr.mxu0 0.0
    %4969 = vmatpush1.msra.mxu0 0.0
    %4970 = vmatprep.subr.mxu0 0.0
    %4971 = vmatpush1.msra.mxu0 0.0
    %4972 = vmatprep.mubr.f32.mxu0 %v4056
    %4973 = vmatmul.mubr.f32.gmra.mrb[0].mxu0 %v2380
    %v4974 = vpop.f32.mrb[0].mxu0
    %v4975 = vadd.f32 %v4814, %v4974
    %v4976 = vpop.f32.mrb[0].mxu0
    %v4977 = vadd.f32 %v4816, %v4976
    %4978 = vmatprep.mubr.f32.mxu0 %v4059
    %4979 = vmatmul.mubr.f32.gmra.mrb[0].mxu0 %v2384
    %v4980 = vpop.f32.mrb[0].mxu0
    %v4981 = vadd.f32 %v4820, %v4980
    %v4982 = vpop.f32.mrb[0].mxu0
    %v4983 = vadd.f32 %v4822, %v4982
    %4984 = vmatprep.mubr.f32.mxu0 %v4062
    %4985 = vmatmul.mubr.f32.gmra.mrb[0].mxu0 %v2388
    %v4986 = vpop.f32.mrb[0].mxu0
    %v4987 = vadd.f32 %v4826, %v4986
    %v4988 = vpop.f32.mrb[0].mxu0
    %v4989 = vadd.f32 %v4828, %v4988
    %4990 = vmatprep.mubr.f32.mxu0 %v4065
    %4991 = vmatmul.mubr.f32.gmra.mrb[0].mxu0 %v2392
    %v4992 = vpop.f32.mrb[0].mxu0
    %v4993 = vadd.f32 %v4832, %v4992
    %v4994 = vpop.f32.mrb[0].mxu0
    %v4995 = vadd.f32 %v4834, %v4994
    %4996 = vmatprep.mubr.f32.mxu0 %v4068
    %4997 = vmatmul.mubr.f32.gmra.mrb[0].mxu0 %v2396
    %v4998 = vpop.f32.mrb[0].mxu0
    %v4999 = vadd.f32 %v4838, %v4998
    %v5000 = vpop.f32.mrb[0].mxu0
    %v5001 = vadd.f32 %v4840, %v5000
    %5002 = vmatprep.mubr.f32.mxu0 %v4071
    %5003 = vmatmul.mubr.f32.gmra.mrb[0].mxu0 %v2400
    %v5004 = vpop.f32.mrb[0].mxu0
    %v5005 = vadd.f32 %v4844, %v5004
    %v5006 = vpop.f32.mrb[0].mxu0
    %v5007 = vadd.f32 %v4846, %v5006
    %5008 = vmatprep.mubr.f32.mxu0 %v4074
    %5009 = vmatmul.mubr.f32.gmra.mrb[0].mxu0 %v2404
    %v5010 = vpop.f32.mrb[0].mxu0
    %v5011 = vadd.f32 %v4850, %v5010
    %v5012 = vpop.f32.mrb[0].mxu0
    %v5013 = vadd.f32 %v4852, %v5012
    %5014 = vmatprep.mubr.f32.mxu0 %v4077
    %5015 = vmatmul.mubr.f32.gmra.mrb[0].mxu0 %v2408
    %v5016 = vpop.f32.mrb[0].mxu0
    %v5017 = vadd.f32 %v4856, %v5016
    %v5018 = vpop.f32.mrb[0].mxu0
    %v5019 = vadd.f32 %v4858, %v5018
    %5020 = vmatprep.mubr.f32.mxu0 %v4080
    %5021 = vmatmul.mubr.f32.gmra.mrb[0].mxu0 %v2412
    %v5022 = vpop.f32.mrb[0].mxu0
    %v5023 = vadd.f32 %v4862, %v5022
    %v5024 = vpop.f32.mrb[0].mxu0
    %v5025 = vadd.f32 %v4864, %v5024
    %5026 = vmatprep.mubr.f32.mxu0 %v4083
    %5027 = vmatmul.mubr.f32.gmra.mrb[0].mxu0 %v2416
    %v5028 = vpop.f32.mrb[0].mxu0
    %v5029 = vadd.f32 %v4868, %v5028
    %v5030 = vpop.f32.mrb[0].mxu0
    %v5031 = vadd.f32 %v4870, %v5030
    %5032 = vmatprep.mubr.f32.mxu0 %v4086
    %5033 = vmatmul.mubr.f32.gmra.mrb[0].mxu0 %v2420
    %v5034 = vpop.f32.mrb[0].mxu0
    %v5035 = vadd.f32 %v4874, %v5034
    %v5036 = vpop.f32.mrb[0].mxu0
    %v5037 = vadd.f32 %v4876, %v5036
    %5038 = vmatprep.mubr.f32.mxu0 %v4089
    %5039 = vmatmul.mubr.f32.gmra.mrb[0].mxu0 %v2424
    %v5040 = vpop.f32.mrb[0].mxu0
    %v5041 = vadd.f32 %v4880, %v5040
    %v5042 = vpop.f32.mrb[0].mxu0
    %v5043 = vadd.f32 %v4882, %v5042
    %5044 = vmatprep.mubr.f32.mxu0 %v4092
    %5045 = vmatmul.mubr.f32.gmra.mrb[0].mxu0 %v2428
    %v5046 = vpop.f32.mrb[0].mxu0
    %v5047 = vadd.f32 %v4886, %v5046
    %v5048 = vpop.f32.mrb[0].mxu0
    %v5049 = vadd.f32 %v4888, %v5048
    %5050 = vmatprep.mubr.f32.mxu0 %v4095
    %5051 = vmatmul.mubr.f32.gmra.mrb[0].mxu0 %v2432
    %v5052 = vpop.f32.mrb[0].mxu0
    %v5053 = vadd.f32 %v4892, %v5052
    %v5054 = vpop.f32.mrb[0].mxu0
    %v5055 = vadd.f32 %v4894, %v5054
    %5056 = vmatprep.mubr.f32.mxu0 %v4098
    %5057 = vmatmul.mubr.f32.gmra.mrb[0].mxu0 %v2436
    %v5058 = vpop.f32.mrb[0].mxu0
    %v5059 = vadd.f32 %v4898, %v5058
    %v5060 = vpop.f32.mrb[0].mxu0
    %v5061 = vadd.f32 %v4900, %v5060
    %5062 = vmatprep.mubr.f32.mxu0 %v4101
    %5063 = vmatmul.mubr.f32.gmra.mrb[0].mxu0 %v2440
    %v5064 = vpop.f32.mrb[0].mxu0
    %v5065 = vadd.f32 %v4904, %v5064
    %v5066 = vpop.f32.mrb[0].mxu0
    %v5067 = vadd.f32 %v4906, %v5066
    %5068 = vdwg.mxu0
    %5069 = vmatprep.subr.mxu0 0.0
    %5070 = vmatpush1.msra.mxu0 %v3696
    %5071 = vmatprep.subr.mxu0 0.0
    %5072 = vmatpush1.msra.mxu0 %v3703
    %5073 = vmatprep.subr.mxu0 0.0
    %5074 = vmatpush1.msra.mxu0 %v3710
    %5075 = vmatprep.subr.mxu0 0.0
    %5076 = vmatpush1.msra.mxu0 %v3717
    %5077 = vmatprep.subr.mxu0 0.0
    %5078 = vmatpush1.msra.mxu0 %v3724
    %5079 = vmatprep.subr.mxu0 0.0
    %5080 = vmatpush1.msra.mxu0 %v3731
    %5081 = vmatprep.subr.mxu0 0.0
    %5082 = vmatpush1.msra.mxu0 %v3738
    %5083 = vmatprep.subr.mxu0 0.0
    %5084 = vmatpush1.msra.mxu0 %v3745
    %5085 = vmatprep.subr.mxu0 0.0
    %5086 = vmatpush1.msra.mxu0 %v3752
    %5087 = vmatprep.subr.mxu0 0.0
    %5088 = vmatpush1.msra.mxu0 %v3759
    %5089 = vmatprep.subr.mxu0 0.0
    %5090 = vmatpush1.msra.mxu0 %v3766
    %5091 = vmatprep.subr.mxu0 0.0
    %5092 = vmatpush1.msra.mxu0 %v3773
    %5093 = vmatprep.subr.mxu0 0.0
    %5094 = vmatpush1.msra.mxu0 %v3780
    %5095 = vmatprep.subr.mxu0 0.0
    %5096 = vmatpush1.msra.mxu0 %v3787
    %5097 = vmatprep.subr.mxu0 0.0
    %5098 = vmatpush1.msra.mxu0 %v3794
    %5099 = vmatprep.subr.mxu0 0.0
    %5100 = vmatpush1.msra.mxu0 %v3801
    %5101 = vmatprep.subr.mxu0 0.0
    %5102 = vmatpush1.msra.mxu0 %v3808
    %5103 = vmatprep.subr.mxu0 0.0
    %5104 = vmatpush1.msra.mxu0 %v3815
    %5105 = vmatprep.subr.mxu0 0.0
    %5106 = vmatpush1.msra.mxu0 %v3822
    %5107 = vmatprep.subr.mxu0 0.0
    %5108 = vmatpush1.msra.mxu0 %v3829
    %5109 = vmatprep.subr.mxu0 0.0
    %5110 = vmatpush1.msra.mxu0 %v3836
    %5111 = vmatprep.subr.mxu0 0.0
    %5112 = vmatpush1.msra.mxu0 %v3843
    %5113 = vmatprep.subr.mxu0 0.0
    %5114 = vmatpush1.msra.mxu0 %v3850
    %5115 = vmatprep.subr.mxu0 0.0
    %5116 = vmatpush1.msra.mxu0 %v3857
    %5117 = vmatprep.subr.mxu0 0.0
    %5118 = vmatpush1.msra.mxu0 %v3864
    %5119 = vmatprep.subr.mxu0 0.0
    %5120 = vmatpush1.msra.mxu0 %v3871
    %5121 = vmatprep.subr.mxu0 0.0
    %5122 = vmatpush1.msra.mxu0 %v3878
    %5123 = vmatprep.subr.mxu0 0.0
    %5124 = vmatpush1.msra.mxu0 %v3885
    %5125 = vmatprep.subr.mxu0 0.0
    %5126 = vmatpush1.msra.mxu0 %v3892
    %5127 = vmatprep.subr.mxu0 0.0
    %5128 = vmatpush1.msra.mxu0 %v3899
    %5129 = vmatprep.subr.mxu0 0.0
    %5130 = vmatpush1.msra.mxu0 %v3906
    %5131 = vmatprep.subr.mxu0 0.0
    %5132 = vmatpush1.msra.mxu0 %v3913
    %5133 = vmatprep.mubr.f32.mxu0 %v2379
    %5134 = vmatmul.mubr.f32.gmra.mrb[0].mxu0 %v2378
    %v5135 = vpop.f32.mrb[0].mxu0
    %v5136 = vadd.f32 0.0, %v5135
    %v5137 = vpop.f32.mrb[0].mxu0
    %5138 = vmatprep.mubr.f32.mxu0 %v2383
    %5139 = vmatmul.mubr.f32.gmra.mrb[0].mxu0 %v2382
    %v5140 = vpop.f32.mrb[0].mxu0
    %v5141 = vadd.f32 0.0, %v5140
    %v5142 = vpop.f32.mrb[0].mxu0
    %5143 = vmatprep.mubr.f32.mxu0 %v2387
    %5144 = vmatmul.mubr.f32.gmra.mrb[0].mxu0 %v2386
    %v5145 = vpop.f32.mrb[0].mxu0
    %v5146 = vadd.f32 0.0, %v5145
    %v5147 = vpop.f32.mrb[0].mxu0
    %5148 = vmatprep.mubr.f32.mxu0 %v2391
    %5149 = vmatmul.mubr.f32.gmra.mrb[0].mxu0 %v2390
    %v5150 = vpop.f32.mrb[0].mxu0
    %v5151 = vadd.f32 0.0, %v5150
    %v5152 = vpop.f32.mrb[0].mxu0
    %5153 = vmatprep.mubr.f32.mxu0 %v2395
    %5154 = vmatmul.mubr.f32.gmra.mrb[0].mxu0 %v2394
    %v5155 = vpop.f32.mrb[0].mxu0
    %v5156 = vadd.f32 0.0, %v5155
    %v5157 = vpop.f32.mrb[0].mxu0
    %5158 = vmatprep.mubr.f32.mxu0 %v2399
    %5159 = vmatmul.mubr.f32.gmra.mrb[0].mxu0 %v2398
    %v5160 = vpop.f32.mrb[0].mxu0
    %v5161 = vadd.f32 0.0, %v5160
    %v5162 = vpop.f32.mrb[0].mxu0
    %5163 = vmatprep.mubr.f32.mxu0 %v2403
    %5164 = vmatmul.mubr.f32.gmra.mrb[0].mxu0 %v2402
    %v5165 = vpop.f32.mrb[0].mxu0
    %v5166 = vadd.f32 0.0, %v5165
    %v5167 = vpop.f32.mrb[0].mxu0
    %5168 = vmatprep.mubr.f32.mxu0 %v2407
    %5169 = vmatmul.mubr.f32.gmra.mrb[0].mxu0 %v2406
    %v5170 = vpop.f32.mrb[0].mxu0
    %v5171 = vadd.f32 0.0, %v5170
    %v5172 = vpop.f32.mrb[0].mxu0
    %5173 = vmatprep.mubr.f32.mxu0 %v2411
    %5174 = vmatmul.mubr.f32.gmra.mrb[0].mxu0 %v2410
    %v5175 = vpop.f32.mrb[0].mxu0
    %v5176 = vadd.f32 0.0, %v5175
    %v5177 = vpop.f32.mrb[0].mxu0
    %5178 = vmatprep.mubr.f32.mxu0 %v2415
    %5179 = vmatmul.mubr.f32.gmra.mrb[0].mxu0 %v2414
    %v5180 = vpop.f32.mrb[0].mxu0
    %v5181 = vadd.f32 0.0, %v5180
    %v5182 = vpop.f32.mrb[0].mxu0
    %5183 = vmatprep.mubr.f32.mxu0 %v2419
    %5184 = vmatmul.mubr.f32.gmra.mrb[0].mxu0 %v2418
    %v5185 = vpop.f32.mrb[0].mxu0
    %v5186 = vadd.f32 0.0, %v5185
    %v5187 = vpop.f32.mrb[0].mxu0
    %5188 = vmatprep.mubr.f32.mxu0 %v2423
    %5189 = vmatmul.mubr.f32.gmra.mrb[0].mxu0 %v2422
    %v5190 = vpop.f32.mrb[0].mxu0
    %v5191 = vadd.f32 0.0, %v5190
    %v5192 = vpop.f32.mrb[0].mxu0
    %5193 = vmatprep.mubr.f32.mxu0 %v2427
    %5194 = vmatmul.mubr.f32.gmra.mrb[0].mxu0 %v2426
    %v5195 = vpop.f32.mrb[0].mxu0
    %v5196 = vadd.f32 0.0, %v5195
    %v5197 = vpop.f32.mrb[0].mxu0
    %5198 = vmatprep.mubr.f32.mxu0 %v2431
    %5199 = vmatmul.mubr.f32.gmra.mrb[0].mxu0 %v2430
    %v5200 = vpop.f32.mrb[0].mxu0
    %v5201 = vadd.f32 0.0, %v5200
    %v5202 = vpop.f32.mrb[0].mxu0
    %5203 = vmatprep.mubr.f32.mxu0 %v2435
    %5204 = vmatmul.mubr.f32.gmra.mrb[0].mxu0 %v2434
    %v5205 = vpop.f32.mrb[0].mxu0
    %v5206 = vadd.f32 0.0, %v5205
    %v5207 = vpop.f32.mrb[0].mxu0
    %5208 = vmatprep.mubr.f32.mxu0 %v2439
    %5209 = vmatmul.mubr.f32.gmra.mrb[0].mxu0 %v2438
    %v5210 = vpop.f32.mrb[0].mxu0
    %v5211 = vadd.f32 0.0, %v5210
    %v5212 = vpop.f32.mrb[0].mxu0
    %5213 = vdwg.mxu0
    %5214 = vmatprep.subr.mxu0 0.0
    %5215 = vmatpush1.msra.mxu0 %v3920
    %5216 = vmatprep.subr.mxu0 0.0
    %5217 = vmatpush1.msra.mxu0 %v3927
    %5218 = vmatprep.subr.mxu0 0.0
    %5219 = vmatpush1.msra.mxu0 %v3934
    %5220 = vmatprep.subr.mxu0 0.0
    %5221 = vmatpush1.msra.mxu0 %v3941
    %5222 = vmatprep.subr.mxu0 0.0
    %5223 = vmatpush1.msra.mxu0 %v3948
    %5224 = vmatprep.subr.mxu0 0.0
    %5225 = vmatpush1.msra.mxu0 %v3955
    %5226 = vmatprep.subr.mxu0 0.0
    %5227 = vmatpush1.msra.mxu0 %v3962
    %5228 = vmatprep.subr.mxu0 0.0
    %5229 = vmatpush1.msra.mxu0 %v3969
    %5230 = vmatprep.subr.mxu0 0.0
    %5231 = vmatpush1.msra.mxu0 %v3976
    %5232 = vmatprep.subr.mxu0 0.0
    %5233 = vmatpush1.msra.mxu0 %v3983
    %5234 = vmatprep.subr.mxu0 0.0
    %5235 = vmatpush1.msra.mxu0 %v3990
    %5236 = vmatprep.subr.mxu0 0.0
    %5237 = vmatpush1.msra.mxu0 %v3997
    %5238 = vmatprep.subr.mxu0 0.0
    %5239 = vmatpush1.msra.mxu0 %v4004
    %5240 = vmatprep.subr.mxu0 0.0
    %5241 = vmatpush1.msra.mxu0 %v4011
    %5242 = vmatprep.subr.mxu0 0.0
    %5243 = vmatpush1.msra.mxu0 %v4018
    %5244 = vmatprep.subr.mxu0 0.0
    %5245 = vmatpush1.msra.mxu0 %v4025
    %5246 = vmatprep.subr.mxu0 0.0
    %5247 = vmatpush1.msra.mxu0 %v4032
    %5248 = vmatprep.subr.mxu0 0.0
    %5249 = vmatpush1.msra.mxu0 %v4039
    %5250 = vmatprep.subr.mxu0 0.0
    %5251 = vmatpush1.msra.mxu0 %v4046
    %5252 = vmatprep.subr.mxu0 0.0
    %5253 = vmatpush1.msra.mxu0 %v4053
    %5254 = vmatprep.subr.mxu0 0.0
    %5255 = vmatpush1.msra.mxu0 0.0
    %5256 = vmatprep.subr.mxu0 0.0
    %5257 = vmatpush1.msra.mxu0 0.0
    %5258 = vmatprep.subr.mxu0 0.0
    %5259 = vmatpush1.msra.mxu0 0.0
    %5260 = vmatprep.subr.mxu0 0.0
    %5261 = vmatpush1.msra.mxu0 0.0
    %5262 = vmatprep.subr.mxu0 0.0
    %5263 = vmatpush1.msra.mxu0 0.0
    %5264 = vmatprep.subr.mxu0 0.0
    %5265 = vmatpush1.msra.mxu0 0.0
    %5266 = vmatprep.subr.mxu0 0.0
    %5267 = vmatpush1.msra.mxu0 0.0
    %5268 = vmatprep.subr.mxu0 0.0
    %5269 = vmatpush1.msra.mxu0 0.0
    %5270 = vmatprep.subr.mxu0 0.0
    %5271 = vmatpush1.msra.mxu0 0.0
    %5272 = vmatprep.subr.mxu0 0.0
    %5273 = vmatpush1.msra.mxu0 0.0
    %5274 = vmatprep.subr.mxu0 0.0
    %5275 = vmatpush1.msra.mxu0 0.0
    %5276 = vmatprep.subr.mxu0 0.0
    %5277 = vmatpush1.msra.mxu0 0.0
    %5278 = vmatprep.mubr.f32.mxu0 %v4056
    %5279 = vmatmul.mubr.f32.gmra.mrb[0].mxu0 %v2380
    %v5280 = vpop.f32.mrb[0].mxu0
    %v5281 = vadd.f32 %v5136, %v5280
    %v5282 = vpop.f32.mrb[0].mxu0
    %5283 = vmatprep.mubr.f32.mxu0 %v4059
    %5284 = vmatmul.mubr.f32.gmra.mrb[0].mxu0 %v2384
    %v5285 = vpop.f32.mrb[0].mxu0
    %v5286 = vadd.f32 %v5141, %v5285
    %v5287 = vpop.f32.mrb[0].mxu0
    %5288 = vmatprep.mubr.f32.mxu0 %v4062
    %5289 = vmatmul.mubr.f32.gmra.mrb[0].mxu0 %v2388
    %v5290 = vpop.f32.mrb[0].mxu0
    %v5291 = vadd.f32 %v5146, %v5290
    %v5292 = vpop.f32.mrb[0].mxu0
    %5293 = vmatprep.mubr.f32.mxu0 %v4065
    %5294 = vmatmul.mubr.f32.gmra.mrb[0].mxu0 %v2392
    %v5295 = vpop.f32.mrb[0].mxu0
    %v5296 = vadd.f32 %v5151, %v5295
    %v5297 = vpop.f32.mrb[0].mxu0
    %5298 = vmatprep.mubr.f32.mxu0 %v4068
    %5299 = vmatmul.mubr.f32.gmra.mrb[0].mxu0 %v2396
    %v5300 = vpop.f32.mrb[0].mxu0
    %v5301 = vadd.f32 %v5156, %v5300
    %v5302 = vpop.f32.mrb[0].mxu0
    %5303 = vmatprep.mubr.f32.mxu0 %v4071
    %5304 = vmatmul.mubr.f32.gmra.mrb[0].mxu0 %v2400
    %v5305 = vpop.f32.mrb[0].mxu0
    %v5306 = vadd.f32 %v5161, %v5305
    %v5307 = vpop.f32.mrb[0].mxu0
    %5308 = vmatprep.mubr.f32.mxu0 %v4074
    %5309 = vmatmul.mubr.f32.gmra.mrb[0].mxu0 %v2404
    %v5310 = vpop.f32.mrb[0].mxu0
    %v5311 = vadd.f32 %v5166, %v5310
    %v5312 = vpop.f32.mrb[0].mxu0
    %5313 = vmatprep.mubr.f32.mxu0 %v4077
    %5314 = vmatmul.mubr.f32.gmra.mrb[0].mxu0 %v2408
    %v5315 = vpop.f32.mrb[0].mxu0
    %v5316 = vadd.f32 %v5171, %v5315
    %v5317 = vpop.f32.mrb[0].mxu0
    %5318 = vmatprep.mubr.f32.mxu0 %v4080
    %5319 = vmatmul.mubr.f32.gmra.mrb[0].mxu0 %v2412
    %v5320 = vpop.f32.mrb[0].mxu0
    %v5321 = vadd.f32 %v5176, %v5320
    %v5322 = vpop.f32.mrb[0].mxu0
    %5323 = vmatprep.mubr.f32.mxu0 %v4083
    %5324 = vmatmul.mubr.f32.gmra.mrb[0].mxu0 %v2416
    %v5325 = vpop.f32.mrb[0].mxu0
    %v5326 = vadd.f32 %v5181, %v5325
    %v5327 = vpop.f32.mrb[0].mxu0
    %5328 = vmatprep.mubr.f32.mxu0 %v4086
    %5329 = vmatmul.mubr.f32.gmra.mrb[0].mxu0 %v2420
    %v5330 = vpop.f32.mrb[0].mxu0
    %v5331 = vadd.f32 %v5186, %v5330
    %v5332 = vpop.f32.mrb[0].mxu0
    %5333 = vmatprep.mubr.f32.mxu0 %v4089
    %5334 = vmatmul.mubr.f32.gmra.mrb[0].mxu0 %v2424
    %v5335 = vpop.f32.mrb[0].mxu0
    %v5336 = vadd.f32 %v5191, %v5335
    %v5337 = vpop.f32.mrb[0].mxu0
    %5338 = vmatprep.mubr.f32.mxu0 %v4092
    %5339 = vmatmul.mubr.f32.gmra.mrb[0].mxu0 %v2428
    %v5340 = vpop.f32.mrb[0].mxu0
    %v5341 = vadd.f32 %v5196, %v5340
    %v5342 = vpop.f32.mrb[0].mxu0
    %5343 = vmatprep.mubr.f32.mxu0 %v4095
    %5344 = vmatmul.mubr.f32.gmra.mrb[0].mxu0 %v2432
    %v5345 = vpop.f32.mrb[0].mxu0
    %v5346 = vadd.f32 %v5201, %v5345
    %v5347 = vpop.f32.mrb[0].mxu0
    %5348 = vmatprep.mubr.f32.mxu0 %v4098
    %5349 = vmatmul.mubr.f32.gmra.mrb[0].mxu0 %v2436
    %v5350 = vpop.f32.mrb[0].mxu0
    %v5351 = vadd.f32 %v5206, %v5350
    %v5352 = vpop.f32.mrb[0].mxu0
    %5353 = vmatprep.mubr.f32.mxu0 %v4101
    %5354 = vmatmul.mubr.f32.gmra.mrb[0].mxu0 %v2440
    %v5355 = vpop.f32.mrb[0].mxu0
    %v5356 = vadd.f32 %v5211, %v5355
    %v5357 = vpop.f32.mrb[0].mxu0
    %5358 = vdwg.mxu0
    %v5359 = vadd.f32 %v4331, %v4333
    %v5360 = vadd.f32 %v5359, %v4653
    %v5361 = vadd.f32 %v5360, %v4655
    %v5362 = vadd.f32 %v5361, %v4975
    %v5363 = vadd.f32 %v5362, %v4977
    %v5364 = vsel %vm406, %v5281, 0.0
    %v5365 = vadd.f32 %v5363, %v5364
    %5366 = vadd.xlane.f32.xlu0 %v5365
    %v5367 = vpop.xlane.xlu0 %5366
    %v5368 = vadd.f32 %v4337, %v4339
    %v5369 = vadd.f32 %v5368, %v4659
    %v5370 = vadd.f32 %v5369, %v4661
    %v5371 = vadd.f32 %v5370, %v4981
    %v5372 = vadd.f32 %v5371, %v4983
    %v5373 = vsel %vm406, %v5286, 0.0
    %v5374 = vadd.f32 %v5372, %v5373
    %5375 = vadd.xlane.f32.xlu0 %v5374
    %v5376 = vpop.xlane.xlu0 %5375
    %v5377 = vadd.f32 %v4343, %v4345
    %v5378 = vadd.f32 %v5377, %v4665
    %v5379 = vadd.f32 %v5378, %v4667
    %v5380 = vadd.f32 %v5379, %v4987
    %v5381 = vadd.f32 %v5380, %v4989
    %v5382 = vsel %vm406, %v5291, 0.0
    %v5383 = vadd.f32 %v5381, %v5382
    %5384 = vadd.xlane.f32.xlu0 %v5383
    %v5385 = vpop.xlane.xlu0 %5384
    %v5386 = vadd.f32 %v4349, %v4351
    %v5387 = vadd.f32 %v5386, %v4671
    %v5388 = vadd.f32 %v5387, %v4673
    %v5389 = vadd.f32 %v5388, %v4993
    %v5390 = vadd.f32 %v5389, %v4995
    %v5391 = vsel %vm406, %v5296, 0.0
    %v5392 = vadd.f32 %v5390, %v5391
    %5393 = vadd.xlane.f32.xlu0 %v5392
    %v5394 = vpop.xlane.xlu0 %5393
    %v5395 = vadd.f32 %v4355, %v4357
    %v5396 = vadd.f32 %v5395, %v4677
    %v5397 = vadd.f32 %v5396, %v4679
    %v5398 = vadd.f32 %v5397, %v4999
    %v5399 = vadd.f32 %v5398, %v5001
    %v5400 = vsel %vm406, %v5301, 0.0
    %v5401 = vadd.f32 %v5399, %v5400
    %5402 = vadd.xlane.f32.xlu0 %v5401
    %v5403 = vpop.xlane.xlu0 %5402
    %v5404 = vadd.f32 %v4361, %v4363
    %v5405 = vadd.f32 %v5404, %v4683
    %v5406 = vadd.f32 %v5405, %v4685
    %v5407 = vadd.f32 %v5406, %v5005
    %v5408 = vadd.f32 %v5407, %v5007
    %v5409 = vsel %vm406, %v5306, 0.0
    %v5410 = vadd.f32 %v5408, %v5409
    %5411 = vadd.xlane.f32.xlu0 %v5410
    %v5412 = vpop.xlane.xlu0 %5411
    %v5413 = vadd.f32 %v4367, %v4369
    %v5414 = vadd.f32 %v5413, %v4689
    %v5415 = vadd.f32 %v5414, %v4691
    %v5416 = vadd.f32 %v5415, %v5011
    %v5417 = vadd.f32 %v5416, %v5013
    %v5418 = vsel %vm406, %v5311, 0.0
    %v5419 = vadd.f32 %v5417, %v5418
    %5420 = vadd.xlane.f32.xlu0 %v5419
    %v5421 = vpop.xlane.xlu0 %5420
    %v5422 = vadd.f32 %v4373, %v4375
    %v5423 = vadd.f32 %v5422, %v4695
    %v5424 = vadd.f32 %v5423, %v4697
    %v5425 = vadd.f32 %v5424, %v5017
    %v5426 = vadd.f32 %v5425, %v5019
    %v5427 = vsel %vm406, %v5316, 0.0
    %v5428 = vadd.f32 %v5426, %v5427
    %5429 = vadd.xlane.f32.xlu0 %v5428
    %v5430 = vpop.xlane.xlu0 %5429
    %v5431 = vadd.f32 %v4379, %v4381
    %v5432 = vadd.f32 %v5431, %v4701
    %v5433 = vadd.f32 %v5432, %v4703
    %v5434 = vadd.f32 %v5433, %v5023
    %v5435 = vadd.f32 %v5434, %v5025
    %v5436 = vsel %vm406, %v5321, 0.0
    %v5437 = vadd.f32 %v5435, %v5436
    %5438 = vadd.xlane.f32.xlu0 %v5437
    %v5439 = vpop.xlane.xlu0 %5438
    %v5440 = vadd.f32 %v4385, %v4387
    %v5441 = vadd.f32 %v5440, %v4707
    %v5442 = vadd.f32 %v5441, %v4709
    %v5443 = vadd.f32 %v5442, %v5029
    %v5444 = vadd.f32 %v5443, %v5031
    %v5445 = vsel %vm406, %v5326, 0.0
    %v5446 = vadd.f32 %v5444, %v5445
    %5447 = vadd.xlane.f32.xlu0 %v5446
    %v5448 = vpop.xlane.xlu0 %5447
    %v5449 = vadd.f32 %v4391, %v4393
    %v5450 = vadd.f32 %v5449, %v4713
    %v5451 = vadd.f32 %v5450, %v4715
    %v5452 = vadd.f32 %v5451, %v5035
    %v5453 = vadd.f32 %v5452, %v5037
    %v5454 = vsel %vm406, %v5331, 0.0
    %v5455 = vadd.f32 %v5453, %v5454
    %5456 = vadd.xlane.f32.xlu0 %v5455
    %v5457 = vpop.xlane.xlu0 %5456
    %v5458 = vadd.f32 %v4397, %v4399
    %v5459 = vadd.f32 %v5458, %v4719
    %v5460 = vadd.f32 %v5459, %v4721
    %v5461 = vadd.f32 %v5460, %v5041
    %v5462 = vadd.f32 %v5461, %v5043
    %v5463 = vsel %vm406, %v5336, 0.0
    %v5464 = vadd.f32 %v5462, %v5463
    %5465 = vadd.xlane.f32.xlu0 %v5464
    %v5466 = vpop.xlane.xlu0 %5465
    %v5467 = vadd.f32 %v4403, %v4405
    %v5468 = vadd.f32 %v5467, %v4725
    %v5469 = vadd.f32 %v5468, %v4727
    %v5470 = vadd.f32 %v5469, %v5047
    %v5471 = vadd.f32 %v5470, %v5049
    %v5472 = vsel %vm406, %v5341, 0.0
    %v5473 = vadd.f32 %v5471, %v5472
    %5474 = vadd.xlane.f32.xlu0 %v5473
    %v5475 = vpop.xlane.xlu0 %5474
    %v5476 = vadd.f32 %v4409, %v4411
    %v5477 = vadd.f32 %v5476, %v4731
    %v5478 = vadd.f32 %v5477, %v4733
    %v5479 = vadd.f32 %v5478, %v5053
    %v5480 = vadd.f32 %v5479, %v5055
    %v5481 = vsel %vm406, %v5346, 0.0
    %v5482 = vadd.f32 %v5480, %v5481
    %5483 = vadd.xlane.f32.xlu0 %v5482
    %v5484 = vpop.xlane.xlu0 %5483
    %v5485 = vadd.f32 %v4415, %v4417
    %v5486 = vadd.f32 %v5485, %v4737
    %v5487 = vadd.f32 %v5486, %v4739
    %v5488 = vadd.f32 %v5487, %v5059
    %v5489 = vadd.f32 %v5488, %v5061
    %v5490 = vsel %vm406, %v5351, 0.0
    %v5491 = vadd.f32 %v5489, %v5490
    %5492 = vadd.xlane.f32.xlu0 %v5491
    %v5493 = vpop.xlane.xlu0 %5492
    %v5494 = vadd.f32 %v4421, %v4423
    %v5495 = vadd.f32 %v5494, %v4743
    %v5496 = vadd.f32 %v5495, %v4745
    %v5497 = vadd.f32 %v5496, %v5065
    %v5498 = vadd.f32 %v5497, %v5067
    %v5499 = vsel %vm406, %v5356, 0.0
    %v5500 = vadd.f32 %v5498, %v5499
    %5501 = vadd.xlane.f32.xlu0 %v5500
    %v5502 = vpop.xlane.xlu0 %5501
    %v5503 = vadd.f32 %v5367, 0.0
    %v5504 = vadd.f32 %v5376, 0.0
    %v5505 = vadd.f32 %v5385, 0.0
    %v5506 = vadd.f32 %v5394, 0.0
    %v5507 = vadd.f32 %v5403, 0.0
    %v5508 = vadd.f32 %v5412, 0.0
    %v5509 = vadd.f32 %v5421, 0.0
    %v5510 = vadd.f32 %v5430, 0.0
    %v5511 = vadd.f32 %v5439, 0.0
    %v5512 = vadd.f32 %v5448, 0.0
    %v5513 = vadd.f32 %v5457, 0.0
    %v5514 = vadd.f32 %v5466, 0.0
    %v5515 = vadd.f32 %v5475, 0.0
    %v5516 = vadd.f32 %v5484, 0.0
    %v5517 = vadd.f32 %v5493, 0.0
    %v5518 = vadd.f32 %v5502, 0.0
    %v5519 = vmul.f32 %v4331, %v4331
    %v5520 = vmul.f32 %v4333, %v4333
    %v5521 = vmul.f32 %v4653, %v4653
    %v5522 = vmul.f32 %v4655, %v4655
    %v5523 = vmul.f32 %v4975, %v4975
    %v5524 = vmul.f32 %v4977, %v4977
    %v5525 = vmul.f32 %v5281, %v5281
    %v5526 = vmul.f32 %v4337, %v4337
    %v5527 = vmul.f32 %v4339, %v4339
    %v5528 = vmul.f32 %v4659, %v4659
    %v5529 = vmul.f32 %v4661, %v4661
    %v5530 = vmul.f32 %v4981, %v4981
    %v5531 = vmul.f32 %v4983, %v4983
    %v5532 = vmul.f32 %v5286, %v5286
    %v5533 = vmul.f32 %v4343, %v4343
    %v5534 = vmul.f32 %v4345, %v4345
    %v5535 = vmul.f32 %v4665, %v4665
    %v5536 = vmul.f32 %v4667, %v4667
    %v5537 = vmul.f32 %v4987, %v4987
    %v5538 = vmul.f32 %v4989, %v4989
    %v5539 = vmul.f32 %v5291, %v5291
    %v5540 = vmul.f32 %v4349, %v4349
    %v5541 = vmul.f32 %v4351, %v4351
    %v5542 = vmul.f32 %v4671, %v4671
    %v5543 = vmul.f32 %v4673, %v4673
    %v5544 = vmul.f32 %v4993, %v4993
    %v5545 = vmul.f32 %v4995, %v4995
    %v5546 = vmul.f32 %v5296, %v5296
    %v5547 = vmul.f32 %v4355, %v4355
    %v5548 = vmul.f32 %v4357, %v4357
    %v5549 = vmul.f32 %v4677, %v4677
    %v5550 = vmul.f32 %v4679, %v4679
    %v5551 = vmul.f32 %v4999, %v4999
    %v5552 = vmul.f32 %v5001, %v5001
    %v5553 = vmul.f32 %v5301, %v5301
    %v5554 = vmul.f32 %v4361, %v4361
    %v5555 = vmul.f32 %v4363, %v4363
    %v5556 = vmul.f32 %v4683, %v4683
    %v5557 = vmul.f32 %v4685, %v4685
    %v5558 = vmul.f32 %v5005, %v5005
    %v5559 = vmul.f32 %v5007, %v5007
    %v5560 = vmul.f32 %v5306, %v5306
    %v5561 = vmul.f32 %v4367, %v4367
    %v5562 = vmul.f32 %v4369, %v4369
    %v5563 = vmul.f32 %v4689, %v4689
    %v5564 = vmul.f32 %v4691, %v4691
    %v5565 = vmul.f32 %v5011, %v5011
    %v5566 = vmul.f32 %v5013, %v5013
    %v5567 = vmul.f32 %v5311, %v5311
    %v5568 = vmul.f32 %v4373, %v4373
    %v5569 = vmul.f32 %v4375, %v4375
    %v5570 = vmul.f32 %v4695, %v4695
    %v5571 = vmul.f32 %v4697, %v4697
    %v5572 = vmul.f32 %v5017, %v5017
    %v5573 = vmul.f32 %v5019, %v5019
    %v5574 = vmul.f32 %v5316, %v5316
    %v5575 = vmul.f32 %v4379, %v4379
    %v5576 = vmul.f32 %v4381, %v4381
    %v5577 = vmul.f32 %v4701, %v4701
    %v5578 = vmul.f32 %v4703, %v4703
    %v5579 = vmul.f32 %v5023, %v5023
    %v5580 = vmul.f32 %v5025, %v5025
    %v5581 = vmul.f32 %v5321, %v5321
    %v5582 = vmul.f32 %v4385, %v4385
    %v5583 = vmul.f32 %v4387, %v4387
    %v5584 = vmul.f32 %v4707, %v4707
    %v5585 = vmul.f32 %v4709, %v4709
    %v5586 = vmul.f32 %v5029, %v5029
    %v5587 = vmul.f32 %v5031, %v5031
    %v5588 = vmul.f32 %v5326, %v5326
    %v5589 = vmul.f32 %v4391, %v4391
    %v5590 = vmul.f32 %v4393, %v4393
    %v5591 = vmul.f32 %v4713, %v4713
    %v5592 = vmul.f32 %v4715, %v4715
    %v5593 = vmul.f32 %v5035, %v5035
    %v5594 = vmul.f32 %v5037, %v5037
    %v5595 = vmul.f32 %v5331, %v5331
    %v5596 = vmul.f32 %v4397, %v4397
    %v5597 = vmul.f32 %v4399, %v4399
    %v5598 = vmul.f32 %v4719, %v4719
    %v5599 = vmul.f32 %v4721, %v4721
    %v5600 = vmul.f32 %v5041, %v5041
    %v5601 = vmul.f32 %v5043, %v5043
    %v5602 = vmul.f32 %v5336, %v5336
    %v5603 = vmul.f32 %v4403, %v4403
    %v5604 = vmul.f32 %v4405, %v4405
    %v5605 = vmul.f32 %v4725, %v4725
    %v5606 = vmul.f32 %v4727, %v4727
    %v5607 = vmul.f32 %v5047, %v5047
    %v5608 = vmul.f32 %v5049, %v5049
    %v5609 = vmul.f32 %v5341, %v5341
    %v5610 = vmul.f32 %v4409, %v4409
    %v5611 = vmul.f32 %v4411, %v4411
    %v5612 = vmul.f32 %v4731, %v4731
    %v5613 = vmul.f32 %v4733, %v4733
    %v5614 = vmul.f32 %v5053, %v5053
    %v5615 = vmul.f32 %v5055, %v5055
    %v5616 = vmul.f32 %v5346, %v5346
    %v5617 = vmul.f32 %v4415, %v4415
    %v5618 = vmul.f32 %v4417, %v4417
    %v5619 = vmul.f32 %v4737, %v4737
    %v5620 = vmul.f32 %v4739, %v4739
    %v5621 = vmul.f32 %v5059, %v5059
    %v5622 = vmul.f32 %v5061, %v5061
    %v5623 = vmul.f32 %v5351, %v5351
    %v5624 = vmul.f32 %v4421, %v4421
    %v5625 = vmul.f32 %v4423, %v4423
    %v5626 = vmul.f32 %v4743, %v4743
    %v5627 = vmul.f32 %v4745, %v4745
    %v5628 = vmul.f32 %v5065, %v5065
    %v5629 = vmul.f32 %v5067, %v5067
    %v5630 = vmul.f32 %v5356, %v5356
    %v5631 = vadd.f32 %v5519, %v5520
    %v5632 = vadd.f32 %v5631, %v5521
    %v5633 = vadd.f32 %v5632, %v5522
    %v5634 = vadd.f32 %v5633, %v5523
    %v5635 = vadd.f32 %v5634, %v5524
    %v5636 = vsel %vm406, %v5525, 0.0
    %v5637 = vadd.f32 %v5635, %v5636
    %5638 = vadd.xlane.f32.xlu0 %v5637
    %v5639 = vpop.xlane.xlu0 %5638
    %v5640 = vadd.f32 %v5526, %v5527
    %v5641 = vadd.f32 %v5640, %v5528
    %v5642 = vadd.f32 %v5641, %v5529
    %v5643 = vadd.f32 %v5642, %v5530
    %v5644 = vadd.f32 %v5643, %v5531
    %v5645 = vsel %vm406, %v5532, 0.0
    %v5646 = vadd.f32 %v5644, %v5645
    %5647 = vadd.xlane.f32.xlu0 %v5646
    %v5648 = vpop.xlane.xlu0 %5647
    %v5649 = vadd.f32 %v5533, %v5534
    %v5650 = vadd.f32 %v5649, %v5535
    %v5651 = vadd.f32 %v5650, %v5536
    %v5652 = vadd.f32 %v5651, %v5537
    %v5653 = vadd.f32 %v5652, %v5538
    %v5654 = vsel %vm406, %v5539, 0.0
    %v5655 = vadd.f32 %v5653, %v5654
    %5656 = vadd.xlane.f32.xlu0 %v5655
    %v5657 = vpop.xlane.xlu0 %5656
    %v5658 = vadd.f32 %v5540, %v5541
    %v5659 = vadd.f32 %v5658, %v5542
    %v5660 = vadd.f32 %v5659, %v5543
    %v5661 = vadd.f32 %v5660, %v5544
    %v5662 = vadd.f32 %v5661, %v5545
    %v5663 = vsel %vm406, %v5546, 0.0
    %v5664 = vadd.f32 %v5662, %v5663
    %5665 = vadd.xlane.f32.xlu0 %v5664
    %v5666 = vpop.xlane.xlu0 %5665
    %v5667 = vadd.f32 %v5547, %v5548
    %v5668 = vadd.f32 %v5667, %v5549
    %v5669 = vadd.f32 %v5668, %v5550
    %v5670 = vadd.f32 %v5669, %v5551
    %v5671 = vadd.f32 %v5670, %v5552
    %v5672 = vsel %vm406, %v5553, 0.0
    %v5673 = vadd.f32 %v5671, %v5672
    %5674 = vadd.xlane.f32.xlu0 %v5673
    %v5675 = vpop.xlane.xlu0 %5674
    %v5676 = vadd.f32 %v5554, %v5555
    %v5677 = vadd.f32 %v5676, %v5556
    %v5678 = vadd.f32 %v5677, %v5557
    %v5679 = vadd.f32 %v5678, %v5558
    %v5680 = vadd.f32 %v5679, %v5559
    %v5681 = vsel %vm406, %v5560, 0.0
    %v5682 = vadd.f32 %v5680, %v5681
    %5683 = vadd.xlane.f32.xlu0 %v5682
    %v5684 = vpop.xlane.xlu0 %5683
    %v5685 = vadd.f32 %v5561, %v5562
    %v5686 = vadd.f32 %v5685, %v5563
    %v5687 = vadd.f32 %v5686, %v5564
    %v5688 = vadd.f32 %v5687, %v5565
    %v5689 = vadd.f32 %v5688, %v5566
    %v5690 = vsel %vm406, %v5567, 0.0
    %v5691 = vadd.f32 %v5689, %v5690
    %5692 = vadd.xlane.f32.xlu0 %v5691
    %v5693 = vpop.xlane.xlu0 %5692
    %v5694 = vadd.f32 %v5568, %v5569
    %v5695 = vadd.f32 %v5694, %v5570
    %v5696 = vadd.f32 %v5695, %v5571
    %v5697 = vadd.f32 %v5696, %v5572
    %v5698 = vadd.f32 %v5697, %v5573
    %v5699 = vsel %vm406, %v5574, 0.0
    %v5700 = vadd.f32 %v5698, %v5699
    %5701 = vadd.xlane.f32.xlu0 %v5700
    %v5702 = vpop.xlane.xlu0 %5701
    %v5703 = vadd.f32 %v5575, %v5576
    %v5704 = vadd.f32 %v5703, %v5577
    %v5705 = vadd.f32 %v5704, %v5578
    %v5706 = vadd.f32 %v5705, %v5579
    %v5707 = vadd.f32 %v5706, %v5580
    %v5708 = vsel %vm406, %v5581, 0.0
    %v5709 = vadd.f32 %v5707, %v5708
    %5710 = vadd.xlane.f32.xlu0 %v5709
    %v5711 = vpop.xlane.xlu0 %5710
    %v5712 = vadd.f32 %v5582, %v5583
    %v5713 = vadd.f32 %v5712, %v5584
    %v5714 = vadd.f32 %v5713, %v5585
    %v5715 = vadd.f32 %v5714, %v5586
    %v5716 = vadd.f32 %v5715, %v5587
    %v5717 = vsel %vm406, %v5588, 0.0
    %v5718 = vadd.f32 %v5716, %v5717
    %5719 = vadd.xlane.f32.xlu0 %v5718
    %v5720 = vpop.xlane.xlu0 %5719
    %v5721 = vadd.f32 %v5589, %v5590
    %v5722 = vadd.f32 %v5721, %v5591
    %v5723 = vadd.f32 %v5722, %v5592
    %v5724 = vadd.f32 %v5723, %v5593
    %v5725 = vadd.f32 %v5724, %v5594
    %v5726 = vsel %vm406, %v5595, 0.0
    %v5727 = vadd.f32 %v5725, %v5726
    %5728 = vadd.xlane.f32.xlu0 %v5727
    %v5729 = vpop.xlane.xlu0 %5728
    %v5730 = vadd.f32 %v5596, %v5597
    %v5731 = vadd.f32 %v5730, %v5598
    %v5732 = vadd.f32 %v5731, %v5599
    %v5733 = vadd.f32 %v5732, %v5600
    %v5734 = vadd.f32 %v5733, %v5601
    %v5735 = vsel %vm406, %v5602, 0.0
    %v5736 = vadd.f32 %v5734, %v5735
    %5737 = vadd.xlane.f32.xlu0 %v5736
    %v5738 = vpop.xlane.xlu0 %5737
    %v5739 = vadd.f32 %v5603, %v5604
    %v5740 = vadd.f32 %v5739, %v5605
    %v5741 = vadd.f32 %v5740, %v5606
    %v5742 = vadd.f32 %v5741, %v5607
    %v5743 = vadd.f32 %v5742, %v5608
    %v5744 = vsel %vm406, %v5609, 0.0
    %v5745 = vadd.f32 %v5743, %v5744
    %5746 = vadd.xlane.f32.xlu0 %v5745
    %v5747 = vpop.xlane.xlu0 %5746
    %v5748 = vadd.f32 %v5610, %v5611
    %v5749 = vadd.f32 %v5748, %v5612
    %v5750 = vadd.f32 %v5749, %v5613
    %v5751 = vadd.f32 %v5750, %v5614
    %v5752 = vadd.f32 %v5751, %v5615
    %v5753 = vsel %vm406, %v5616, 0.0
    %v5754 = vadd.f32 %v5752, %v5753
    %5755 = vadd.xlane.f32.xlu0 %v5754
    %v5756 = vpop.xlane.xlu0 %5755
    %v5757 = vadd.f32 %v5617, %v5618
    %v5758 = vadd.f32 %v5757, %v5619
    %v5759 = vadd.f32 %v5758, %v5620
    %v5760 = vadd.f32 %v5759, %v5621
    %v5761 = vadd.f32 %v5760, %v5622
    %v5762 = vsel %vm406, %v5623, 0.0
    %v5763 = vadd.f32 %v5761, %v5762
    %5764 = vadd.xlane.f32.xlu0 %v5763
    %v5765 = vpop.xlane.xlu0 %5764
    %v5766 = vadd.f32 %v5624, %v5625
    %v5767 = vadd.f32 %v5766, %v5626
    %v5768 = vadd.f32 %v5767, %v5627
    %v5769 = vadd.f32 %v5768, %v5628
    %v5770 = vadd.f32 %v5769, %v5629
    %v5771 = vsel %vm406, %v5630, 0.0
    %v5772 = vadd.f32 %v5770, %v5771
    %5773 = vadd.xlane.f32.xlu0 %v5772
    %v5774 = vpop.xlane.xlu0 %5773
    %v5775 = vadd.f32 %v5639, 0.0
    %v5776 = vadd.f32 %v5648, 0.0
    %v5777 = vadd.f32 %v5657, 0.0
    %v5778 = vadd.f32 %v5666, 0.0
    %v5779 = vadd.f32 %v5675, 0.0
    %v5780 = vadd.f32 %v5684, 0.0
    %v5781 = vadd.f32 %v5693, 0.0
    %v5782 = vadd.f32 %v5702, 0.0
    %v5783 = vadd.f32 %v5711, 0.0
    %v5784 = vadd.f32 %v5720, 0.0
    %v5785 = vadd.f32 %v5729, 0.0
    %v5786 = vadd.f32 %v5738, 0.0
    %v5787 = vadd.f32 %v5747, 0.0
    %v5788 = vadd.f32 %v5756, 0.0
    %v5789 = vadd.f32 %v5765, 0.0
    %v5790 = vadd.f32 %v5774, 0.0
    %v5791 = vmul.f32 %v5503, 0.0012755102
    %v5792 = vmul.f32 %v5504, 0.0012755102
    %v5793 = vmul.f32 %v5505, 0.0012755102
    %v5794 = vmul.f32 %v5506, 0.0012755102
    %v5795 = vmul.f32 %v5507, 0.0012755102
    %v5796 = vmul.f32 %v5508, 0.0012755102
    %v5797 = vmul.f32 %v5509, 0.0012755102
    %v5798 = vmul.f32 %v5510, 0.0012755102
    %v5799 = vmul.f32 %v5511, 0.0012755102
    %v5800 = vmul.f32 %v5512, 0.0012755102
    %v5801 = vmul.f32 %v5513, 0.0012755102
    %v5802 = vmul.f32 %v5514, 0.0012755102
    %v5803 = vmul.f32 %v5515, 0.0012755102
    %v5804 = vmul.f32 %v5516, 0.0012755102
    %v5805 = vmul.f32 %v5517, 0.0012755102
    %v5806 = vmul.f32 %v5518, 0.0012755102
    %v5807 = vmul.f32 %v5775, 0.0012755102
    %v5808 = vmul.f32 %v5776, 0.0012755102
    %v5809 = vmul.f32 %v5777, 0.0012755102
    %v5810 = vmul.f32 %v5778, 0.0012755102
    %v5811 = vmul.f32 %v5779, 0.0012755102
    %v5812 = vmul.f32 %v5780, 0.0012755102
    %v5813 = vmul.f32 %v5781, 0.0012755102
    %v5814 = vmul.f32 %v5782, 0.0012755102
    %v5815 = vmul.f32 %v5783, 0.0012755102
    %v5816 = vmul.f32 %v5784, 0.0012755102
    %v5817 = vmul.f32 %v5785, 0.0012755102
    %v5818 = vmul.f32 %v5786, 0.0012755102
    %v5819 = vmul.f32 %v5787, 0.0012755102
    %v5820 = vmul.f32 %v5788, 0.0012755102
    %v5821 = vmul.f32 %v5789, 0.0012755102
    %v5822 = vmul.f32 %v5790, 0.0012755102
    %v5823 = vmul.f32 %v5791, %v5791
    %v5824 = vmul.f32 %v5792, %v5792
    %v5825 = vmul.f32 %v5793, %v5793
    %v5826 = vmul.f32 %v5794, %v5794
    %v5827 = vmul.f32 %v5795, %v5795
    %v5828 = vmul.f32 %v5796, %v5796
    %v5829 = vmul.f32 %v5797, %v5797
    %v5830 = vmul.f32 %v5798, %v5798
    %v5831 = vmul.f32 %v5799, %v5799
    %v5832 = vmul.f32 %v5800, %v5800
    %v5833 = vmul.f32 %v5801, %v5801
    %v5834 = vmul.f32 %v5802, %v5802
    %v5835 = vmul.f32 %v5803, %v5803
    %v5836 = vmul.f32 %v5804, %v5804
    %v5837 = vmul.f32 %v5805, %v5805
    %v5838 = vmul.f32 %v5806, %v5806
    %v5839 = vsub.f32 %v5807, %v5823
    %v5840 = vsub.f32 %v5808, %v5824
    %v5841 = vsub.f32 %v5809, %v5825
    %v5842 = vsub.f32 %v5810, %v5826
    %v5843 = vsub.f32 %v5811, %v5827
    %v5844 = vsub.f32 %v5812, %v5828
    %v5845 = vsub.f32 %v5813, %v5829
    %v5846 = vsub.f32 %v5814, %v5830
    %v5847 = vsub.f32 %v5815, %v5831
    %v5848 = vsub.f32 %v5816, %v5832
    %v5849 = vsub.f32 %v5817, %v5833
    %v5850 = vsub.f32 %v5818, %v5834
    %v5851 = vsub.f32 %v5819, %v5835
    %v5852 = vsub.f32 %v5820, %v5836
    %v5853 = vsub.f32 %v5821, %v5837
    %v5854 = vsub.f32 %v5822, %v5838
    %v5855 = vld [vmem:[%s4] sm:$0xff]
    %v5856 = vld [vmem:[%s4 + $0x8] sm:$0xff]
    %v5857 = vld [vmem:[%s4 + $0x10] sm:$0xff]
    %v5858 = vld [vmem:[%s4 + $0x18] sm:$0xff]
    %v5859 = vld [vmem:[%s4 + $0x20] sm:$0xff]
    %v5860 = vld [vmem:[%s4 + $0x28] sm:$0xff]
    %v5861 = vld [vmem:[%s4 + $0x30] sm:$0xff]
    %v5862 = vld [vmem:[%s4 + $0x38] sm:$0xff]
    %v5863 = vld [vmem:[%s4 + $0x40] sm:$0xff]
    %v5864 = vld [vmem:[%s4 + $0x48] sm:$0xff]
    %v5865 = vld [vmem:[%s4 + $0x50] sm:$0xff]
    %v5866 = vld [vmem:[%s4 + $0x58] sm:$0xff]
    %v5867 = vld [vmem:[%s4 + $0x60] sm:$0xff]
    %v5868 = vld [vmem:[%s4 + $0x68] sm:$0xff]
    %v5869 = vld [vmem:[%s4 + $0x70] sm:$0xff]
    %v5870 = vld [vmem:[%s4 + $0x78] sm:$0xff]
    %v5871 = vadd.f32 %v5839, 1e-05
    %v5872 = vadd.f32 %v5840, 1e-05
    %v5873 = vadd.f32 %v5841, 1e-05
    %v5874 = vadd.f32 %v5842, 1e-05
    %v5875 = vadd.f32 %v5843, 1e-05
    %v5876 = vadd.f32 %v5844, 1e-05
    %v5877 = vadd.f32 %v5845, 1e-05
    %v5878 = vadd.f32 %v5846, 1e-05
    %v5879 = vadd.f32 %v5847, 1e-05
    %v5880 = vadd.f32 %v5848, 1e-05
    %v5881 = vadd.f32 %v5849, 1e-05
    %v5882 = vadd.f32 %v5850, 1e-05
    %v5883 = vadd.f32 %v5851, 1e-05
    %v5884 = vadd.f32 %v5852, 1e-05
    %v5885 = vadd.f32 %v5853, 1e-05
    %v5886 = vadd.f32 %v5854, 1e-05
    %v5887 = vrsqrt.pop %v5871
    %v5888 = vrsqrt.pop %v5872
    %v5889 = vrsqrt.pop %v5873
    %v5890 = vrsqrt.pop %v5874
    %v5891 = vrsqrt.pop %v5875
    %v5892 = vrsqrt.pop %v5876
    %v5893 = vrsqrt.pop %v5877
    %v5894 = vrsqrt.pop %v5878
    %v5895 = vrsqrt.pop %v5879
    %v5896 = vrsqrt.pop %v5880
    %v5897 = vrsqrt.pop %v5881
    %v5898 = vrsqrt.pop %v5882
    %v5899 = vrsqrt.pop %v5883
    %v5900 = vrsqrt.pop %v5884
    %v5901 = vrsqrt.pop %v5885
    %v5902 = vrsqrt.pop %v5886
    %v5903 = vmul.f32 %v5855, %v5887
    %v5904 = vmul.f32 %v5856, %v5888
    %v5905 = vmul.f32 %v5857, %v5889
    %v5906 = vmul.f32 %v5858, %v5890
    %v5907 = vmul.f32 %v5859, %v5891
    %v5908 = vmul.f32 %v5860, %v5892
    %v5909 = vmul.f32 %v5861, %v5893
    %v5910 = vmul.f32 %v5862, %v5894
    %v5911 = vmul.f32 %v5863, %v5895
    %v5912 = vmul.f32 %v5864, %v5896
    %v5913 = vmul.f32 %v5865, %v5897
    %v5914 = vmul.f32 %v5866, %v5898
    %v5915 = vmul.f32 %v5867, %v5899
    %v5916 = vmul.f32 %v5868, %v5900
    %v5917 = vmul.f32 %v5869, %v5901
    %v5918 = vmul.f32 %v5870, %v5902
    %v5919 = vld [vmem:[%s5] sm:$0xff]
    %v5920 = vld [vmem:[%s5 + $0x8] sm:$0xff]
    %v5921 = vld [vmem:[%s5 + $0x10] sm:$0xff]
    %v5922 = vld [vmem:[%s5 + $0x18] sm:$0xff]
    %v5923 = vld [vmem:[%s5 + $0x20] sm:$0xff]
    %v5924 = vld [vmem:[%s5 + $0x28] sm:$0xff]
    %v5925 = vld [vmem:[%s5 + $0x30] sm:$0xff]
    %v5926 = vld [vmem:[%s5 + $0x38] sm:$0xff]
    %v5927 = vld [vmem:[%s5 + $0x40] sm:$0xff]
    %v5928 = vld [vmem:[%s5 + $0x48] sm:$0xff]
    %v5929 = vld [vmem:[%s5 + $0x50] sm:$0xff]
    %v5930 = vld [vmem:[%s5 + $0x58] sm:$0xff]
    %v5931 = vld [vmem:[%s5 + $0x60] sm:$0xff]
    %v5932 = vld [vmem:[%s5 + $0x68] sm:$0xff]
    %v5933 = vld [vmem:[%s5 + $0x70] sm:$0xff]
    %v5934 = vld [vmem:[%s5 + $0x78] sm:$0xff]
    %v5935 = vmul.f32 %v5791, %v5903
    %v5936 = vmul.f32 %v5792, %v5904
    %v5937 = vmul.f32 %v5793, %v5905
    %v5938 = vmul.f32 %v5794, %v5906
    %v5939 = vmul.f32 %v5795, %v5907
    %v5940 = vmul.f32 %v5796, %v5908
    %v5941 = vmul.f32 %v5797, %v5909
    %v5942 = vmul.f32 %v5798, %v5910
    %v5943 = vmul.f32 %v5799, %v5911
    %v5944 = vmul.f32 %v5800, %v5912
    %v5945 = vmul.f32 %v5801, %v5913
    %v5946 = vmul.f32 %v5802, %v5914
    %v5947 = vmul.f32 %v5803, %v5915
    %v5948 = vmul.f32 %v5804, %v5916
    %v5949 = vmul.f32 %v5805, %v5917
    %v5950 = vmul.f32 %v5806, %v5918
    %v5951 = vsub.f32 %v5919, %v5935
    %v5952 = vsub.f32 %v5920, %v5936
    %v5953 = vsub.f32 %v5921, %v5937
    %v5954 = vsub.f32 %v5922, %v5938
    %v5955 = vsub.f32 %v5923, %v5939
    %v5956 = vsub.f32 %v5924, %v5940
    %v5957 = vsub.f32 %v5925, %v5941
    %v5958 = vsub.f32 %v5926, %v5942
    %v5959 = vsub.f32 %v5927, %v5943
    %v5960 = vsub.f32 %v5928, %v5944
    %v5961 = vsub.f32 %v5929, %v5945
    %v5962 = vsub.f32 %v5930, %v5946
    %v5963 = vsub.f32 %v5931, %v5947
    %v5964 = vsub.f32 %v5932, %v5948
    %v5965 = vsub.f32 %v5933, %v5949
    %v5966 = vsub.f32 %v5934, %v5950
    %5968 = vset.pattern.permute.xlu0 0
    %5969 = vperm.xlu0 %5968, %v5903
    %v5970 = vpop.permute.xlu0 %5969
    %5973 = vset.pattern.permute.xlu0 0
    %5974 = vperm.xlu0 %5973, %v5904
    %v5975 = vpop.permute.xlu0 %5974
    %5978 = vset.pattern.permute.xlu0 0
    %5979 = vperm.xlu0 %5978, %v5905
    %v5980 = vpop.permute.xlu0 %5979
    %5983 = vset.pattern.permute.xlu0 0
    %5984 = vperm.xlu0 %5983, %v5906
    %v5985 = vpop.permute.xlu0 %5984
    %5988 = vset.pattern.permute.xlu0 0
    %5989 = vperm.xlu0 %5988, %v5907
    %v5990 = vpop.permute.xlu0 %5989
    %5993 = vset.pattern.permute.xlu0 0
    %5994 = vperm.xlu0 %5993, %v5908
    %v5995 = vpop.permute.xlu0 %5994
    %5998 = vset.pattern.permute.xlu0 0
    %5999 = vperm.xlu0 %5998, %v5909
    %v6000 = vpop.permute.xlu0 %5999
    %6003 = vset.pattern.permute.xlu0 0
    %6004 = vperm.xlu0 %6003, %v5910
    %v6005 = vpop.permute.xlu0 %6004
    %6008 = vset.pattern.permute.xlu0 0
    %6009 = vperm.xlu0 %6008, %v5911
    %v6010 = vpop.permute.xlu0 %6009
    %6013 = vset.pattern.permute.xlu0 0
    %6014 = vperm.xlu0 %6013, %v5912
    %v6015 = vpop.permute.xlu0 %6014
    %6018 = vset.pattern.permute.xlu0 0
    %6019 = vperm.xlu0 %6018, %v5913
    %v6020 = vpop.permute.xlu0 %6019
    %6023 = vset.pattern.permute.xlu0 0
    %6024 = vperm.xlu0 %6023, %v5914
    %v6025 = vpop.permute.xlu0 %6024
    %6028 = vset.pattern.permute.xlu0 0
    %6029 = vperm.xlu0 %6028, %v5915
    %v6030 = vpop.permute.xlu0 %6029
    %6033 = vset.pattern.permute.xlu0 0
    %6034 = vperm.xlu0 %6033, %v5916
    %v6035 = vpop.permute.xlu0 %6034
    %6038 = vset.pattern.permute.xlu0 0
    %6039 = vperm.xlu0 %6038, %v5917
    %v6040 = vpop.permute.xlu0 %6039
    %6043 = vset.pattern.permute.xlu0 0
    %6044 = vperm.xlu0 %6043, %v5918
    %v6045 = vpop.permute.xlu0 %6044
    %v6047 = vmul.f32 %v4331, %v5970
    %v6048 = vmul.f32 %v4333, %v5970
    %v6049 = vmul.f32 %v4653, %v5970
    %v6050 = vmul.f32 %v4655, %v5970
    %v6051 = vmul.f32 %v4975, %v5970
    %v6052 = vmul.f32 %v4977, %v5970
    %v6053 = vmul.f32 %v5281, %v5970
    %v6054 = vmul.f32 %v4337, %v5975
    %v6055 = vmul.f32 %v4339, %v5975
    %v6056 = vmul.f32 %v4659, %v5975
    %v6057 = vmul.f32 %v4661, %v5975
    %v6058 = vmul.f32 %v4981, %v5975
    %v6059 = vmul.f32 %v4983, %v5975
    %v6060 = vmul.f32 %v5286, %v5975
    %v6061 = vmul.f32 %v4343, %v5980
    %v6062 = vmul.f32 %v4345, %v5980
    %v6063 = vmul.f32 %v4665, %v5980
    %v6064 = vmul.f32 %v4667, %v5980
    %v6065 = vmul.f32 %v4987, %v5980
    %v6066 = vmul.f32 %v4989, %v5980
    %v6067 = vmul.f32 %v5291, %v5980
    %v6068 = vmul.f32 %v4349, %v5985
    %v6069 = vmul.f32 %v4351, %v5985
    %v6070 = vmul.f32 %v4671, %v5985
    %v6071 = vmul.f32 %v4673, %v5985
    %v6072 = vmul.f32 %v4993, %v5985
    %v6073 = vmul.f32 %v4995, %v5985
    %v6074 = vmul.f32 %v5296, %v5985
    %v6075 = vmul.f32 %v4355, %v5990
    %v6076 = vmul.f32 %v4357, %v5990
    %v6077 = vmul.f32 %v4677, %v5990
    %v6078 = vmul.f32 %v4679, %v5990
    %v6079 = vmul.f32 %v4999, %v5990
    %v6080 = vmul.f32 %v5001, %v5990
    %v6081 = vmul.f32 %v5301, %v5990
    %v6082 = vmul.f32 %v4361, %v5995
    %v6083 = vmul.f32 %v4363, %v5995
    %v6084 = vmul.f32 %v4683, %v5995
    %v6085 = vmul.f32 %v4685, %v5995
    %v6086 = vmul.f32 %v5005, %v5995
    %v6087 = vmul.f32 %v5007, %v5995
    %v6088 = vmul.f32 %v5306, %v5995
    %v6089 = vmul.f32 %v4367, %v6000
    %v6090 = vmul.f32 %v4369, %v6000
    %v6091 = vmul.f32 %v4689, %v6000
    %v6092 = vmul.f32 %v4691, %v6000
    %v6093 = vmul.f32 %v5011, %v6000
    %v6094 = vmul.f32 %v5013, %v6000
    %v6095 = vmul.f32 %v5311, %v6000
    %v6096 = vmul.f32 %v4373, %v6005
    %v6097 = vmul.f32 %v4375, %v6005
    %v6098 = vmul.f32 %v4695, %v6005
    %v6099 = vmul.f32 %v4697, %v6005
    %v6100 = vmul.f32 %v5017, %v6005
    %v6101 = vmul.f32 %v5019, %v6005
    %v6102 = vmul.f32 %v5316, %v6005
    %v6103 = vmul.f32 %v4379, %v6010
    %v6104 = vmul.f32 %v4381, %v6010
    %v6105 = vmul.f32 %v4701, %v6010
    %v6106 = vmul.f32 %v4703, %v6010
    %v6107 = vmul.f32 %v5023, %v6010
    %v6108 = vmul.f32 %v5025, %v6010
    %v6109 = vmul.f32 %v5321, %v6010
    %v6110 = vmul.f32 %v4385, %v6015
    %v6111 = vmul.f32 %v4387, %v6015
    %v6112 = vmul.f32 %v4707, %v6015
    %v6113 = vmul.f32 %v4709, %v6015
    %v6114 = vmul.f32 %v5029, %v6015
    %v6115 = vmul.f32 %v5031, %v6015
    %v6116 = vmul.f32 %v5326, %v6015
    %v6117 = vmul.f32 %v4391, %v6020
    %v6118 = vmul.f32 %v4393, %v6020
    %v6119 = vmul.f32 %v4713, %v6020
    %v6120 = vmul.f32 %v4715, %v6020
    %v6121 = vmul.f32 %v5035, %v6020
    %v6122 = vmul.f32 %v5037, %v6020
    %v6123 = vmul.f32 %v5331, %v6020
    %v6124 = vmul.f32 %v4397, %v6025
    %v6125 = vmul.f32 %v4399, %v6025
    %v6126 = vmul.f32 %v4719, %v6025
    %v6127 = vmul.f32 %v4721, %v6025
    %v6128 = vmul.f32 %v5041, %v6025
    %v6129 = vmul.f32 %v5043, %v6025
    %v6130 = vmul.f32 %v5336, %v6025
    %v6131 = vmul.f32 %v4403, %v6030
    %v6132 = vmul.f32 %v4405, %v6030
    %v6133 = vmul.f32 %v4725, %v6030
    %v6134 = vmul.f32 %v4727, %v6030
    %v6135 = vmul.f32 %v5047, %v6030
    %v6136 = vmul.f32 %v5049, %v6030
    %v6137 = vmul.f32 %v5341, %v6030
    %v6138 = vmul.f32 %v4409, %v6035
    %v6139 = vmul.f32 %v4411, %v6035
    %v6140 = vmul.f32 %v4731, %v6035
    %v6141 = vmul.f32 %v4733, %v6035
    %v6142 = vmul.f32 %v5053, %v6035
    %v6143 = vmul.f32 %v5055, %v6035
    %v6144 = vmul.f32 %v5346, %v6035
    %v6145 = vmul.f32 %v4415, %v6040
    %v6146 = vmul.f32 %v4417, %v6040
    %v6147 = vmul.f32 %v4737, %v6040
    %v6148 = vmul.f32 %v4739, %v6040
    %v6149 = vmul.f32 %v5059, %v6040
    %v6150 = vmul.f32 %v5061, %v6040
    %v6151 = vmul.f32 %v5351, %v6040
    %v6152 = vmul.f32 %v4421, %v6045
    %v6153 = vmul.f32 %v4423, %v6045
    %v6154 = vmul.f32 %v4743, %v6045
    %v6155 = vmul.f32 %v4745, %v6045
    %v6156 = vmul.f32 %v5065, %v6045
    %v6157 = vmul.f32 %v5067, %v6045
    %v6158 = vmul.f32 %v5356, %v6045
    %6160 = vset.pattern.permute.xlu0 0
    %6161 = vperm.xlu0 %6160, %v5951
    %v6162 = vpop.permute.xlu0 %6161
    %6165 = vset.pattern.permute.xlu0 0
    %6166 = vperm.xlu0 %6165, %v5952
    %v6167 = vpop.permute.xlu0 %6166
    %6170 = vset.pattern.permute.xlu0 0
    %6171 = vperm.xlu0 %6170, %v5953
    %v6172 = vpop.permute.xlu0 %6171
    %6175 = vset.pattern.permute.xlu0 0
    %6176 = vperm.xlu0 %6175, %v5954
    %v6177 = vpop.permute.xlu0 %6176
    %6180 = vset.pattern.permute.xlu0 0
    %6181 = vperm.xlu0 %6180, %v5955
    %v6182 = vpop.permute.xlu0 %6181
    %6185 = vset.pattern.permute.xlu0 0
    %6186 = vperm.xlu0 %6185, %v5956
    %v6187 = vpop.permute.xlu0 %6186
    %6190 = vset.pattern.permute.xlu0 0
    %6191 = vperm.xlu0 %6190, %v5957
    %v6192 = vpop.permute.xlu0 %6191
    %6195 = vset.pattern.permute.xlu0 0
    %6196 = vperm.xlu0 %6195, %v5958
    %v6197 = vpop.permute.xlu0 %6196
    %6200 = vset.pattern.permute.xlu0 0
    %6201 = vperm.xlu0 %6200, %v5959
    %v6202 = vpop.permute.xlu0 %6201
    %6205 = vset.pattern.permute.xlu0 0
    %6206 = vperm.xlu0 %6205, %v5960
    %v6207 = vpop.permute.xlu0 %6206
    %6210 = vset.pattern.permute.xlu0 0
    %6211 = vperm.xlu0 %6210, %v5961
    %v6212 = vpop.permute.xlu0 %6211
    %6215 = vset.pattern.permute.xlu0 0
    %6216 = vperm.xlu0 %6215, %v5962
    %v6217 = vpop.permute.xlu0 %6216
    %6220 = vset.pattern.permute.xlu0 0
    %6221 = vperm.xlu0 %6220, %v5963
    %v6222 = vpop.permute.xlu0 %6221
    %6225 = vset.pattern.permute.xlu0 0
    %6226 = vperm.xlu0 %6225, %v5964
    %v6227 = vpop.permute.xlu0 %6226
    %6230 = vset.pattern.permute.xlu0 0
    %6231 = vperm.xlu0 %6230, %v5965
    %v6232 = vpop.permute.xlu0 %6231
    %6235 = vset.pattern.permute.xlu0 0
    %6236 = vperm.xlu0 %6235, %v5966
    %v6237 = vpop.permute.xlu0 %6236
    %v6239 = vadd.f32 %v6047, %v6162
    %v6240 = vadd.f32 %v6048, %v6162
    %v6241 = vadd.f32 %v6049, %v6162
    %v6242 = vadd.f32 %v6050, %v6162
    %v6243 = vadd.f32 %v6051, %v6162
    %v6244 = vadd.f32 %v6052, %v6162
    %v6245 = vadd.f32 %v6053, %v6162
    %v6246 = vadd.f32 %v6054, %v6167
    %v6247 = vadd.f32 %v6055, %v6167
    %v6248 = vadd.f32 %v6056, %v6167
    %v6249 = vadd.f32 %v6057, %v6167
    %v6250 = vadd.f32 %v6058, %v6167
    %v6251 = vadd.f32 %v6059, %v6167
    %v6252 = vadd.f32 %v6060, %v6167
    %v6253 = vadd.f32 %v6061, %v6172
    %v6254 = vadd.f32 %v6062, %v6172
    %v6255 = vadd.f32 %v6063, %v6172
    %v6256 = vadd.f32 %v6064, %v6172
    %v6257 = vadd.f32 %v6065, %v6172
    %v6258 = vadd.f32 %v6066, %v6172
    %v6259 = vadd.f32 %v6067, %v6172
    %v6260 = vadd.f32 %v6068, %v6177
    %v6261 = vadd.f32 %v6069, %v6177
    %v6262 = vadd.f32 %v6070, %v6177
    %v6263 = vadd.f32 %v6071, %v6177
    %v6264 = vadd.f32 %v6072, %v6177
    %v6265 = vadd.f32 %v6073, %v6177
    %v6266 = vadd.f32 %v6074, %v6177
    %v6267 = vadd.f32 %v6075, %v6182
    %v6268 = vadd.f32 %v6076, %v6182
    %v6269 = vadd.f32 %v6077, %v6182
    %v6270 = vadd.f32 %v6078, %v6182
    %v6271 = vadd.f32 %v6079, %v6182
    %v6272 = vadd.f32 %v6080, %v6182
    %v6273 = vadd.f32 %v6081, %v6182
    %v6274 = vadd.f32 %v6082, %v6187
    %v6275 = vadd.f32 %v6083, %v6187
    %v6276 = vadd.f32 %v6084, %v6187
    %v6277 = vadd.f32 %v6085, %v6187
    %v6278 = vadd.f32 %v6086, %v6187
    %v6279 = vadd.f32 %v6087, %v6187
    %v6280 = vadd.f32 %v6088, %v6187
    %v6281 = vadd.f32 %v6089, %v6192
    %v6282 = vadd.f32 %v6090, %v6192
    %v6283 = vadd.f32 %v6091, %v6192
    %v6284 = vadd.f32 %v6092, %v6192
    %v6285 = vadd.f32 %v6093, %v6192
    %v6286 = vadd.f32 %v6094, %v6192
    %v6287 = vadd.f32 %v6095, %v6192
    %v6288 = vadd.f32 %v6096, %v6197
    %v6289 = vadd.f32 %v6097, %v6197
    %v6290 = vadd.f32 %v6098, %v6197
    %v6291 = vadd.f32 %v6099, %v6197
    %v6292 = vadd.f32 %v6100, %v6197
    %v6293 = vadd.f32 %v6101, %v6197
    %v6294 = vadd.f32 %v6102, %v6197
    %v6295 = vadd.f32 %v6103, %v6202
    %v6296 = vadd.f32 %v6104, %v6202
    %v6297 = vadd.f32 %v6105, %v6202
    %v6298 = vadd.f32 %v6106, %v6202
    %v6299 = vadd.f32 %v6107, %v6202
    %v6300 = vadd.f32 %v6108, %v6202
    %v6301 = vadd.f32 %v6109, %v6202
    %v6302 = vadd.f32 %v6110, %v6207
    %v6303 = vadd.f32 %v6111, %v6207
    %v6304 = vadd.f32 %v6112, %v6207
    %v6305 = vadd.f32 %v6113, %v6207
    %v6306 = vadd.f32 %v6114, %v6207
    %v6307 = vadd.f32 %v6115, %v6207
    %v6308 = vadd.f32 %v6116, %v6207
    %v6309 = vadd.f32 %v6117, %v6212
    %v6310 = vadd.f32 %v6118, %v6212
    %v6311 = vadd.f32 %v6119, %v6212
    %v6312 = vadd.f32 %v6120, %v6212
    %v6313 = vadd.f32 %v6121, %v6212
    %v6314 = vadd.f32 %v6122, %v6212
    %v6315 = vadd.f32 %v6123, %v6212
    %v6316 = vadd.f32 %v6124, %v6217
    %v6317 = vadd.f32 %v6125, %v6217
    %v6318 = vadd.f32 %v6126, %v6217
    %v6319 = vadd.f32 %v6127, %v6217
    %v6320 = vadd.f32 %v6128, %v6217
    %v6321 = vadd.f32 %v6129, %v6217
    %v6322 = vadd.f32 %v6130, %v6217
    %v6323 = vadd.f32 %v6131, %v6222
    %v6324 = vadd.f32 %v6132, %v6222
    %v6325 = vadd.f32 %v6133, %v6222
    %v6326 = vadd.f32 %v6134, %v6222
    %v6327 = vadd.f32 %v6135, %v6222
    %v6328 = vadd.f32 %v6136, %v6222
    %v6329 = vadd.f32 %v6137, %v6222
    %v6330 = vadd.f32 %v6138, %v6227
    %v6331 = vadd.f32 %v6139, %v6227
    %v6332 = vadd.f32 %v6140, %v6227
    %v6333 = vadd.f32 %v6141, %v6227
    %v6334 = vadd.f32 %v6142, %v6227
    %v6335 = vadd.f32 %v6143, %v6227
    %v6336 = vadd.f32 %v6144, %v6227
    %v6337 = vadd.f32 %v6145, %v6232
    %v6338 = vadd.f32 %v6146, %v6232
    %v6339 = vadd.f32 %v6147, %v6232
    %v6340 = vadd.f32 %v6148, %v6232
    %v6341 = vadd.f32 %v6149, %v6232
    %v6342 = vadd.f32 %v6150, %v6232
    %v6343 = vadd.f32 %v6151, %v6232
    %v6344 = vadd.f32 %v6152, %v6237
    %v6345 = vadd.f32 %v6153, %v6237
    %v6346 = vadd.f32 %v6154, %v6237
    %v6347 = vadd.f32 %v6155, %v6237
    %v6348 = vadd.f32 %v6156, %v6237
    %v6349 = vadd.f32 %v6157, %v6237
    %v6350 = vadd.f32 %v6158, %v6237
    %6351 = vst [vmem:[%s6] sm:$0xff] %v6239
    %6352 = vst [vmem:[%s6 + $0x8] sm:$0xff] %v6240
    %6353 = vst [vmem:[%s6 + $0x10] sm:$0xff] %v6241
    %6354 = vst [vmem:[%s6 + $0x18] sm:$0xff] %v6242
    %6355 = vst [vmem:[%s6 + $0x20] sm:$0xff] %v6243
    %6356 = vst [vmem:[%s6 + $0x28] sm:$0xff] %v6244
    %6357 = vst.msk [vmem:[%s6 + $0x30] sm:$0xff] %vm406, %v6245
    %6358 = vst [vmem:[%s6 + $0x38] sm:$0xff] %v6246
    %6359 = vst [vmem:[%s6 + $0x40] sm:$0xff] %v6247
    %6360 = vst [vmem:[%s6 + $0x48] sm:$0xff] %v6248
    %6361 = vst [vmem:[%s6 + $0x50] sm:$0xff] %v6249
    %6362 = vst [vmem:[%s6 + $0x58] sm:$0xff] %v6250
    %6363 = vst [vmem:[%s6 + $0x60] sm:$0xff] %v6251
    %6364 = vst.msk [vmem:[%s6 + $0x68] sm:$0xff] %vm406, %v6252
    %6365 = vst [vmem:[%s6 + $0x70] sm:$0xff] %v6253
    %6366 = vst [vmem:[%s6 + $0x78] sm:$0xff] %v6254
    %6367 = vst [vmem:[%s6 + $0x80] sm:$0xff] %v6255
    %6368 = vst [vmem:[%s6 + $0x88] sm:$0xff] %v6256
    %6369 = vst [vmem:[%s6 + $0x90] sm:$0xff] %v6257
    %6370 = vst [vmem:[%s6 + $0x98] sm:$0xff] %v6258
    %6371 = vst.msk [vmem:[%s6 + $0xa0] sm:$0xff] %vm406, %v6259
    %6372 = vst [vmem:[%s6 + $0xa8] sm:$0xff] %v6260
    %6373 = vst [vmem:[%s6 + $0xb0] sm:$0xff] %v6261
    %6374 = vst [vmem:[%s6 + $0xb8] sm:$0xff] %v6262
    %6375 = vst [vmem:[%s6 + $0xc0] sm:$0xff] %v6263
    %6376 = vst [vmem:[%s6 + $0xc8] sm:$0xff] %v6264
    %6377 = vst [vmem:[%s6 + $0xd0] sm:$0xff] %v6265
    %6378 = vst.msk [vmem:[%s6 + $0xd8] sm:$0xff] %vm406, %v6266
    %6379 = vst [vmem:[%s6 + $0xe0] sm:$0xff] %v6267
    %6380 = vst [vmem:[%s6 + $0xe8] sm:$0xff] %v6268
    %6381 = vst [vmem:[%s6 + $0xf0] sm:$0xff] %v6269
    %6382 = vst [vmem:[%s6 + $0xf8] sm:$0xff] %v6270
    %6383 = vst [vmem:[%s6 + $0x100] sm:$0xff] %v6271
    %6384 = vst [vmem:[%s6 + $0x108] sm:$0xff] %v6272
    %6385 = vst.msk [vmem:[%s6 + $0x110] sm:$0xff] %vm406, %v6273
    %6386 = vst [vmem:[%s6 + $0x118] sm:$0xff] %v6274
    %6387 = vst [vmem:[%s6 + $0x120] sm:$0xff] %v6275
    %6388 = vst [vmem:[%s6 + $0x128] sm:$0xff] %v6276
    %6389 = vst [vmem:[%s6 + $0x130] sm:$0xff] %v6277
    %6390 = vst [vmem:[%s6 + $0x138] sm:$0xff] %v6278
    %6391 = vst [vmem:[%s6 + $0x140] sm:$0xff] %v6279
    %6392 = vst.msk [vmem:[%s6 + $0x148] sm:$0xff] %vm406, %v6280
    %6393 = vst [vmem:[%s6 + $0x150] sm:$0xff] %v6281
    %6394 = vst [vmem:[%s6 + $0x158] sm:$0xff] %v6282
    %6395 = vst [vmem:[%s6 + $0x160] sm:$0xff] %v6283
    %6396 = vst [vmem:[%s6 + $0x168] sm:$0xff] %v6284
    %6397 = vst [vmem:[%s6 + $0x170] sm:$0xff] %v6285
    %6398 = vst [vmem:[%s6 + $0x178] sm:$0xff] %v6286
    %6399 = vst.msk [vmem:[%s6 + $0x180] sm:$0xff] %vm406, %v6287
    %6400 = vst [vmem:[%s6 + $0x188] sm:$0xff] %v6288
    %6401 = vst [vmem:[%s6 + $0x190] sm:$0xff] %v6289
    %6402 = vst [vmem:[%s6 + $0x198] sm:$0xff] %v6290
    %6403 = vst [vmem:[%s6 + $0x1a0] sm:$0xff] %v6291
    %6404 = vst [vmem:[%s6 + $0x1a8] sm:$0xff] %v6292
    %6405 = vst [vmem:[%s6 + $0x1b0] sm:$0xff] %v6293
    %6406 = vst.msk [vmem:[%s6 + $0x1b8] sm:$0xff] %vm406, %v6294
    %6407 = vst [vmem:[%s6 + $0x1c0] sm:$0xff] %v6295
    %6408 = vst [vmem:[%s6 + $0x1c8] sm:$0xff] %v6296
    %6409 = vst [vmem:[%s6 + $0x1d0] sm:$0xff] %v6297
    %6410 = vst [vmem:[%s6 + $0x1d8] sm:$0xff] %v6298
    %6411 = vst [vmem:[%s6 + $0x1e0] sm:$0xff] %v6299
    %6412 = vst [vmem:[%s6 + $0x1e8] sm:$0xff] %v6300
    %6413 = vst.msk [vmem:[%s6 + $0x1f0] sm:$0xff] %vm406, %v6301
    %6414 = vst [vmem:[%s6 + $0x1f8] sm:$0xff] %v6302
    %6415 = vst [vmem:[%s6 + $0x200] sm:$0xff] %v6303
    %6416 = vst [vmem:[%s6 + $0x208] sm:$0xff] %v6304
    %6417 = vst [vmem:[%s6 + $0x210] sm:$0xff] %v6305
    %6418 = vst [vmem:[%s6 + $0x218] sm:$0xff] %v6306
    %6419 = vst [vmem:[%s6 + $0x220] sm:$0xff] %v6307
    %6420 = vst.msk [vmem:[%s6 + $0x228] sm:$0xff] %vm406, %v6308
    %6421 = vst [vmem:[%s6 + $0x230] sm:$0xff] %v6309
    %6422 = vst [vmem:[%s6 + $0x238] sm:$0xff] %v6310
    %6423 = vst [vmem:[%s6 + $0x240] sm:$0xff] %v6311
    %6424 = vst [vmem:[%s6 + $0x248] sm:$0xff] %v6312
    %6425 = vst [vmem:[%s6 + $0x250] sm:$0xff] %v6313
    %6426 = vst [vmem:[%s6 + $0x258] sm:$0xff] %v6314
    %6427 = vst.msk [vmem:[%s6 + $0x260] sm:$0xff] %vm406, %v6315
    %6428 = vst [vmem:[%s6 + $0x268] sm:$0xff] %v6316
    %6429 = vst [vmem:[%s6 + $0x270] sm:$0xff] %v6317
    %6430 = vst [vmem:[%s6 + $0x278] sm:$0xff] %v6318
    %6431 = vst [vmem:[%s6 + $0x280] sm:$0xff] %v6319
    %6432 = vst [vmem:[%s6 + $0x288] sm:$0xff] %v6320
    %6433 = vst [vmem:[%s6 + $0x290] sm:$0xff] %v6321
    %6434 = vst.msk [vmem:[%s6 + $0x298] sm:$0xff] %vm406, %v6322
    %6435 = vst [vmem:[%s6 + $0x2a0] sm:$0xff] %v6323
    %6436 = vst [vmem:[%s6 + $0x2a8] sm:$0xff] %v6324
    %6437 = vst [vmem:[%s6 + $0x2b0] sm:$0xff] %v6325
    %6438 = vst [vmem:[%s6 + $0x2b8] sm:$0xff] %v6326
    %6439 = vst [vmem:[%s6 + $0x2c0] sm:$0xff] %v6327
    %6440 = vst [vmem:[%s6 + $0x2c8] sm:$0xff] %v6328
    %6441 = vst.msk [vmem:[%s6 + $0x2d0] sm:$0xff] %vm406, %v6329
    %6442 = vst [vmem:[%s6 + $0x2d8] sm:$0xff] %v6330
    %6443 = vst [vmem:[%s6 + $0x2e0] sm:$0xff] %v6331
    %6444 = vst [vmem:[%s6 + $0x2e8] sm:$0xff] %v6332
    %6445 = vst [vmem:[%s6 + $0x2f0] sm:$0xff] %v6333
    %6446 = vst [vmem:[%s6 + $0x2f8] sm:$0xff] %v6334
    %6447 = vst [vmem:[%s6 + $0x300] sm:$0xff] %v6335
    %6448 = vst.msk [vmem:[%s6 + $0x308] sm:$0xff] %vm406, %v6336
    %6449 = vst [vmem:[%s6 + $0x310] sm:$0xff] %v6337
    %6450 = vst [vmem:[%s6 + $0x318] sm:$0xff] %v6338
    %6451 = vst [vmem:[%s6 + $0x320] sm:$0xff] %v6339
    %6452 = vst [vmem:[%s6 + $0x328] sm:$0xff] %v6340
    %6453 = vst [vmem:[%s6 + $0x330] sm:$0xff] %v6341
    %6454 = vst [vmem:[%s6 + $0x338] sm:$0xff] %v6342
    %6455 = vst.msk [vmem:[%s6 + $0x340] sm:$0xff] %vm406, %v6343
    %6456 = vst [vmem:[%s6 + $0x348] sm:$0xff] %v6344
    %6457 = vst [vmem:[%s6 + $0x350] sm:$0xff] %v6345
    %6458 = vst [vmem:[%s6 + $0x358] sm:$0xff] %v6346
    %6459 = vst [vmem:[%s6 + $0x360] sm:$0xff] %v6347
    %6460 = vst [vmem:[%s6 + $0x368] sm:$0xff] %v6348
    %6461 = vst [vmem:[%s6 + $0x370] sm:$0xff] %v6349
    %6462 = vst.msk [vmem:[%s6 + $0x378] sm:$0xff] %vm406, %v6350
    // Predicated region
    $region30: #{tpu_custom_call.1} parent=1 // pred_check
      _
    $region31: #{tpu_custom_call.1} parent=1 // pred_check_branch
      %6464 = sbr.rel (0) target = $region33
    $region32: #{tpu_custom_call.1} parent=1 // pred_region
      _
    $region33: #{tpu_custom_call.1} parent=1 // pred_fallthru
      _
    // Predicated region
    $region34: #{tpu_custom_call.1} parent=1 // pred_check
      _
    $region35: #{tpu_custom_call.1} parent=1 // pred_check_branch
      %6466 = sbr.rel (0) target = $region37
    $region36: #{tpu_custom_call.1} parent=1 // pred_region
      _
    $region37: #{tpu_custom_call.1} parent=1 // pred_fallthru
      _
    %6467 = vsyncpa [#allocation3], 1

</llo_original>
